<compile_context>
chip_gen: v7x
topology: tpu7x:2x2x1
jax: 0.10.0
libtpu: 0.0.40
codegen_flags: <defaults>
</compile_context>

<pallas_src>
import jax
import jax.numpy as jnp
from jax.experimental import pallas as pl
from jax.experimental.pallas import tpu as pltpu

COUT_PAD = 128  # one full vreg lane width / MXU N-dim -> unmasked stores


# ----------------------------- Pallas kernel ------------------------------ #
def _conv_relu_pallas(xp_bf16, w_pad, b_pad, *, H, W, KH, KW):
    """relu(conv2d(x, w, stride=1, 'SAME') + b) with padding pre-applied.

    xp_bf16 : [N, H+2p, W+2p, Cin]    padded NHWC input, bf16
    w_pad   : [KH*KW, Cin, COUT_PAD]  taps-major weight, bf16 (Cout zero-padded)
    b_pad   : [1, COUT_PAD]           bias, f32 (zero-padded)
    returns : [N, H*W, COUT_PAD]      f32
    """
    N, Hp, Wp, Cin = xp_bf16.shape
    taps, _, cout_pad = w_pad.shape
    M = H * W

    def kernel(xp_ref, w_ref, b_ref, o_ref):
        # xp_ref: [Hp, Wp, Cin]  (batch dim squeezed by BlockSpec)
        # w_ref : [taps, Cin, cout_pad]   resident across grid steps
        # b_ref : [1, cout_pad]
        # o_ref : [M, cout_pad]           lane-dense f32 output block
        x = xp_ref[...]  # tiny (a few KiB), stays in vregs/VMEM
        o_ref[...] = jnp.zeros((M, cout_pad), jnp.float32)
        # In-kernel im2col: 9 static shifted windows, 9 small MXU matmuls.
        for ki in range(KH):
            for kj in range(KW):
                patch = x[ki:ki + H, kj:kj + W, :].reshape(M, Cin)
                o_ref[...] += jnp.dot(
                    patch, w_ref[ki * KW + kj],
                    preferred_element_type=jnp.float32)
        o_ref[...] = jnp.maximum(o_ref[...] + b_ref[...], 0.0).astype(o_ref.dtype)

    flops = 2 * N * M * taps * Cin * cout_pad
    bytes_accessed = (xp_bf16.size * 2 + w_pad.size * 2 + b_pad.size * 4
                      + N * M * cout_pad * 4)

    return pl.pallas_call(
        kernel,
        out_shape=jax.ShapeDtypeStruct((N, M, cout_pad), jnp.float32),
        grid_spec=pltpu.PrefetchScalarGridSpec(
            num_scalar_prefetch=0,
            grid=(N,),
            in_specs=[
                pl.BlockSpec((None, Hp, Wp, Cin), lambda n: (n, 0, 0, 0)),
                pl.BlockSpec((taps, Cin, cout_pad), lambda n: (0, 0, 0)),
                pl.BlockSpec((1, cout_pad), lambda n: (0, 0)),
            ],
            out_specs=pl.BlockSpec((None, M, cout_pad), lambda n: (n, 0, 0)),
        ),
        compiler_params=pltpu.CompilerParams(
            dimension_semantics=("parallel",),       # v7x: 2 TCs split batches
            vmem_limit_bytes=32 * 1024 * 1024,       # safe on v5e/v6e/v7x
        ),
        cost_estimate=pl.CostEstimate(
            flops=flops, transcendentals=0, bytes_accessed=bytes_accessed),
    )(xp_bf16, w_pad, b_pad)


# ------------------------------- wrapper ----------------------------------- #
def cp_wrapper_forward(x_nchw, weight, bias):
    """Forward of _CPWrapper(Conv2d(4,8,3,pad=1) -> ReLU).

    x_nchw : [N, Cin, H, W]   (PyTorch NCHW convention)
    weight : [Cout, Cin, KH, KW]
    bias   : [Cout]
    returns: [N, Cout, H, W]
    """
    N, Cin, H, W = x_nchw.shape
    Cout, _, KH, KW = weight.shape
    pad = KH // 2

    # --- layout plumbing hoisted OUTSIDE the checkpoint region ---
    x_nhwc = jnp.transpose(x_nchw, (0, 2, 3, 1))                     # NCHW->NHWC
    xp = jnp.pad(x_nhwc, ((0, 0), (pad, pad), (pad, pad), (0, 0)))
    xp_bf16 = xp.astype(jnp.bfloat16)
    # [Cout, Cin, KH, KW] -> [KH*KW, Cin, COUT_PAD] (taps-major, lane-padded)
    w_t = jnp.transpose(weight, (2, 3, 1, 0)).reshape(KH * KW, Cin, Cout)
    w_pad = jnp.pad(w_t, ((0, 0), (0, 0), (0, COUT_PAD - Cout))).astype(jnp.bfloat16)
    b_pad = jnp.pad(bias, (0, COUT_PAD - Cout)).reshape(1, COUT_PAD).astype(jnp.float32)

    # torch.utils.checkpoint <-> jax.checkpoint: identical forward values,
    # activations rematerialized in the backward pass.
    @jax.checkpoint
    def _inner(xp_b, w_b, b_b):
        return _conv_relu_pallas(xp_b, w_b, b_b, H=H, W=W, KH=KH, KW=KW)

    out = _inner(xp_bf16, w_pad, b_pad)                              # [N, H*W, 128]
    out = out[:, :, :Cout].reshape(N, H, W, Cout)
    return jnp.transpose(out, (0, 3, 1, 2))                          # NHWC->NCHW


# --------------------------------- main ------------------------------------ #
if __name__ == "__main__":
    key = jax.random.PRNGKey(0)
    k_x, k_w, k_b = jax.random.split(key, 3)

    N, Cin, H, W = 2, 4, 16, 16
    Cout, KH, KW = 8, 3, 3

    x = jax.random.normal(k_x, (N, Cin, H, W), dtype=jnp.float32)
    weight = jax.random.normal(k_w, (Cout, Cin, KH, KW), dtype=jnp.float32) * 0.1
    bias = jax.random.normal(k_b, (Cout,), dtype=jnp.float32) * 0.1

    out = jax.jit(cp_wrapper_forward)(x, weight, bias)
    jax.block_until_ready(out)

    # Reference conv+ReLU on the same bf16-rounded operands, f32 accumulation.
    xq = x.astype(jnp.bfloat16).astype(jnp.float32)
    wq = weight.astype(jnp.bfloat16).astype(jnp.float32)
    ref = jax.lax.conv_general_dilated(
        xq, wq, window_strides=(1, 1), padding="SAME",
        dimension_numbers=("NCHW", "OIHW", "NCHW"),
        precision=jax.lax.Precision.HIGHEST)
    ref = jnp.maximum(ref + bias.reshape(1, Cout, 1, 1), 0.0)

    assert out.shape == (N, Cout, H, W)
    assert jnp.allclose(out, ref, atol=1e-3, rtol=1e-3), \
        float(jnp.max(jnp.abs(out - ref)))

    print("KERNEL_OK")
</pallas_src>

<mosaic_0001>
module attributes {stable_mosaic.version = 11 : i64} {
  func.func @kernel(%arg0: i32, %arg1: memref<1x18x18x4xbf16, #tpu.memory_space<vmem>>, %arg2: memref<9x4x128xbf16, #tpu.memory_space<vmem>>, %arg3: memref<1x128xf32, #tpu.memory_space<vmem>>, %arg4: memref<1x256x128xf32, #tpu.memory_space<vmem>>) attributes {dimension_semantics = [#tpu.dimension_semantics<parallel>], iteration_bounds = array<i64: 2>, scalar_prefetch = 0 : i64, scratch_operands = 0 : i64, tpu.core_type = #tpu.core_type<tc>, window_params = [{transform_indices = @transform_0, window_bounds = array<i64: 1, 18, 18, 4>}, {pipeline_mode = #tpu.pipeline_mode<synchronous>, transform_indices = @transform_1, window_bounds = array<i64: 9, 4, 128>}, {pipeline_mode = #tpu.pipeline_mode<synchronous>, transform_indices = @transform_2, window_bounds = array<i64: 1, 128>}, {transform_indices = @transform_3, window_bounds = array<i64: 1, 256, 128>}]} {
    %c0 = arith.constant 0 : index
    %c0_0 = arith.constant 0 : index
    %c0_1 = arith.constant 0 : index
    %c0_2 = arith.constant 0 : index
    %0 = vector.load %arg1[%c0, %c0_0, %c0_1, %c0_2] : memref<1x18x18x4xbf16, #tpu.memory_space<vmem>>, vector<1x18x18x4xbf16>
    %1 = vector.shape_cast %0 : vector<1x18x18x4xbf16> to vector<18x18x4xbf16>
    %cst = arith.constant 0.000000e+00 : f32
    %2 = vector.broadcast %cst : f32 to vector<256x128xf32>
    %c0_3 = arith.constant 0 : index
    %c0_4 = arith.constant 0 : index
    %c0_5 = arith.constant 0 : index
    %3 = vector.load %arg4[%c0_3, %c0_4, %c0_5] : memref<1x256x128xf32, #tpu.memory_space<vmem>>, vector<1x256x128xf32>
    %4 = vector.shape_cast %3 : vector<1x256x128xf32> to vector<256x128xf32>
    %5 = vector.shape_cast %2 : vector<256x128xf32> to vector<1x256x128xf32>
    tpu.vector_store %arg4[%c0_3, %c0_4, %c0_5], %5 {strides = array<i32>} : memref<1x256x128xf32, #tpu.memory_space<vmem>>, vector<1x256x128xf32>,
    %6 = vector.extract_strided_slice %1 {offsets = [0, 0, 0], sizes = [16, 16, 4], strides = [1, 1, 1]} : vector<18x18x4xbf16> to vector<16x16x4xbf16>
    %7 = vector.shape_cast %6 : vector<16x16x4xbf16> to vector<256x4xbf16>
    %c0_6 = arith.constant 0 : index
    %c0_7 = arith.constant 0 : index
    %c0_8 = arith.constant 0 : index
    %8 = vector.load %arg4[%c0_6, %c0_7, %c0_8] : memref<1x256x128xf32, #tpu.memory_space<vmem>>, vector<1x256x128xf32>
    %9 = vector.shape_cast %8 : vector<1x256x128xf32> to vector<256x128xf32>
    %c0_9 = arith.constant 0 : index
    %c0_10 = arith.constant 0 : index
    %c0_11 = arith.constant 0 : index
    %10 = vector.load %arg2[%c0_9, %c0_10, %c0_11] : memref<9x4x128xbf16, #tpu.memory_space<vmem>>, vector<1x4x128xbf16>
    %11 = vector.shape_cast %10 : vector<1x4x128xbf16> to vector<4x128xbf16>
    %cst_12 = arith.constant dense<0.000000e+00> : vector<256x128xf32>
    %12 = tpu.matmul %7, %11, %cst_12 {dimension_numbers = #tpu.dot_dimension_numbers<[1], [0], [0], [1], [0, 0, 1, 1], [], []>} : vector<256x4xbf16>, vector<4x128xbf16>, vector<256x128xf32> -> vector<256x128xf32>
    %13 = arith.addf %9, %12 : vector<256x128xf32>
    %c0_13 = arith.constant 0 : index
    %c0_14 = arith.constant 0 : index
    %c0_15 = arith.constant 0 : index
    %14 = vector.load %arg4[%c0_13, %c0_14, %c0_15] : memref<1x256x128xf32, #tpu.memory_space<vmem>>, vector<1x256x128xf32>
    %15 = vector.shape_cast %14 : vector<1x256x128xf32> to vector<256x128xf32>
    %16 = vector.shape_cast %13 : vector<256x128xf32> to vector<1x256x128xf32>
    tpu.vector_store %arg4[%c0_13, %c0_14, %c0_15], %16 {strides = array<i32>} : memref<1x256x128xf32, #tpu.memory_space<vmem>>, vector<1x256x128xf32>,
    %17 = vector.extract_strided_slice %1 {offsets = [0, 1, 0], sizes = [16, 16, 4], strides = [1, 1, 1]} : vector<18x18x4xbf16> to vector<16x16x4xbf16>
    %18 = vector.shape_cast %17 : vector<16x16x4xbf16> to vector<256x4xbf16>
    %c0_16 = arith.constant 0 : index
    %c0_17 = arith.constant 0 : index
    %c0_18 = arith.constant 0 : index
    %19 = vector.load %arg4[%c0_16, %c0_17, %c0_18] : memref<1x256x128xf32, #tpu.memory_space<vmem>>, vector<1x256x128xf32>
    %20 = vector.shape_cast %19 : vector<1x256x128xf32> to vector<256x128xf32>
    %c1 = arith.constant 1 : index
    %c0_19 = arith.constant 0 : index
    %c0_20 = arith.constant 0 : index
    %21 = vector.load %arg2[%c1, %c0_19, %c0_20] : memref<9x4x128xbf16, #tpu.memory_space<vmem>>, vector<1x4x128xbf16>
    %22 = vector.shape_cast %21 : vector<1x4x128xbf16> to vector<4x128xbf16>
    %cst_21 = arith.constant dense<0.000000e+00> : vector<256x128xf32>
    %23 = tpu.matmul %18, %22, %cst_21 {dimension_numbers = #tpu.dot_dimension_numbers<[1], [0], [0], [1], [0, 0, 1, 1], [], []>} : vector<256x4xbf16>, vector<4x128xbf16>, vector<256x128xf32> -> vector<256x128xf32>
    %24 = arith.addf %20, %23 : vector<256x128xf32>
    %c0_22 = arith.constant 0 : index
    %c0_23 = arith.constant 0 : index
    %c0_24 = arith.constant 0 : index
    %25 = vector.load %arg4[%c0_22, %c0_23, %c0_24] : memref<1x256x128xf32, #tpu.memory_space<vmem>>, vector<1x256x128xf32>
    %26 = vector.shape_cast %25 : vector<1x256x128xf32> to vector<256x128xf32>
    %27 = vector.shape_cast %24 : vector<256x128xf32> to vector<1x256x128xf32>
    tpu.vector_store %arg4[%c0_22, %c0_23, %c0_24], %27 {strides = array<i32>} : memref<1x256x128xf32, #tpu.memory_space<vmem>>, vector<1x256x128xf32>,
    %28 = vector.extract_strided_slice %1 {offsets = [0, 2, 0], sizes = [16, 16, 4], strides = [1, 1, 1]} : vector<18x18x4xbf16> to vector<16x16x4xbf16>
    %29 = vector.shape_cast %28 : vector<16x16x4xbf16> to vector<256x4xbf16>
    %c0_25 = arith.constant 0 : index
    %c0_26 = arith.constant 0 : index
    %c0_27 = arith.constant 0 : index
    %30 = vector.load %arg4[%c0_25, %c0_26, %c0_27] : memref<1x256x128xf32, #tpu.memory_space<vmem>>, vector<1x256x128xf32>
    %31 = vector.shape_cast %30 : vector<1x256x128xf32> to vector<256x128xf32>
    %c2 = arith.constant 2 : index
    %c0_28 = arith.constant 0 : index
    %c0_29 = arith.constant 0 : index
    %32 = vector.load %arg2[%c2, %c0_28, %c0_29] : memref<9x4x128xbf16, #tpu.memory_space<vmem>>, vector<1x4x128xbf16>
    %33 = vector.shape_cast %32 : vector<1x4x128xbf16> to vector<4x128xbf16>
    %cst_30 = arith.constant dense<0.000000e+00> : vector<256x128xf32>
    %34 = tpu.matmul %29, %33, %cst_30 {dimension_numbers = #tpu.dot_dimension_numbers<[1], [0], [0], [1], [0, 0, 1, 1], [], []>} : vector<256x4xbf16>, vector<4x128xbf16>, vector<256x128xf32> -> vector<256x128xf32>
    %35 = arith.addf %31, %34 : vector<256x128xf32>
    %c0_31 = arith.constant 0 : index
    %c0_32 = arith.constant 0 : index
    %c0_33 = arith.constant 0 : index
    %36 = vector.load %arg4[%c0_31, %c0_32, %c0_33] : memref<1x256x128xf32, #tpu.memory_space<vmem>>, vector<1x256x128xf32>
    %37 = vector.shape_cast %36 : vector<1x256x128xf32> to vector<256x128xf32>
    %38 = vector.shape_cast %35 : vector<256x128xf32> to vector<1x256x128xf32>
    tpu.vector_store %arg4[%c0_31, %c0_32, %c0_33], %38 {strides = array<i32>} : memref<1x256x128xf32, #tpu.memory_space<vmem>>, vector<1x256x128xf32>,
    %39 = vector.extract_strided_slice %1 {offsets = [1, 0, 0], sizes = [16, 16, 4], strides = [1, 1, 1]} : vector<18x18x4xbf16> to vector<16x16x4xbf16>
    %40 = vector.shape_cast %39 : vector<16x16x4xbf16> to vector<256x4xbf16>
    %c0_34 = arith.constant 0 : index
    %c0_35 = arith.constant 0 : index
    %c0_36 = arith.constant 0 : index
    %41 = vector.load %arg4[%c0_34, %c0_35, %c0_36] : memref<1x256x128xf32, #tpu.memory_space<vmem>>, vector<1x256x128xf32>
    %42 = vector.shape_cast %41 : vector<1x256x128xf32> to vector<256x128xf32>
    %c3 = arith.constant 3 : index
    %c0_37 = arith.constant 0 : index
    %c0_38 = arith.constant 0 : index
    %43 = vector.load %arg2[%c3, %c0_37, %c0_38] : memref<9x4x128xbf16, #tpu.memory_space<vmem>>, vector<1x4x128xbf16>
    %44 = vector.shape_cast %43 : vector<1x4x128xbf16> to vector<4x128xbf16>
    %cst_39 = arith.constant dense<0.000000e+00> : vector<256x128xf32>
    %45 = tpu.matmul %40, %44, %cst_39 {dimension_numbers = #tpu.dot_dimension_numbers<[1], [0], [0], [1], [0, 0, 1, 1], [], []>} : vector<256x4xbf16>, vector<4x128xbf16>, vector<256x128xf32> -> vector<256x128xf32>
    %46 = arith.addf %42, %45 : vector<256x128xf32>
    %c0_40 = arith.constant 0 : index
    %c0_41 = arith.constant 0 : index
    %c0_42 = arith.constant 0 : index
    %47 = vector.load %arg4[%c0_40, %c0_41, %c0_42] : memref<1x256x128xf32, #tpu.memory_space<vmem>>, vector<1x256x128xf32>
    %48 = vector.shape_cast %47 : vector<1x256x128xf32> to vector<256x128xf32>
    %49 = vector.shape_cast %46 : vector<256x128xf32> to vector<1x256x128xf32>
    tpu.vector_store %arg4[%c0_40, %c0_41, %c0_42], %49 {strides = array<i32>} : memref<1x256x128xf32, #tpu.memory_space<vmem>>, vector<1x256x128xf32>,
    %50 = vector.extract_strided_slice %1 {offsets = [1, 1, 0], sizes = [16, 16, 4], strides = [1, 1, 1]} : vector<18x18x4xbf16> to vector<16x16x4xbf16>
    %51 = vector.shape_cast %50 : vector<16x16x4xbf16> to vector<256x4xbf16>
    %c0_43 = arith.constant 0 : index
    %c0_44 = arith.constant 0 : index
    %c0_45 = arith.constant 0 : index
    %52 = vector.load %arg4[%c0_43, %c0_44, %c0_45] : memref<1x256x128xf32, #tpu.memory_space<vmem>>, vector<1x256x128xf32>
    %53 = vector.shape_cast %52 : vector<1x256x128xf32> to vector<256x128xf32>
    %c4 = arith.constant 4 : index
    %c0_46 = arith.constant 0 : index
    %c0_47 = arith.constant 0 : index
    %54 = vector.load %arg2[%c4, %c0_46, %c0_47] : memref<9x4x128xbf16, #tpu.memory_space<vmem>>, vector<1x4x128xbf16>
    %55 = vector.shape_cast %54 : vector<1x4x128xbf16> to vector<4x128xbf16>
    %cst_48 = arith.constant dense<0.000000e+00> : vector<256x128xf32>
    %56 = tpu.matmul %51, %55, %cst_48 {dimension_numbers = #tpu.dot_dimension_numbers<[1], [0], [0], [1], [0, 0, 1, 1], [], []>} : vector<256x4xbf16>, vector<4x128xbf16>, vector<256x128xf32> -> vector<256x128xf32>
    %57 = arith.addf %53, %56 : vector<256x128xf32>
    %c0_49 = arith.constant 0 : index
    %c0_50 = arith.constant 0 : index
    %c0_51 = arith.constant 0 : index
    %58 = vector.load %arg4[%c0_49, %c0_50, %c0_51] : memref<1x256x128xf32, #tpu.memory_space<vmem>>, vector<1x256x128xf32>
    %59 = vector.shape_cast %58 : vector<1x256x128xf32> to vector<256x128xf32>
    %60 = vector.shape_cast %57 : vector<256x128xf32> to vector<1x256x128xf32>
    tpu.vector_store %arg4[%c0_49, %c0_50, %c0_51], %60 {strides = array<i32>} : memref<1x256x128xf32, #tpu.memory_space<vmem>>, vector<1x256x128xf32>,
    %61 = vector.extract_strided_slice %1 {offsets = [1, 2, 0], sizes = [16, 16, 4], strides = [1, 1, 1]} : vector<18x18x4xbf16> to vector<16x16x4xbf16>
    %62 = vector.shape_cast %61 : vector<16x16x4xbf16> to vector<256x4xbf16>
    %c0_52 = arith.constant 0 : index
    %c0_53 = arith.constant 0 : index
    %c0_54 = arith.constant 0 : index
    %63 = vector.load %arg4[%c0_52, %c0_53, %c0_54] : memref<1x256x128xf32, #tpu.memory_space<vmem>>, vector<1x256x128xf32>
    %64 = vector.shape_cast %63 : vector<1x256x128xf32> to vector<256x128xf32>
    %c5 = arith.constant 5 : index
    %c0_55 = arith.constant 0 : index
    %c0_56 = arith.constant 0 : index
    %65 = vector.load %arg2[%c5, %c0_55, %c0_56] : memref<9x4x128xbf16, #tpu.memory_space<vmem>>, vector<1x4x128xbf16>
    %66 = vector.shape_cast %65 : vector<1x4x128xbf16> to vector<4x128xbf16>
    %cst_57 = arith.constant dense<0.000000e+00> : vector<256x128xf32>
    %67 = tpu.matmul %62, %66, %cst_57 {dimension_numbers = #tpu.dot_dimension_numbers<[1], [0], [0], [1], [0, 0, 1, 1], [], []>} : vector<256x4xbf16>, vector<4x128xbf16>, vector<256x128xf32> -> vector<256x128xf32>
    %68 = arith.addf %64, %67 : vector<256x128xf32>
    %c0_58 = arith.constant 0 : index
    %c0_59 = arith.constant 0 : index
    %c0_60 = arith.constant 0 : index
    %69 = vector.load %arg4[%c0_58, %c0_59, %c0_60] : memref<1x256x128xf32, #tpu.memory_space<vmem>>, vector<1x256x128xf32>
    %70 = vector.shape_cast %69 : vector<1x256x128xf32> to vector<256x128xf32>
    %71 = vector.shape_cast %68 : vector<256x128xf32> to vector<1x256x128xf32>
    tpu.vector_store %arg4[%c0_58, %c0_59, %c0_60], %71 {strides = array<i32>} : memref<1x256x128xf32, #tpu.memory_space<vmem>>, vector<1x256x128xf32>,
    %72 = vector.extract_strided_slice %1 {offsets = [2, 0, 0], sizes = [16, 16, 4], strides = [1, 1, 1]} : vector<18x18x4xbf16> to vector<16x16x4xbf16>
    %73 = vector.shape_cast %72 : vector<16x16x4xbf16> to vector<256x4xbf16>
    %c0_61 = arith.constant 0 : index
    %c0_62 = arith.constant 0 : index
    %c0_63 = arith.constant 0 : index
    %74 = vector.load %arg4[%c0_61, %c0_62, %c0_63] : memref<1x256x128xf32, #tpu.memory_space<vmem>>, vector<1x256x128xf32>
    %75 = vector.shape_cast %74 : vector<1x256x128xf32> to vector<256x128xf32>
    %c6 = arith.constant 6 : index
    %c0_64 = arith.constant 0 : index
    %c0_65 = arith.constant 0 : index
    %76 = vector.load %arg2[%c6, %c0_64, %c0_65] : memref<9x4x128xbf16, #tpu.memory_space<vmem>>, vector<1x4x128xbf16>
    %77 = vector.shape_cast %76 : vector<1x4x128xbf16> to vector<4x128xbf16>
    %cst_66 = arith.constant dense<0.000000e+00> : vector<256x128xf32>
    %78 = tpu.matmul %73, %77, %cst_66 {dimension_numbers = #tpu.dot_dimension_numbers<[1], [0], [0], [1], [0, 0, 1, 1], [], []>} : vector<256x4xbf16>, vector<4x128xbf16>, vector<256x128xf32> -> vector<256x128xf32>
    %79 = arith.addf %75, %78 : vector<256x128xf32>
    %c0_67 = arith.constant 0 : index
    %c0_68 = arith.constant 0 : index
    %c0_69 = arith.constant 0 : index
    %80 = vector.load %arg4[%c0_67, %c0_68, %c0_69] : memref<1x256x128xf32, #tpu.memory_space<vmem>>, vector<1x256x128xf32>
    %81 = vector.shape_cast %80 : vector<1x256x128xf32> to vector<256x128xf32>
    %82 = vector.shape_cast %79 : vector<256x128xf32> to vector<1x256x128xf32>
    tpu.vector_store %arg4[%c0_67, %c0_68, %c0_69], %82 {strides = array<i32>} : memref<1x256x128xf32, #tpu.memory_space<vmem>>, vector<1x256x128xf32>,
    %83 = vector.extract_strided_slice %1 {offsets = [2, 1, 0], sizes = [16, 16, 4], strides = [1, 1, 1]} : vector<18x18x4xbf16> to vector<16x16x4xbf16>
    %84 = vector.shape_cast %83 : vector<16x16x4xbf16> to vector<256x4xbf16>
    %c0_70 = arith.constant 0 : index
    %c0_71 = arith.constant 0 : index
    %c0_72 = arith.constant 0 : index
    %85 = vector.load %arg4[%c0_70, %c0_71, %c0_72] : memref<1x256x128xf32, #tpu.memory_space<vmem>>, vector<1x256x128xf32>
    %86 = vector.shape_cast %85 : vector<1x256x128xf32> to vector<256x128xf32>
    %c7 = arith.constant 7 : index
    %c0_73 = arith.constant 0 : index
    %c0_74 = arith.constant 0 : index
    %87 = vector.load %arg2[%c7, %c0_73, %c0_74] : memref<9x4x128xbf16, #tpu.memory_space<vmem>>, vector<1x4x128xbf16>
    %88 = vector.shape_cast %87 : vector<1x4x128xbf16> to vector<4x128xbf16>
    %cst_75 = arith.constant dense<0.000000e+00> : vector<256x128xf32>
    %89 = tpu.matmul %84, %88, %cst_75 {dimension_numbers = #tpu.dot_dimension_numbers<[1], [0], [0], [1], [0, 0, 1, 1], [], []>} : vector<256x4xbf16>, vector<4x128xbf16>, vector<256x128xf32> -> vector<256x128xf32>
    %90 = arith.addf %86, %89 : vector<256x128xf32>
    %c0_76 = arith.constant 0 : index
    %c0_77 = arith.constant 0 : index
    %c0_78 = arith.constant 0 : index
    %91 = vector.load %arg4[%c0_76, %c0_77, %c0_78] : memref<1x256x128xf32, #tpu.memory_space<vmem>>, vector<1x256x128xf32>
    %92 = vector.shape_cast %91 : vector<1x256x128xf32> to vector<256x128xf32>
    %93 = vector.shape_cast %90 : vector<256x128xf32> to vector<1x256x128xf32>
    tpu.vector_store %arg4[%c0_76, %c0_77, %c0_78], %93 {strides = array<i32>} : memref<1x256x128xf32, #tpu.memory_space<vmem>>, vector<1x256x128xf32>,
    %94 = vector.extract_strided_slice %1 {offsets = [2, 2, 0], sizes = [16, 16, 4], strides = [1, 1, 1]} : vector<18x18x4xbf16> to vector<16x16x4xbf16>
    %95 = vector.shape_cast %94 : vector<16x16x4xbf16> to vector<256x4xbf16>
    %c0_79 = arith.constant 0 : index
    %c0_80 = arith.constant 0 : index
    %c0_81 = arith.constant 0 : index
    %96 = vector.load %arg4[%c0_79, %c0_80, %c0_81] : memref<1x256x128xf32, #tpu.memory_space<vmem>>, vector<1x256x128xf32>
    %97 = vector.shape_cast %96 : vector<1x256x128xf32> to vector<256x128xf32>
    %c8 = arith.constant 8 : index
    %c0_82 = arith.constant 0 : index
    %c0_83 = arith.constant 0 : index
    %98 = vector.load %arg2[%c8, %c0_82, %c0_83] : memref<9x4x128xbf16, #tpu.memory_space<vmem>>, vector<1x4x128xbf16>
    %99 = vector.shape_cast %98 : vector<1x4x128xbf16> to vector<4x128xbf16>
    %cst_84 = arith.constant dense<0.000000e+00> : vector<256x128xf32>
    %100 = tpu.matmul %95, %99, %cst_84 {dimension_numbers = #tpu.dot_dimension_numbers<[1], [0], [0], [1], [0, 0, 1, 1], [], []>} : vector<256x4xbf16>, vector<4x128xbf16>, vector<256x128xf32> -> vector<256x128xf32>
    %101 = arith.addf %97, %100 : vector<256x128xf32>
    %c0_85 = arith.constant 0 : index
    %c0_86 = arith.constant 0 : index
    %c0_87 = arith.constant 0 : index
    %102 = vector.load %arg4[%c0_85, %c0_86, %c0_87] : memref<1x256x128xf32, #tpu.memory_space<vmem>>, vector<1x256x128xf32>
    %103 = vector.shape_cast %102 : vector<1x256x128xf32> to vector<256x128xf32>
    %104 = vector.shape_cast %101 : vector<256x128xf32> to vector<1x256x128xf32>
    tpu.vector_store %arg4[%c0_85, %c0_86, %c0_87], %104 {strides = array<i32>} : memref<1x256x128xf32, #tpu.memory_space<vmem>>, vector<1x256x128xf32>,
    %c0_88 = arith.constant 0 : index
    %c0_89 = arith.constant 0 : index
    %c0_90 = arith.constant 0 : index
    %105 = vector.load %arg4[%c0_88, %c0_89, %c0_90] : memref<1x256x128xf32, #tpu.memory_space<vmem>>, vector<1x256x128xf32>
    %106 = vector.shape_cast %105 : vector<1x256x128xf32> to vector<256x128xf32>
    %c0_91 = arith.constant 0 : index
    %c0_92 = arith.constant 0 : index
    %107 = vector.load %arg3[%c0_91, %c0_92] : memref<1x128xf32, #tpu.memory_space<vmem>>, vector<1x128xf32>
    %108 = vector.broadcast %107 : vector<1x128xf32> to vector<256x128xf32>
    %109 = arith.addf %106, %108 : vector<256x128xf32>
    %cst_93 = arith.constant 0.000000e+00 : f32
    %110 = vector.broadcast %cst_93 : f32 to vector<256x128xf32>
    %111 = arith.maximumf %109, %110 : vector<256x128xf32>
    %c0_94 = arith.constant 0 : index
    %c0_95 = arith.constant 0 : index
    %c0_96 = arith.constant 0 : index
    %112 = vector.load %arg4[%c0_94, %c0_95, %c0_96] : memref<1x256x128xf32, #tpu.memory_space<vmem>>, vector<1x256x128xf32>
    %113 = vector.shape_cast %112 : vector<1x256x128xf32> to vector<256x128xf32>
    %114 = vector.shape_cast %111 : vector<256x128xf32> to vector<1x256x128xf32>
    tpu.vector_store %arg4[%c0_94, %c0_95, %c0_96], %114 {strides = array<i32>} : memref<1x256x128xf32, #tpu.memory_space<vmem>>, vector<1x256x128xf32>,
    return
  }
  func.func @transform_0(%arg0: i32) -> (i32, i32, i32, i32) {
    %c0_i32 = arith.constant 0 : i32
    %c0_i32_0 = arith.constant 0 : i32
    %c0_i32_1 = arith.constant 0 : i32
    %c0_i32_2 = arith.constant 0 : i32
    return %arg0, %c0_i32, %c0_i32_0, %c0_i32_1 : i32, i32, i32, i32
  }
  func.func @transform_1(%arg0: i32) -> (i32, i32, i32) {
    %c0_i32 = arith.constant 0 : i32
    %c0_i32_0 = arith.constant 0 : i32
    %c0_i32_1 = arith.constant 0 : i32
    %c0_i32_2 = arith.constant 0 : i32
    return %c0_i32, %c0_i32_0, %c0_i32_1 : i32, i32, i32
  }
  func.func @transform_2(%arg0: i32) -> (i32, i32) {
    %c0_i32 = arith.constant 0 : i32
    %c0_i32_0 = arith.constant 0 : i32
    %c0_i32_1 = arith.constant 0 : i32
    return %c0_i32, %c0_i32_0 : i32, i32
  }
  func.func @transform_3(%arg0: i32) -> (i32, i32, i32) {
    %c0_i32 = arith.constant 0 : i32
    %c0_i32_0 = arith.constant 0 : i32
    %c0_i32_1 = arith.constant 0 : i32
    return %arg0, %c0_i32, %c0_i32_0 : i32, i32, i32
  }
}

</mosaic_0001>

<llo_original>
// kernel: checkpoint.1
$region0: #{checkpoint.1}
  #allocation0 [shape = 'u32[]', space=smem, size = 0x4, offset = 0x4, fixed_abs, tag = 'smem constant byte address 0x4 - core index']
  #allocation1 [shape = 'u32[144,128]{1,0:T(1,128)}', space=vmem, size = 0x12000, scoped, tag = 'internal scratch']
  %s0 = inlined_call_operand.vmem [shape: bf16[2,18,18,4], index: 0, kind: input, shape index: {}]
  %s1 = inlined_call_operand.vmem [shape: bf16[9,4,128], index: 1, kind: input, shape index: {}]
  %s2 = inlined_call_operand.vmem [shape: f32[1,128], index: 2, kind: input, shape index: {}]
  %s3 = inlined_call_operand.vmem [shape: f32[2,256,128], index: 3, kind: output, shape index: {}]
  %s4 = sld [smem:[#allocation0]]
  $region45: #{checkpoint.1} parent=0
    _
  %s6 = ssub.s32 1, %s4
  %s7 = scalar_select 0, %s6, %s4
  loop: start=0, step=1, limit=4
  $region2: #{checkpoint.1} parent=0 // loop_pre_header
    _
  $region3: #{checkpoint.1} parent=0 // loop_header
    %s9 = sphi 0, %s13
    %p10 = scmp.ge.s32.totalorder %s9, 4
    %s19 = sphi 0, %s21
    %s22 = sphi 0, %s19
    %s23 = sphi 0, %s22
    %s39 = sphi 0, %s23
    %s43 = sphi 0, %s43
    %s45 = sphi 0, %s43
    %s46 = sphi 0, %s45
    %s60 = sphi 0, %s46
    %s64 = sphi 0, %s64
    %s66 = sphi 0, %s64
    %s67 = sphi 0, %s66
    %s81 = sphi 0, %s67
    %s87 = sphi 0, %s89
    %s90 = sphi 0, %s87
    %s91 = sphi 0, %s90
    %s107 = sphi 0, %s91
  $region4: #{checkpoint.1} parent=0 // loop_header_branch
    %12 = sbr.rel (%p10) target = $region8
  $region5: #{checkpoint.1} parent=0 // loop_body
    %s14 = ssub.s32 %s9, 1
    %s15 = ssub.s32 %s9, 2
    %s16 = sadd.s32 %s9, 1
    %s17 = ssub.s32 %s9, %s16
    %p18 = scmp.eq.s32.totalorder %s17, 0
    %s20 = sadd.s32 %s19, 1
    %s21 = scalar_select %p18, %s19, %s20
    %p24 = pneg %p18
    %p25 = scmp.eq.s32.totalorder %s9, 1
    %p26 = por %p24, %p25
    %p27 = scmp.ne.s32.totalorder %s19, %s22
    %p28 = scmp.eq.s32.totalorder %s9, 0
    %p29 = por %p27, %p28
    %p30 = scmp.ne.s32.totalorder %s19, %s22
    %p31 = scmp.eq.s32.totalorder %s14, 1
    %p32 = por %p30, %p31
    %p33 = scmp.ne.s32.totalorder %s22, %s23
    %p34 = scmp.eq.s32.totalorder %s14, 0
    %p35 = por %p33, %p34
    %p36 = scmp.ne.s32.totalorder %s22, %s23
    %p37 = scmp.eq.s32.totalorder %s15, 1
    %p38 = por %p36, %p37
    %p40 = scmp.ne.s32.totalorder %s23, %s39
    %p41 = scmp.eq.s32.totalorder %s15, 0
    %p42 = por %p40, %p41
    %s44 = sadd.s32 %s43, 1
    %p47 = scmp.eq.s32.totalorder %s9, 1
    %p48 = scmp.ne.s32.totalorder %s43, %s45
    %p49 = scmp.eq.s32.totalorder %s9, 0
    %p50 = por %p48, %p49
    %p51 = scmp.ne.s32.totalorder %s43, %s45
    %p52 = scmp.eq.s32.totalorder %s14, 1
    %p53 = por %p51, %p52
    %p54 = scmp.ne.s32.totalorder %s45, %s46
    %p55 = scmp.eq.s32.totalorder %s14, 0
    %p56 = por %p54, %p55
    %p57 = scmp.ne.s32.totalorder %s45, %s46
    %p58 = scmp.eq.s32.totalorder %s15, 1
    %p59 = por %p57, %p58
    %p61 = scmp.ne.s32.totalorder %s46, %s60
    %p62 = scmp.eq.s32.totalorder %s15, 0
    %p63 = por %p61, %p62
    %s65 = sadd.s32 %s64, 1
    %p68 = scmp.eq.s32.totalorder %s9, 1
    %p69 = scmp.ne.s32.totalorder %s64, %s66
    %p70 = scmp.eq.s32.totalorder %s9, 0
    %p71 = por %p69, %p70
    %p72 = scmp.ne.s32.totalorder %s64, %s66
    %p73 = scmp.eq.s32.totalorder %s14, 1
    %p74 = por %p72, %p73
    %p75 = scmp.ne.s32.totalorder %s66, %s67
    %p76 = scmp.eq.s32.totalorder %s14, 0
    %p77 = por %p75, %p76
    %p78 = scmp.ne.s32.totalorder %s66, %s67
    %p79 = scmp.eq.s32.totalorder %s15, 1
    %p80 = por %p78, %p79
    %p82 = scmp.ne.s32.totalorder %s67, %s81
    %p83 = scmp.eq.s32.totalorder %s15, 0
    %p84 = por %p82, %p83
    %s85 = ssub.s32 %s9, %s16
    %p86 = scmp.eq.s32.totalorder %s85, 0
    %s88 = sadd.s32 %s87, 1
    %s89 = scalar_select %p86, %s87, %s88
    %p92 = pneg %p86
    %p93 = scmp.eq.s32.totalorder %s9, 1
    %p94 = por %p92, %p93
    %p95 = scmp.ne.s32.totalorder %s87, %s90
    %p96 = scmp.eq.s32.totalorder %s9, 0
    %p97 = por %p95, %p96
    %p98 = scmp.ne.s32.totalorder %s87, %s90
    %p99 = scmp.eq.s32.totalorder %s14, 1
    %p100 = por %p98, %p99
    %p101 = scmp.ne.s32.totalorder %s90, %s91
    %p102 = scmp.eq.s32.totalorder %s14, 0
    %p103 = por %p101, %p102
    %p104 = scmp.ne.s32.totalorder %s90, %s91
    %p105 = scmp.eq.s32.totalorder %s15, 1
    %p106 = por %p104, %p105
    %p108 = scmp.ne.s32.totalorder %s91, %s107
    %p109 = scmp.eq.s32.totalorder %s15, 0
    %p110 = por %p108, %p109
    %p111 = scmp.le.s32.totalorder 1, %s9
    %p112 = scmp.lt.s32.totalorder %s9, 3
    %p113 = pnand %p111, %p112
    %p114 = pneg %p113
    // Predicated region
    $region9: #{checkpoint.1} parent=5 // pred_check
      _
    $region10: #{checkpoint.1} parent=5 // pred_check_branch
      %116 = sbr.rel (%p113) target = $region12
    $region11: #{checkpoint.1} parent=5 // pred_region
      %s117 = ssub.s32 %s9, 1
      // Predicated region
      $region13: #{checkpoint.1} parent=11 // pred_check
        %p118 = pneg %p56
      $region14: #{checkpoint.1} parent=11 // pred_check_branch
        %120 = sbr.rel (%p118) target = $region16
      $region15: #{checkpoint.1} parent=11 // pred_region
        _
      $region16: #{checkpoint.1} parent=11 // pred_fallthru
        _
      // Predicated region
      $region17: #{checkpoint.1} parent=11 // pred_check
        %p121 = pneg %p77
      $region18: #{checkpoint.1} parent=11 // pred_check_branch
        %123 = sbr.rel (%p121) target = $region20
      $region19: #{checkpoint.1} parent=11 // pred_region
        _
      $region20: #{checkpoint.1} parent=11 // pred_fallthru
        _
    $region12: #{checkpoint.1} parent=5 // pred_fallthru
      _
    %p124 = scmp.lt.s32.totalorder %s9, 2
    // Predicated region
    $region21: #{checkpoint.1} parent=5 // pred_check
      %p125 = pneg %p124
    $region22: #{checkpoint.1} parent=5 // pred_check_branch
      %127 = sbr.rel (%p125) target = $region24
    $region23: #{checkpoint.1} parent=5 // pred_region
      // Predicated region
      $region25: #{checkpoint.1} parent=23 // pred_check
        %p128 = pneg %p29
      $region26: #{checkpoint.1} parent=23 // pred_check_branch
        %130 = sbr.rel (%p128) target = $region28
      $region27: #{checkpoint.1} parent=23 // pred_region
        %p131 = scmp.lt.s32.totalorder %s9, 1
        %s132 = scalar_select %p131, %s9, 1
        %s133 = smul.addr %s132, 54
        %s134 = smul.addr %s133, 4
        %s135 = scalar_lea.vmem %s0, %s134
      $region28: #{checkpoint.1} parent=23 // pred_fallthru
        _
    $region24: #{checkpoint.1} parent=5 // pred_fallthru
      _
    %p136 = scmp.le.s32.totalorder 1, %s9
    %p137 = scmp.lt.s32.totalorder %s9, 3
    %p138 = pnand %p136, %p137
    %p139 = pneg %p138
    // Predicated region
    $region29: #{checkpoint.1} parent=5 // pred_check
      _
    $region30: #{checkpoint.1} parent=5 // pred_check_branch
      %141 = sbr.rel (%p138) target = $region32
    $region31: #{checkpoint.1} parent=5 // pred_region
      %s142 = ssub.s32 %s9, 1
      %p143 = scmp.lt.s32.totalorder %s14, 1
      %s144 = scalar_select %p143, %s14, 1
      %s145 = smul.addr %s144, 54
      %s146 = smul.addr %s145, 4
      %s147 = scalar_lea.vmem %s0, %s146
      %p148 = pneg %p35
      %p149 = pneg %p32
      %p150 = pneg %p56
      %p151 = pneg %p53
      %p152 = pneg %p77
      %p153 = pneg %p74
      %p154 = pneg %p103
      %p155 = pneg %p100
      %p156 = scmp.lt.s32.totalorder %s14, 1
      %s157 = scalar_select %p156, %s14, 1
      %s158 = smul.addr %s157, 32
      %s159 = smul.addr %s158, 8
      %s160 = scalar_lea.vmem %s3, %s159
      %p161 = scmp.lt.s32.totalorder %s14, 1
      %s162 = scalar_select %p161, %s14, 1
      %s163 = smul.addr %s162, 54
      %s164 = smul.addr %s163, 4
      %s165 = scalar_lea.vmem %s0, %s164
      %p166 = scmp.lt.s32.totalorder %s14, 1
      %s167 = scalar_select %p166, %s14, 1
      %s168 = smul.addr %s167, 32
      %s169 = smul.addr %s168, 8
      %s170 = scalar_lea.vmem %s3, %s169
      %v172 = vld [vmem:[%s165] sm:$0xf]
      %v173 = vld [vmem:[%s165 + $0x4] sm:$0xf]
      %v174 = vld [vmem:[%s165 + $0x8] sm:$0x1]
      %v175 = vld [vmem:[%s165 + $0xc] sm:$0xf]
      %v176 = vld [vmem:[%s165 + $0x10] sm:$0xf]
      %v177 = vld [vmem:[%s165 + $0x14] sm:$0x1]
      %v178 = vld [vmem:[%s165 + $0x18] sm:$0xf]
      %v179 = vld [vmem:[%s165 + $0x1c] sm:$0xf]
      %v180 = vld [vmem:[%s165 + $0x20] sm:$0x1]
      %v181 = vld [vmem:[%s165 + $0x24] sm:$0xf]
      %v182 = vld [vmem:[%s165 + $0x28] sm:$0xf]
      %v183 = vld [vmem:[%s165 + $0x2c] sm:$0x1]
      %v184 = vld [vmem:[%s165 + $0x30] sm:$0xf]
      %v185 = vld [vmem:[%s165 + $0x34] sm:$0xf]
      %v186 = vld [vmem:[%s165 + $0x38] sm:$0x1]
      %v187 = vld [vmem:[%s165 + $0x3c] sm:$0xf]
      %v188 = vld [vmem:[%s165 + $0x40] sm:$0xf]
      %v189 = vld [vmem:[%s165 + $0x44] sm:$0x1]
      %v190 = vld [vmem:[%s165 + $0x48] sm:$0xf]
      %v191 = vld [vmem:[%s165 + $0x4c] sm:$0xf]
      %v192 = vld [vmem:[%s165 + $0x50] sm:$0x1]
      %v193 = vld [vmem:[%s165 + $0x54] sm:$0xf]
      %v194 = vld [vmem:[%s165 + $0x58] sm:$0xf]
      %v195 = vld [vmem:[%s165 + $0x5c] sm:$0x1]
      %v196 = vld [vmem:[%s165 + $0x60] sm:$0xf]
      %v197 = vld [vmem:[%s165 + $0x64] sm:$0xf]
      %v198 = vld [vmem:[%s165 + $0x68] sm:$0x1]
      %v199 = vld [vmem:[%s165 + $0x6c] sm:$0xf]
      %v200 = vld [vmem:[%s165 + $0x70] sm:$0xf]
      %v201 = vld [vmem:[%s165 + $0x74] sm:$0x1]
      %v202 = vld [vmem:[%s165 + $0x78] sm:$0xf]
      %v203 = vld [vmem:[%s165 + $0x7c] sm:$0xf]
      %v204 = vld [vmem:[%s165 + $0x80] sm:$0x1]
      %v205 = vld [vmem:[%s165 + $0x84] sm:$0xf]
      %v206 = vld [vmem:[%s165 + $0x88] sm:$0xf]
      %v207 = vld [vmem:[%s165 + $0x8c] sm:$0x1]
      %v208 = vld [vmem:[%s165 + $0x90] sm:$0xf]
      %v209 = vld [vmem:[%s165 + $0x94] sm:$0xf]
      %v210 = vld [vmem:[%s165 + $0x98] sm:$0x1]
      %v211 = vld [vmem:[%s165 + $0x9c] sm:$0xf]
      %v212 = vld [vmem:[%s165 + $0xa0] sm:$0xf]
      %v213 = vld [vmem:[%s165 + $0xa4] sm:$0x1]
      %v214 = vld [vmem:[%s165 + $0xa8] sm:$0xf]
      %v215 = vld [vmem:[%s165 + $0xac] sm:$0xf]
      %v216 = vld [vmem:[%s165 + $0xb0] sm:$0x1]
      %v217 = vld [vmem:[%s165 + $0xb4] sm:$0xf]
      %v218 = vld [vmem:[%s165 + $0xb8] sm:$0xf]
      %v219 = vld [vmem:[%s165 + $0xbc] sm:$0x1]
      %v220 = vld [vmem:[%s165 + $0xc0] sm:$0xf]
      %v221 = vld [vmem:[%s165 + $0xc4] sm:$0xf]
      %v222 = vld [vmem:[%s165 + $0xc8] sm:$0x1]
      %v223 = vld [vmem:[%s165 + $0xcc] sm:$0xf]
      %v224 = vld [vmem:[%s165 + $0xd0] sm:$0xf]
      %v225 = vld [vmem:[%s165 + $0xd4] sm:$0x1]
      %226 = vst [vmem:[%s170] sm:$0xff] 0.0
      %227 = vst [vmem:[%s170 + $0x8] sm:$0xff] 0.0
      %228 = vst [vmem:[%s170 + $0x10] sm:$0xff] 0.0
      %229 = vst [vmem:[%s170 + $0x18] sm:$0xff] 0.0
      %230 = vst [vmem:[%s170 + $0x20] sm:$0xff] 0.0
      %231 = vst [vmem:[%s170 + $0x28] sm:$0xff] 0.0
      %232 = vst [vmem:[%s170 + $0x30] sm:$0xff] 0.0
      %233 = vst [vmem:[%s170 + $0x38] sm:$0xff] 0.0
      %234 = vst [vmem:[%s170 + $0x40] sm:$0xff] 0.0
      %235 = vst [vmem:[%s170 + $0x48] sm:$0xff] 0.0
      %236 = vst [vmem:[%s170 + $0x50] sm:$0xff] 0.0
      %237 = vst [vmem:[%s170 + $0x58] sm:$0xff] 0.0
      %238 = vst [vmem:[%s170 + $0x60] sm:$0xff] 0.0
      %239 = vst [vmem:[%s170 + $0x68] sm:$0xff] 0.0
      %240 = vst [vmem:[%s170 + $0x70] sm:$0xff] 0.0
      %241 = vst [vmem:[%s170 + $0x78] sm:$0xff] 0.0
      %242 = vst [vmem:[%s170 + $0x80] sm:$0xff] 0.0
      %243 = vst [vmem:[%s170 + $0x88] sm:$0xff] 0.0
      %244 = vst [vmem:[%s170 + $0x90] sm:$0xff] 0.0
      %245 = vst [vmem:[%s170 + $0x98] sm:$0xff] 0.0
      %246 = vst [vmem:[%s170 + $0xa0] sm:$0xff] 0.0
      %247 = vst [vmem:[%s170 + $0xa8] sm:$0xff] 0.0
      %248 = vst [vmem:[%s170 + $0xb0] sm:$0xff] 0.0
      %249 = vst [vmem:[%s170 + $0xb8] sm:$0xff] 0.0
      %250 = vst [vmem:[%s170 + $0xc0] sm:$0xff] 0.0
      %251 = vst [vmem:[%s170 + $0xc8] sm:$0xff] 0.0
      %252 = vst [vmem:[%s170 + $0xd0] sm:$0xff] 0.0
      %253 = vst [vmem:[%s170 + $0xd8] sm:$0xff] 0.0
      %254 = vst [vmem:[%s170 + $0xe0] sm:$0xff] 0.0
      %255 = vst [vmem:[%s170 + $0xe8] sm:$0xff] 0.0
      %256 = vst [vmem:[%s170 + $0xf0] sm:$0xff] 0.0
      %257 = vst [vmem:[%s170 + $0xf8] sm:$0xff] 0.0
      %v258 = vld [vmem:[%s170] sm:$0xff]
      %v259 = vld [vmem:[%s170 + $0x8] sm:$0xff]
      %v260 = vld [vmem:[%s170 + $0x10] sm:$0xff]
      %v261 = vld [vmem:[%s170 + $0x18] sm:$0xff]
      %v262 = vld [vmem:[%s170 + $0x20] sm:$0xff]
      %v263 = vld [vmem:[%s170 + $0x28] sm:$0xff]
      %v264 = vld [vmem:[%s170 + $0x30] sm:$0xff]
      %v265 = vld [vmem:[%s170 + $0x38] sm:$0xff]
      %v266 = vld [vmem:[%s170 + $0x40] sm:$0xff]
      %v267 = vld [vmem:[%s170 + $0x48] sm:$0xff]
      %v268 = vld [vmem:[%s170 + $0x50] sm:$0xff]
      %v269 = vld [vmem:[%s170 + $0x58] sm:$0xff]
      %v270 = vld [vmem:[%s170 + $0x60] sm:$0xff]
      %v271 = vld [vmem:[%s170 + $0x68] sm:$0xff]
      %v272 = vld [vmem:[%s170 + $0x70] sm:$0xff]
      %v273 = vld [vmem:[%s170 + $0x78] sm:$0xff]
      %v274 = vld [vmem:[%s170 + $0x80] sm:$0xff]
      %v275 = vld [vmem:[%s170 + $0x88] sm:$0xff]
      %v276 = vld [vmem:[%s170 + $0x90] sm:$0xff]
      %v277 = vld [vmem:[%s170 + $0x98] sm:$0xff]
      %v278 = vld [vmem:[%s170 + $0xa0] sm:$0xff]
      %v279 = vld [vmem:[%s170 + $0xa8] sm:$0xff]
      %v280 = vld [vmem:[%s170 + $0xb0] sm:$0xff]
      %v281 = vld [vmem:[%s170 + $0xb8] sm:$0xff]
      %v282 = vld [vmem:[%s170 + $0xc0] sm:$0xff]
      %v283 = vld [vmem:[%s170 + $0xc8] sm:$0xff]
      %v284 = vld [vmem:[%s170 + $0xd0] sm:$0xff]
      %v285 = vld [vmem:[%s170 + $0xd8] sm:$0xff]
      %v286 = vld [vmem:[%s170 + $0xe0] sm:$0xff]
      %v287 = vld [vmem:[%s170 + $0xe8] sm:$0xff]
      %v288 = vld [vmem:[%s170 + $0xf0] sm:$0xff]
      %v289 = vld [vmem:[%s170 + $0xf8] sm:$0xff]
      %v290 = vld [vmem:[%s1] sm:$0x3]
      %v323 = vunpack.c.l.b16 %v172
      %v324 = vunpack.c.l.b16 %v173
      %v325 = vunpack.c.l.b16 %v175
      %v326 = vunpack.c.l.b16 %v176
      %v327 = vunpack.c.l.b16 %v178
      %v328 = vunpack.c.l.b16 %v179
      %v329 = vunpack.c.l.b16 %v181
      %v330 = vunpack.c.l.b16 %v182
      %v331 = vunpack.c.l.b16 %v184
      %v332 = vunpack.c.l.b16 %v185
      %v333 = vunpack.c.l.b16 %v187
      %v334 = vunpack.c.l.b16 %v188
      %v335 = vunpack.c.l.b16 %v190
      %v336 = vunpack.c.l.b16 %v191
      %v337 = vunpack.c.l.b16 %v193
      %v338 = vunpack.c.l.b16 %v194
      %v339 = vunpack.c.l.b16 %v196
      %v340 = vunpack.c.l.b16 %v197
      %v341 = vunpack.c.l.b16 %v199
      %v342 = vunpack.c.l.b16 %v200
      %v343 = vunpack.c.l.b16 %v202
      %v344 = vunpack.c.l.b16 %v203
      %v345 = vunpack.c.l.b16 %v205
      %v346 = vunpack.c.l.b16 %v206
      %v347 = vunpack.c.l.b16 %v208
      %v348 = vunpack.c.l.b16 %v209
      %v349 = vunpack.c.l.b16 %v211
      %v350 = vunpack.c.l.b16 %v212
      %v351 = vunpack.c.l.b16 %v214
      %v352 = vunpack.c.l.b16 %v215
      %v353 = vunpack.c.l.b16 %v217
      %v354 = vunpack.c.l.b16 %v218
      %v355 = vpack.c.b16 %v324, %v323
      %v356 = vpack.c.b16 %v326, %v325
      %v357 = vpack.c.b16 %v328, %v327
      %v358 = vpack.c.b16 %v330, %v329
      %v359 = vpack.c.b16 %v332, %v331
      %v360 = vpack.c.b16 %v334, %v333
      %v361 = vpack.c.b16 %v336, %v335
      %v362 = vpack.c.b16 %v338, %v337
      %v363 = vpack.c.b16 %v340, %v339
      %v364 = vpack.c.b16 %v342, %v341
      %v365 = vpack.c.b16 %v344, %v343
      %v366 = vpack.c.b16 %v346, %v345
      %v367 = vpack.c.b16 %v348, %v347
      %v368 = vpack.c.b16 %v350, %v349
      %v369 = vpack.c.b16 %v352, %v351
      %v370 = vpack.c.b16 %v354, %v353
      %vm371 = vcmask 31744
      %v373 = vsel %vm371, %v355, 0
      %v376 = vsel %vm371, %v356, 0
      %v379 = vsel %vm371, %v357, 0
      %v382 = vsel %vm371, %v358, 0
      %v385 = vsel %vm371, %v359, 0
      %v388 = vsel %vm371, %v360, 0
      %v391 = vsel %vm371, %v361, 0
      %v394 = vsel %vm371, %v362, 0
      %v397 = vsel %vm371, %v363, 0
      %v400 = vsel %vm371, %v364, 0
      %v403 = vsel %vm371, %v365, 0
      %v406 = vsel %vm371, %v366, 0
      %v409 = vsel %vm371, %v367, 0
      %v412 = vsel %vm371, %v368, 0
      %v415 = vsel %vm371, %v369, 0
      %v418 = vsel %vm371, %v370, 0
      %vm420 = vcmask 1041408
      %v422 = vsel %vm420, %v290, 0
      %424 = vmatprep.subr.bf16.mxu0 0
      %425 = vmatpush1.bf16.msra.mxu0 %v422
      %426 = vmatprep.subr.bf16.mxu0 0
      %427 = vmatpush1.bf16.msra.mxu0 0
      %428 = vmatprep.subr.bf16.mxu0 0
      %429 = vmatpush1.bf16.msra.mxu0 0
      %430 = vmatprep.subr.bf16.mxu0 0
      %431 = vmatpush1.bf16.msra.mxu0 0
      %432 = vmatprep.subr.bf16.mxu0 0
      %433 = vmatpush1.bf16.msra.mxu0 0
      %434 = vmatprep.subr.bf16.mxu0 0
      %435 = vmatpush1.bf16.msra.mxu0 0
      %436 = vmatprep.subr.bf16.mxu0 0
      %437 = vmatpush1.bf16.msra.mxu0 0
      %438 = vmatprep.subr.bf16.mxu0 0
      %439 = vmatpush1.bf16.msra.mxu0 0
      %440 = vmatprep.subr.bf16.mxu0 0
      %441 = vmatpush1.bf16.msra.mxu0 0
      %442 = vmatprep.subr.bf16.mxu0 0
      %443 = vmatpush1.bf16.msra.mxu0 0
      %444 = vmatprep.subr.bf16.mxu0 0
      %445 = vmatpush1.bf16.msra.mxu0 0
      %446 = vmatprep.subr.bf16.mxu0 0
      %447 = vmatpush1.bf16.msra.mxu0 0
      %448 = vmatprep.subr.bf16.mxu0 0
      %449 = vmatpush1.bf16.msra.mxu0 0
      %450 = vmatprep.subr.bf16.mxu0 0
      %451 = vmatpush1.bf16.msra.mxu0 0
      %452 = vmatprep.subr.bf16.mxu0 0
      %453 = vmatpush1.bf16.msra.mxu0 0
      %454 = vmatprep.subr.bf16.mxu0 0
      %455 = vmatpush1.bf16.msra.mxu0 0
      %456 = vmatprep.mubr.bf16.mxu0 0
      %457 = vmatmul.mubr.bf16.gmra.mrb[0].mxu0 %v373
      %v458 = vpop.f32.mrb[0].mxu0
      %v459 = vadd.f32 0.0, %v458
      %v460 = vpop.f32.mrb[0].mxu0
      %v461 = vpop.f32.mrb[0].mxu0
      %v462 = vadd.f32 0.0, %v461
      %v463 = vpop.f32.mrb[0].mxu0
      %464 = vmatprep.mubr.bf16.mxu0 0
      %465 = vmatmul.mubr.bf16.gmra.mrb[0].mxu0 %v376
      %v466 = vpop.f32.mrb[0].mxu0
      %v467 = vadd.f32 0.0, %v466
      %v468 = vpop.f32.mrb[0].mxu0
      %v469 = vpop.f32.mrb[0].mxu0
      %v470 = vadd.f32 0.0, %v469
      %v471 = vpop.f32.mrb[0].mxu0
      %472 = vmatprep.mubr.bf16.mxu0 0
      %473 = vmatmul.mubr.bf16.gmra.mrb[0].mxu0 %v379
      %v474 = vpop.f32.mrb[0].mxu0
      %v475 = vadd.f32 0.0, %v474
      %v476 = vpop.f32.mrb[0].mxu0
      %v477 = vpop.f32.mrb[0].mxu0
      %v478 = vadd.f32 0.0, %v477
      %v479 = vpop.f32.mrb[0].mxu0
      %480 = vmatprep.mubr.bf16.mxu0 0
      %481 = vmatmul.mubr.bf16.gmra.mrb[0].mxu0 %v382
      %v482 = vpop.f32.mrb[0].mxu0
      %v483 = vadd.f32 0.0, %v482
      %v484 = vpop.f32.mrb[0].mxu0
      %v485 = vpop.f32.mrb[0].mxu0
      %v486 = vadd.f32 0.0, %v485
      %v487 = vpop.f32.mrb[0].mxu0
      %488 = vmatprep.mubr.bf16.mxu0 0
      %489 = vmatmul.mubr.bf16.gmra.mrb[0].mxu0 %v385
      %v490 = vpop.f32.mrb[0].mxu0
      %v491 = vadd.f32 0.0, %v490
      %v492 = vpop.f32.mrb[0].mxu0
      %v493 = vpop.f32.mrb[0].mxu0
      %v494 = vadd.f32 0.0, %v493
      %v495 = vpop.f32.mrb[0].mxu0
      %496 = vmatprep.mubr.bf16.mxu0 0
      %497 = vmatmul.mubr.bf16.gmra.mrb[0].mxu0 %v388
      %v498 = vpop.f32.mrb[0].mxu0
      %v499 = vadd.f32 0.0, %v498
      %v500 = vpop.f32.mrb[0].mxu0
      %v501 = vpop.f32.mrb[0].mxu0
      %v502 = vadd.f32 0.0, %v501
      %v503 = vpop.f32.mrb[0].mxu0
      %504 = vmatprep.mubr.bf16.mxu0 0
      %505 = vmatmul.mubr.bf16.gmra.mrb[0].mxu0 %v391
      %v506 = vpop.f32.mrb[0].mxu0
      %v507 = vadd.f32 0.0, %v506
      %v508 = vpop.f32.mrb[0].mxu0
      %v509 = vpop.f32.mrb[0].mxu0
      %v510 = vadd.f32 0.0, %v509
      %v511 = vpop.f32.mrb[0].mxu0
      %512 = vmatprep.mubr.bf16.mxu0 0
      %513 = vmatmul.mubr.bf16.gmra.mrb[0].mxu0 %v394
      %v514 = vpop.f32.mrb[0].mxu0
      %v515 = vadd.f32 0.0, %v514
      %v516 = vpop.f32.mrb[0].mxu0
      %v517 = vpop.f32.mrb[0].mxu0
      %v518 = vadd.f32 0.0, %v517
      %v519 = vpop.f32.mrb[0].mxu0
      %520 = vmatprep.mubr.bf16.mxu0 0
      %521 = vmatmul.mubr.bf16.gmra.mrb[0].mxu0 %v397
      %v522 = vpop.f32.mrb[0].mxu0
      %v523 = vadd.f32 0.0, %v522
      %v524 = vpop.f32.mrb[0].mxu0
      %v525 = vpop.f32.mrb[0].mxu0
      %v526 = vadd.f32 0.0, %v525
      %v527 = vpop.f32.mrb[0].mxu0
      %528 = vmatprep.mubr.bf16.mxu0 0
      %529 = vmatmul.mubr.bf16.gmra.mrb[0].mxu0 %v400
      %v530 = vpop.f32.mrb[0].mxu0
      %v531 = vadd.f32 0.0, %v530
      %v532 = vpop.f32.mrb[0].mxu0
      %v533 = vpop.f32.mrb[0].mxu0
      %v534 = vadd.f32 0.0, %v533
      %v535 = vpop.f32.mrb[0].mxu0
      %536 = vmatprep.mubr.bf16.mxu0 0
      %537 = vmatmul.mubr.bf16.gmra.mrb[0].mxu0 %v403
      %v538 = vpop.f32.mrb[0].mxu0
      %v539 = vadd.f32 0.0, %v538
      %v540 = vpop.f32.mrb[0].mxu0
      %v541 = vpop.f32.mrb[0].mxu0
      %v542 = vadd.f32 0.0, %v541
      %v543 = vpop.f32.mrb[0].mxu0
      %544 = vmatprep.mubr.bf16.mxu0 0
      %545 = vmatmul.mubr.bf16.gmra.mrb[0].mxu0 %v406
      %v546 = vpop.f32.mrb[0].mxu0
      %v547 = vadd.f32 0.0, %v546
      %v548 = vpop.f32.mrb[0].mxu0
      %v549 = vpop.f32.mrb[0].mxu0
      %v550 = vadd.f32 0.0, %v549
      %v551 = vpop.f32.mrb[0].mxu0
      %552 = vmatprep.mubr.bf16.mxu0 0
      %553 = vmatmul.mubr.bf16.gmra.mrb[0].mxu0 %v409
      %v554 = vpop.f32.mrb[0].mxu0
      %v555 = vadd.f32 0.0, %v554
      %v556 = vpop.f32.mrb[0].mxu0
      %v557 = vpop.f32.mrb[0].mxu0
      %v558 = vadd.f32 0.0, %v557
      %v559 = vpop.f32.mrb[0].mxu0
      %560 = vmatprep.mubr.bf16.mxu0 0
      %561 = vmatmul.mubr.bf16.gmra.mrb[0].mxu0 %v412
      %v562 = vpop.f32.mrb[0].mxu0
      %v563 = vadd.f32 0.0, %v562
      %v564 = vpop.f32.mrb[0].mxu0
      %v565 = vpop.f32.mrb[0].mxu0
      %v566 = vadd.f32 0.0, %v565
      %v567 = vpop.f32.mrb[0].mxu0
      %568 = vmatprep.mubr.bf16.mxu0 0
      %569 = vmatmul.mubr.bf16.gmra.mrb[0].mxu0 %v415
      %v570 = vpop.f32.mrb[0].mxu0
      %v571 = vadd.f32 0.0, %v570
      %v572 = vpop.f32.mrb[0].mxu0
      %v573 = vpop.f32.mrb[0].mxu0
      %v574 = vadd.f32 0.0, %v573
      %v575 = vpop.f32.mrb[0].mxu0
      %576 = vmatprep.mubr.bf16.mxu0 0
      %577 = vmatmul.mubr.bf16.gmra.mrb[0].mxu0 %v418
      %v578 = vpop.f32.mrb[0].mxu0
      %v579 = vadd.f32 0.0, %v578
      %v580 = vpop.f32.mrb[0].mxu0
      %v581 = vpop.f32.mrb[0].mxu0
      %v582 = vadd.f32 0.0, %v581
      %v583 = vpop.f32.mrb[0].mxu0
      %584 = vdwg.mxu0
      %v585 = vadd.f32 %v258, %v459
      %v586 = vadd.f32 %v259, %v462
      %v587 = vadd.f32 %v260, %v467
      %v588 = vadd.f32 %v261, %v470
      %v589 = vadd.f32 %v262, %v475
      %v590 = vadd.f32 %v263, %v478
      %v591 = vadd.f32 %v264, %v483
      %v592 = vadd.f32 %v265, %v486
      %v593 = vadd.f32 %v266, %v491
      %v594 = vadd.f32 %v267, %v494
      %v595 = vadd.f32 %v268, %v499
      %v596 = vadd.f32 %v269, %v502
      %v597 = vadd.f32 %v270, %v507
      %v598 = vadd.f32 %v271, %v510
      %v599 = vadd.f32 %v272, %v515
      %v600 = vadd.f32 %v273, %v518
      %v601 = vadd.f32 %v274, %v523
      %v602 = vadd.f32 %v275, %v526
      %v603 = vadd.f32 %v276, %v531
      %v604 = vadd.f32 %v277, %v534
      %v605 = vadd.f32 %v278, %v539
      %v606 = vadd.f32 %v279, %v542
      %v607 = vadd.f32 %v280, %v547
      %v608 = vadd.f32 %v281, %v550
      %v609 = vadd.f32 %v282, %v555
      %v610 = vadd.f32 %v283, %v558
      %v611 = vadd.f32 %v284, %v563
      %v612 = vadd.f32 %v285, %v566
      %v613 = vadd.f32 %v286, %v571
      %v614 = vadd.f32 %v287, %v574
      %v615 = vadd.f32 %v288, %v579
      %v616 = vadd.f32 %v289, %v582
      %617 = vst [vmem:[%s170] sm:$0xff] %v585
      %618 = vst [vmem:[%s170 + $0x8] sm:$0xff] %v586
      %619 = vst [vmem:[%s170 + $0x10] sm:$0xff] %v587
      %620 = vst [vmem:[%s170 + $0x18] sm:$0xff] %v588
      %621 = vst [vmem:[%s170 + $0x20] sm:$0xff] %v589
      %622 = vst [vmem:[%s170 + $0x28] sm:$0xff] %v590
      %623 = vst [vmem:[%s170 + $0x30] sm:$0xff] %v591
      %624 = vst [vmem:[%s170 + $0x38] sm:$0xff] %v592
      %625 = vst [vmem:[%s170 + $0x40] sm:$0xff] %v593
      %626 = vst [vmem:[%s170 + $0x48] sm:$0xff] %v594
      %627 = vst [vmem:[%s170 + $0x50] sm:$0xff] %v595
      %628 = vst [vmem:[%s170 + $0x58] sm:$0xff] %v596
      %629 = vst [vmem:[%s170 + $0x60] sm:$0xff] %v597
      %630 = vst [vmem:[%s170 + $0x68] sm:$0xff] %v598
      %631 = vst [vmem:[%s170 + $0x70] sm:$0xff] %v599
      %632 = vst [vmem:[%s170 + $0x78] sm:$0xff] %v600
      %633 = vst [vmem:[%s170 + $0x80] sm:$0xff] %v601
      %634 = vst [vmem:[%s170 + $0x88] sm:$0xff] %v602
      %635 = vst [vmem:[%s170 + $0x90] sm:$0xff] %v603
      %636 = vst [vmem:[%s170 + $0x98] sm:$0xff] %v604
      %637 = vst [vmem:[%s170 + $0xa0] sm:$0xff] %v605
      %638 = vst [vmem:[%s170 + $0xa8] sm:$0xff] %v606
      %639 = vst [vmem:[%s170 + $0xb0] sm:$0xff] %v607
      %640 = vst [vmem:[%s170 + $0xb8] sm:$0xff] %v608
      %641 = vst [vmem:[%s170 + $0xc0] sm:$0xff] %v609
      %642 = vst [vmem:[%s170 + $0xc8] sm:$0xff] %v610
      %643 = vst [vmem:[%s170 + $0xd0] sm:$0xff] %v611
      %644 = vst [vmem:[%s170 + $0xd8] sm:$0xff] %v612
      %645 = vst [vmem:[%s170 + $0xe0] sm:$0xff] %v613
      %646 = vst [vmem:[%s170 + $0xe8] sm:$0xff] %v614
      %647 = vst [vmem:[%s170 + $0xf0] sm:$0xff] %v615
      %648 = vst [vmem:[%s170 + $0xf8] sm:$0xff] %v616
      %vm649 = vsmask.f32 3328
      %vm650 = vsmask.f32 7440
      %vm651 = vmor %vm649, %vm650
      %v653 = vshrl.u32 %v172, 16
      %v655 = vrot.slane %v653, 4
      %v656 = vshll.u32 %v172, 16
      %v658 = vrot.slane %v656, 5
      %v659 = vor.u32 %v655, %v658
      %v660 = vrot.slane %v659, 4
      %v662 = vshll.u32 %v173, 16
      %v664 = vrot.slane %v662, 5
      %v665 = vsel %vm651, %v660, %v664
      %v666 = vshrl.u32 %v173, 16
      %v668 = vrot.slane %v666, 4
      %v669 = vor.u32 %v668, %v664
      %v670 = vrot.slane %v669, 4
      %v672 = vshll.u32 %v174, 16
      %v674 = vrot.slane %v672, 5
      %v675 = vsel %vm651, %v670, %v674
      %v677 = vshrl.u32 %v175, 16
      %v679 = vrot.slane %v677, 4
      %v680 = vshll.u32 %v175, 16
      %v682 = vrot.slane %v680, 5
      %v683 = vor.u32 %v679, %v682
      %v684 = vrot.slane %v683, 4
      %v686 = vshll.u32 %v176, 16
      %v688 = vrot.slane %v686, 5
      %v689 = vsel %vm651, %v684, %v688
      %v690 = vshrl.u32 %v176, 16
      %v692 = vrot.slane %v690, 4
      %v693 = vor.u32 %v692, %v688
      %v694 = vrot.slane %v693, 4
      %v696 = vshll.u32 %v177, 16
      %v698 = vrot.slane %v696, 5
      %v699 = vsel %vm651, %v694, %v698
      %v701 = vshrl.u32 %v178, 16
      %v703 = vrot.slane %v701, 4
      %v704 = vshll.u32 %v178, 16
      %v706 = vrot.slane %v704, 5
      %v707 = vor.u32 %v703, %v706
      %v708 = vrot.slane %v707, 4
      %v710 = vshll.u32 %v179, 16
      %v712 = vrot.slane %v710, 5
      %v713 = vsel %vm651, %v708, %v712
      %v714 = vshrl.u32 %v179, 16
      %v716 = vrot.slane %v714, 4
      %v717 = vor.u32 %v716, %v712
      %v718 = vrot.slane %v717, 4
      %v720 = vshll.u32 %v180, 16
      %v722 = vrot.slane %v720, 5
      %v723 = vsel %vm651, %v718, %v722
      %v725 = vshrl.u32 %v181, 16
      %v727 = vrot.slane %v725, 4
      %v728 = vshll.u32 %v181, 16
      %v730 = vrot.slane %v728, 5
      %v731 = vor.u32 %v727, %v730
      %v732 = vrot.slane %v731, 4
      %v734 = vshll.u32 %v182, 16
      %v736 = vrot.slane %v734, 5
      %v737 = vsel %vm651, %v732, %v736
      %v738 = vshrl.u32 %v182, 16
      %v740 = vrot.slane %v738, 4
      %v741 = vor.u32 %v740, %v736
      %v742 = vrot.slane %v741, 4
      %v744 = vshll.u32 %v183, 16
      %v746 = vrot.slane %v744, 5
      %v747 = vsel %vm651, %v742, %v746
      %v749 = vshrl.u32 %v184, 16
      %v751 = vrot.slane %v749, 4
      %v752 = vshll.u32 %v184, 16
      %v754 = vrot.slane %v752, 5
      %v755 = vor.u32 %v751, %v754
      %v756 = vrot.slane %v755, 4
      %v758 = vshll.u32 %v185, 16
      %v760 = vrot.slane %v758, 5
      %v761 = vsel %vm651, %v756, %v760
      %v762 = vshrl.u32 %v185, 16
      %v764 = vrot.slane %v762, 4
      %v765 = vor.u32 %v764, %v760
      %v766 = vrot.slane %v765, 4
      %v768 = vshll.u32 %v186, 16
      %v770 = vrot.slane %v768, 5
      %v771 = vsel %vm651, %v766, %v770
      %v773 = vshrl.u32 %v187, 16
      %v775 = vrot.slane %v773, 4
      %v776 = vshll.u32 %v187, 16
      %v778 = vrot.slane %v776, 5
      %v779 = vor.u32 %v775, %v778
      %v780 = vrot.slane %v779, 4
      %v782 = vshll.u32 %v188, 16
      %v784 = vrot.slane %v782, 5
      %v785 = vsel %vm651, %v780, %v784
      %v786 = vshrl.u32 %v188, 16
      %v788 = vrot.slane %v786, 4
      %v789 = vor.u32 %v788, %v784
      %v790 = vrot.slane %v789, 4
      %v792 = vshll.u32 %v189, 16
      %v794 = vrot.slane %v792, 5
      %v795 = vsel %vm651, %v790, %v794
      %v797 = vshrl.u32 %v190, 16
      %v799 = vrot.slane %v797, 4
      %v800 = vshll.u32 %v190, 16
      %v802 = vrot.slane %v800, 5
      %v803 = vor.u32 %v799, %v802
      %v804 = vrot.slane %v803, 4
      %v806 = vshll.u32 %v191, 16
      %v808 = vrot.slane %v806, 5
      %v809 = vsel %vm651, %v804, %v808
      %v810 = vshrl.u32 %v191, 16
      %v812 = vrot.slane %v810, 4
      %v813 = vor.u32 %v812, %v808
      %v814 = vrot.slane %v813, 4
      %v816 = vshll.u32 %v192, 16
      %v818 = vrot.slane %v816, 5
      %v819 = vsel %vm651, %v814, %v818
      %v821 = vshrl.u32 %v193, 16
      %v823 = vrot.slane %v821, 4
      %v824 = vshll.u32 %v193, 16
      %v826 = vrot.slane %v824, 5
      %v827 = vor.u32 %v823, %v826
      %v828 = vrot.slane %v827, 4
      %v830 = vshll.u32 %v194, 16
      %v832 = vrot.slane %v830, 5
      %v833 = vsel %vm651, %v828, %v832
      %v834 = vshrl.u32 %v194, 16
      %v836 = vrot.slane %v834, 4
      %v837 = vor.u32 %v836, %v832
      %v838 = vrot.slane %v837, 4
      %v840 = vshll.u32 %v195, 16
      %v842 = vrot.slane %v840, 5
      %v843 = vsel %vm651, %v838, %v842
      %v845 = vshrl.u32 %v196, 16
      %v847 = vrot.slane %v845, 4
      %v848 = vshll.u32 %v196, 16
      %v850 = vrot.slane %v848, 5
      %v851 = vor.u32 %v847, %v850
      %v852 = vrot.slane %v851, 4
      %v854 = vshll.u32 %v197, 16
      %v856 = vrot.slane %v854, 5
      %v857 = vsel %vm651, %v852, %v856
      %v858 = vshrl.u32 %v197, 16
      %v860 = vrot.slane %v858, 4
      %v861 = vor.u32 %v860, %v856
      %v862 = vrot.slane %v861, 4
      %v864 = vshll.u32 %v198, 16
      %v866 = vrot.slane %v864, 5
      %v867 = vsel %vm651, %v862, %v866
      %v869 = vshrl.u32 %v199, 16
      %v871 = vrot.slane %v869, 4
      %v872 = vshll.u32 %v199, 16
      %v874 = vrot.slane %v872, 5
      %v875 = vor.u32 %v871, %v874
      %v876 = vrot.slane %v875, 4
      %v878 = vshll.u32 %v200, 16
      %v880 = vrot.slane %v878, 5
      %v881 = vsel %vm651, %v876, %v880
      %v882 = vshrl.u32 %v200, 16
      %v884 = vrot.slane %v882, 4
      %v885 = vor.u32 %v884, %v880
      %v886 = vrot.slane %v885, 4
      %v888 = vshll.u32 %v201, 16
      %v890 = vrot.slane %v888, 5
      %v891 = vsel %vm651, %v886, %v890
      %v893 = vshrl.u32 %v202, 16
      %v895 = vrot.slane %v893, 4
      %v896 = vshll.u32 %v202, 16
      %v898 = vrot.slane %v896, 5
      %v899 = vor.u32 %v895, %v898
      %v900 = vrot.slane %v899, 4
      %v902 = vshll.u32 %v203, 16
      %v904 = vrot.slane %v902, 5
      %v905 = vsel %vm651, %v900, %v904
      %v906 = vshrl.u32 %v203, 16
      %v908 = vrot.slane %v906, 4
      %v909 = vor.u32 %v908, %v904
      %v910 = vrot.slane %v909, 4
      %v912 = vshll.u32 %v204, 16
      %v914 = vrot.slane %v912, 5
      %v915 = vsel %vm651, %v910, %v914
      %v917 = vshrl.u32 %v205, 16
      %v919 = vrot.slane %v917, 4
      %v920 = vshll.u32 %v205, 16
      %v922 = vrot.slane %v920, 5
      %v923 = vor.u32 %v919, %v922
      %v924 = vrot.slane %v923, 4
      %v926 = vshll.u32 %v206, 16
      %v928 = vrot.slane %v926, 5
      %v929 = vsel %vm651, %v924, %v928
      %v930 = vshrl.u32 %v206, 16
      %v932 = vrot.slane %v930, 4
      %v933 = vor.u32 %v932, %v928
      %v934 = vrot.slane %v933, 4
      %v936 = vshll.u32 %v207, 16
      %v938 = vrot.slane %v936, 5
      %v939 = vsel %vm651, %v934, %v938
      %v941 = vshrl.u32 %v208, 16
      %v943 = vrot.slane %v941, 4
      %v944 = vshll.u32 %v208, 16
      %v946 = vrot.slane %v944, 5
      %v947 = vor.u32 %v943, %v946
      %v948 = vrot.slane %v947, 4
      %v950 = vshll.u32 %v209, 16
      %v952 = vrot.slane %v950, 5
      %v953 = vsel %vm651, %v948, %v952
      %v954 = vshrl.u32 %v209, 16
      %v956 = vrot.slane %v954, 4
      %v957 = vor.u32 %v956, %v952
      %v958 = vrot.slane %v957, 4
      %v960 = vshll.u32 %v210, 16
      %v962 = vrot.slane %v960, 5
      %v963 = vsel %vm651, %v958, %v962
      %v965 = vshrl.u32 %v211, 16
      %v967 = vrot.slane %v965, 4
      %v968 = vshll.u32 %v211, 16
      %v970 = vrot.slane %v968, 5
      %v971 = vor.u32 %v967, %v970
      %v972 = vrot.slane %v971, 4
      %v974 = vshll.u32 %v212, 16
      %v976 = vrot.slane %v974, 5
      %v977 = vsel %vm651, %v972, %v976
      %v978 = vshrl.u32 %v212, 16
      %v980 = vrot.slane %v978, 4
      %v981 = vor.u32 %v980, %v976
      %v982 = vrot.slane %v981, 4
      %v984 = vshll.u32 %v213, 16
      %v986 = vrot.slane %v984, 5
      %v987 = vsel %vm651, %v982, %v986
      %v989 = vshrl.u32 %v214, 16
      %v991 = vrot.slane %v989, 4
      %v992 = vshll.u32 %v214, 16
      %v994 = vrot.slane %v992, 5
      %v995 = vor.u32 %v991, %v994
      %v996 = vrot.slane %v995, 4
      %v998 = vshll.u32 %v215, 16
      %v1000 = vrot.slane %v998, 5
      %v1001 = vsel %vm651, %v996, %v1000
      %v1002 = vshrl.u32 %v215, 16
      %v1004 = vrot.slane %v1002, 4
      %v1005 = vor.u32 %v1004, %v1000
      %v1006 = vrot.slane %v1005, 4
      %v1008 = vshll.u32 %v216, 16
      %v1010 = vrot.slane %v1008, 5
      %v1011 = vsel %vm651, %v1006, %v1010
      %v1013 = vshrl.u32 %v217, 16
      %v1015 = vrot.slane %v1013, 4
      %v1016 = vshll.u32 %v217, 16
      %v1018 = vrot.slane %v1016, 5
      %v1019 = vor.u32 %v1015, %v1018
      %v1020 = vrot.slane %v1019, 4
      %v1022 = vshll.u32 %v218, 16
      %v1024 = vrot.slane %v1022, 5
      %v1025 = vsel %vm651, %v1020, %v1024
      %v1026 = vshrl.u32 %v218, 16
      %v1028 = vrot.slane %v1026, 4
      %v1029 = vor.u32 %v1028, %v1024
      %v1030 = vrot.slane %v1029, 4
      %v1032 = vshll.u32 %v219, 16
      %v1034 = vrot.slane %v1032, 5
      %v1035 = vsel %vm651, %v1030, %v1034
      %v1036 = vld [vmem:[%s170] sm:$0xff]
      %v1037 = vld [vmem:[%s170 + $0x8] sm:$0xff]
      %v1038 = vld [vmem:[%s170 + $0x10] sm:$0xff]
      %v1039 = vld [vmem:[%s170 + $0x18] sm:$0xff]
      %v1040 = vld [vmem:[%s170 + $0x20] sm:$0xff]
      %v1041 = vld [vmem:[%s170 + $0x28] sm:$0xff]
      %v1042 = vld [vmem:[%s170 + $0x30] sm:$0xff]
      %v1043 = vld [vmem:[%s170 + $0x38] sm:$0xff]
      %v1044 = vld [vmem:[%s170 + $0x40] sm:$0xff]
      %v1045 = vld [vmem:[%s170 + $0x48] sm:$0xff]
      %v1046 = vld [vmem:[%s170 + $0x50] sm:$0xff]
      %v1047 = vld [vmem:[%s170 + $0x58] sm:$0xff]
      %v1048 = vld [vmem:[%s170 + $0x60] sm:$0xff]
      %v1049 = vld [vmem:[%s170 + $0x68] sm:$0xff]
      %v1050 = vld [vmem:[%s170 + $0x70] sm:$0xff]
      %v1051 = vld [vmem:[%s170 + $0x78] sm:$0xff]
      %v1052 = vld [vmem:[%s170 + $0x80] sm:$0xff]
      %v1053 = vld [vmem:[%s170 + $0x88] sm:$0xff]
      %v1054 = vld [vmem:[%s170 + $0x90] sm:$0xff]
      %v1055 = vld [vmem:[%s170 + $0x98] sm:$0xff]
      %v1056 = vld [vmem:[%s170 + $0xa0] sm:$0xff]
      %v1057 = vld [vmem:[%s170 + $0xa8] sm:$0xff]
      %v1058 = vld [vmem:[%s170 + $0xb0] sm:$0xff]
      %v1059 = vld [vmem:[%s170 + $0xb8] sm:$0xff]
      %v1060 = vld [vmem:[%s170 + $0xc0] sm:$0xff]
      %v1061 = vld [vmem:[%s170 + $0xc8] sm:$0xff]
      %v1062 = vld [vmem:[%s170 + $0xd0] sm:$0xff]
      %v1063 = vld [vmem:[%s170 + $0xd8] sm:$0xff]
      %v1064 = vld [vmem:[%s170 + $0xe0] sm:$0xff]
      %v1065 = vld [vmem:[%s170 + $0xe8] sm:$0xff]
      %v1066 = vld [vmem:[%s170 + $0xf0] sm:$0xff]
      %v1067 = vld [vmem:[%s170 + $0xf8] sm:$0xff]
      %s1068 = scalar_lea.vmem %s1, 2
      %v1069 = vld [vmem:[%s1068] sm:$0x3]
      %v1070 = vunpack.c.l.b16 %v665
      %v1071 = vunpack.c.l.b16 %v675
      %v1072 = vunpack.c.l.b16 %v689
      %v1073 = vunpack.c.l.b16 %v699
      %v1074 = vunpack.c.l.b16 %v713
      %v1075 = vunpack.c.l.b16 %v723
      %v1076 = vunpack.c.l.b16 %v737
      %v1077 = vunpack.c.l.b16 %v747
      %v1078 = vunpack.c.l.b16 %v761
      %v1079 = vunpack.c.l.b16 %v771
      %v1080 = vunpack.c.l.b16 %v785
      %v1081 = vunpack.c.l.b16 %v795
      %v1082 = vunpack.c.l.b16 %v809
      %v1083 = vunpack.c.l.b16 %v819
      %v1084 = vunpack.c.l.b16 %v833
      %v1085 = vunpack.c.l.b16 %v843
      %v1086 = vunpack.c.l.b16 %v857
      %v1087 = vunpack.c.l.b16 %v867
      %v1088 = vunpack.c.l.b16 %v881
      %v1089 = vunpack.c.l.b16 %v891
      %v1090 = vunpack.c.l.b16 %v905
      %v1091 = vunpack.c.l.b16 %v915
      %v1092 = vunpack.c.l.b16 %v929
      %v1093 = vunpack.c.l.b16 %v939
      %v1094 = vunpack.c.l.b16 %v953
      %v1095 = vunpack.c.l.b16 %v963
      %v1096 = vunpack.c.l.b16 %v977
      %v1097 = vunpack.c.l.b16 %v987
      %v1098 = vunpack.c.l.b16 %v1001
      %v1099 = vunpack.c.l.b16 %v1011
      %v1100 = vunpack.c.l.b16 %v1025
      %v1101 = vunpack.c.l.b16 %v1035
      %v1102 = vpack.c.b16 %v1071, %v1070
      %v1103 = vpack.c.b16 %v1073, %v1072
      %v1104 = vpack.c.b16 %v1075, %v1074
      %v1105 = vpack.c.b16 %v1077, %v1076
      %v1106 = vpack.c.b16 %v1079, %v1078
      %v1107 = vpack.c.b16 %v1081, %v1080
      %v1108 = vpack.c.b16 %v1083, %v1082
      %v1109 = vpack.c.b16 %v1085, %v1084
      %v1110 = vpack.c.b16 %v1087, %v1086
      %v1111 = vpack.c.b16 %v1089, %v1088
      %v1112 = vpack.c.b16 %v1091, %v1090
      %v1113 = vpack.c.b16 %v1093, %v1092
      %v1114 = vpack.c.b16 %v1095, %v1094
      %v1115 = vpack.c.b16 %v1097, %v1096
      %v1116 = vpack.c.b16 %v1099, %v1098
      %v1117 = vpack.c.b16 %v1101, %v1100
      %v1119 = vsel %vm371, %v1102, 0
      %v1122 = vsel %vm371, %v1103, 0
      %v1125 = vsel %vm371, %v1104, 0
      %v1128 = vsel %vm371, %v1105, 0
      %v1131 = vsel %vm371, %v1106, 0
      %v1134 = vsel %vm371, %v1107, 0
      %v1137 = vsel %vm371, %v1108, 0
      %v1140 = vsel %vm371, %v1109, 0
      %v1143 = vsel %vm371, %v1110, 0
      %v1146 = vsel %vm371, %v1111, 0
      %v1149 = vsel %vm371, %v1112, 0
      %v1152 = vsel %vm371, %v1113, 0
      %v1155 = vsel %vm371, %v1114, 0
      %v1158 = vsel %vm371, %v1115, 0
      %v1161 = vsel %vm371, %v1116, 0
      %v1164 = vsel %vm371, %v1117, 0
      %v1167 = vsel %vm420, %v1069, 0
      %1169 = vmatprep.subr.bf16.mxu0 0
      %1170 = vmatpush1.bf16.msra.mxu0 %v1167
      %1171 = vmatprep.subr.bf16.mxu0 0
      %1172 = vmatpush1.bf16.msra.mxu0 0
      %1173 = vmatprep.subr.bf16.mxu0 0
      %1174 = vmatpush1.bf16.msra.mxu0 0
      %1175 = vmatprep.subr.bf16.mxu0 0
      %1176 = vmatpush1.bf16.msra.mxu0 0
      %1177 = vmatprep.subr.bf16.mxu0 0
      %1178 = vmatpush1.bf16.msra.mxu0 0
      %1179 = vmatprep.subr.bf16.mxu0 0
      %1180 = vmatpush1.bf16.msra.mxu0 0
      %1181 = vmatprep.subr.bf16.mxu0 0
      %1182 = vmatpush1.bf16.msra.mxu0 0
      %1183 = vmatprep.subr.bf16.mxu0 0
      %1184 = vmatpush1.bf16.msra.mxu0 0
      %1185 = vmatprep.subr.bf16.mxu0 0
      %1186 = vmatpush1.bf16.msra.mxu0 0
      %1187 = vmatprep.subr.bf16.mxu0 0
      %1188 = vmatpush1.bf16.msra.mxu0 0
      %1189 = vmatprep.subr.bf16.mxu0 0
      %1190 = vmatpush1.bf16.msra.mxu0 0
      %1191 = vmatprep.subr.bf16.mxu0 0
      %1192 = vmatpush1.bf16.msra.mxu0 0
      %1193 = vmatprep.subr.bf16.mxu0 0
      %1194 = vmatpush1.bf16.msra.mxu0 0
      %1195 = vmatprep.subr.bf16.mxu0 0
      %1196 = vmatpush1.bf16.msra.mxu0 0
      %1197 = vmatprep.subr.bf16.mxu0 0
      %1198 = vmatpush1.bf16.msra.mxu0 0
      %1199 = vmatprep.subr.bf16.mxu0 0
      %1200 = vmatpush1.bf16.msra.mxu0 0
      %1201 = vmatprep.mubr.bf16.mxu0 0
      %1202 = vmatmul.mubr.bf16.gmra.mrb[0].mxu0 %v1119
      %v1203 = vpop.f32.mrb[0].mxu0
      %v1204 = vadd.f32 0.0, %v1203
      %v1205 = vpop.f32.mrb[0].mxu0
      %v1206 = vpop.f32.mrb[0].mxu0
      %v1207 = vadd.f32 0.0, %v1206
      %v1208 = vpop.f32.mrb[0].mxu0
      %1209 = vmatprep.mubr.bf16.mxu0 0
      %1210 = vmatmul.mubr.bf16.gmra.mrb[0].mxu0 %v1122
      %v1211 = vpop.f32.mrb[0].mxu0
      %v1212 = vadd.f32 0.0, %v1211
      %v1213 = vpop.f32.mrb[0].mxu0
      %v1214 = vpop.f32.mrb[0].mxu0
      %v1215 = vadd.f32 0.0, %v1214
      %v1216 = vpop.f32.mrb[0].mxu0
      %1217 = vmatprep.mubr.bf16.mxu0 0
      %1218 = vmatmul.mubr.bf16.gmra.mrb[0].mxu0 %v1125
      %v1219 = vpop.f32.mrb[0].mxu0
      %v1220 = vadd.f32 0.0, %v1219
      %v1221 = vpop.f32.mrb[0].mxu0
      %v1222 = vpop.f32.mrb[0].mxu0
      %v1223 = vadd.f32 0.0, %v1222
      %v1224 = vpop.f32.mrb[0].mxu0
      %1225 = vmatprep.mubr.bf16.mxu0 0
      %1226 = vmatmul.mubr.bf16.gmra.mrb[0].mxu0 %v1128
      %v1227 = vpop.f32.mrb[0].mxu0
      %v1228 = vadd.f32 0.0, %v1227
      %v1229 = vpop.f32.mrb[0].mxu0
      %v1230 = vpop.f32.mrb[0].mxu0
      %v1231 = vadd.f32 0.0, %v1230
      %v1232 = vpop.f32.mrb[0].mxu0
      %1233 = vmatprep.mubr.bf16.mxu0 0
      %1234 = vmatmul.mubr.bf16.gmra.mrb[0].mxu0 %v1131
      %v1235 = vpop.f32.mrb[0].mxu0
      %v1236 = vadd.f32 0.0, %v1235
      %v1237 = vpop.f32.mrb[0].mxu0
      %v1238 = vpop.f32.mrb[0].mxu0
      %v1239 = vadd.f32 0.0, %v1238
      %v1240 = vpop.f32.mrb[0].mxu0
      %1241 = vmatprep.mubr.bf16.mxu0 0
      %1242 = vmatmul.mubr.bf16.gmra.mrb[0].mxu0 %v1134
      %v1243 = vpop.f32.mrb[0].mxu0
      %v1244 = vadd.f32 0.0, %v1243
      %v1245 = vpop.f32.mrb[0].mxu0
      %v1246 = vpop.f32.mrb[0].mxu0
      %v1247 = vadd.f32 0.0, %v1246
      %v1248 = vpop.f32.mrb[0].mxu0
      %1249 = vmatprep.mubr.bf16.mxu0 0
      %1250 = vmatmul.mubr.bf16.gmra.mrb[0].mxu0 %v1137
      %v1251 = vpop.f32.mrb[0].mxu0
      %v1252 = vadd.f32 0.0, %v1251
      %v1253 = vpop.f32.mrb[0].mxu0
      %v1254 = vpop.f32.mrb[0].mxu0
      %v1255 = vadd.f32 0.0, %v1254
      %v1256 = vpop.f32.mrb[0].mxu0
      %1257 = vmatprep.mubr.bf16.mxu0 0
      %1258 = vmatmul.mubr.bf16.gmra.mrb[0].mxu0 %v1140
      %v1259 = vpop.f32.mrb[0].mxu0
      %v1260 = vadd.f32 0.0, %v1259
      %v1261 = vpop.f32.mrb[0].mxu0
      %v1262 = vpop.f32.mrb[0].mxu0
      %v1263 = vadd.f32 0.0, %v1262
      %v1264 = vpop.f32.mrb[0].mxu0
      %1265 = vmatprep.mubr.bf16.mxu0 0
      %1266 = vmatmul.mubr.bf16.gmra.mrb[0].mxu0 %v1143
      %v1267 = vpop.f32.mrb[0].mxu0
      %v1268 = vadd.f32 0.0, %v1267
      %v1269 = vpop.f32.mrb[0].mxu0
      %v1270 = vpop.f32.mrb[0].mxu0
      %v1271 = vadd.f32 0.0, %v1270
      %v1272 = vpop.f32.mrb[0].mxu0
      %1273 = vmatprep.mubr.bf16.mxu0 0
      %1274 = vmatmul.mubr.bf16.gmra.mrb[0].mxu0 %v1146
      %v1275 = vpop.f32.mrb[0].mxu0
      %v1276 = vadd.f32 0.0, %v1275
      %v1277 = vpop.f32.mrb[0].mxu0
      %v1278 = vpop.f32.mrb[0].mxu0
      %v1279 = vadd.f32 0.0, %v1278
      %v1280 = vpop.f32.mrb[0].mxu0
      %1281 = vmatprep.mubr.bf16.mxu0 0
      %1282 = vmatmul.mubr.bf16.gmra.mrb[0].mxu0 %v1149
      %v1283 = vpop.f32.mrb[0].mxu0
      %v1284 = vadd.f32 0.0, %v1283
      %v1285 = vpop.f32.mrb[0].mxu0
      %v1286 = vpop.f32.mrb[0].mxu0
      %v1287 = vadd.f32 0.0, %v1286
      %v1288 = vpop.f32.mrb[0].mxu0
      %1289 = vmatprep.mubr.bf16.mxu0 0
      %1290 = vmatmul.mubr.bf16.gmra.mrb[0].mxu0 %v1152
      %v1291 = vpop.f32.mrb[0].mxu0
      %v1292 = vadd.f32 0.0, %v1291
      %v1293 = vpop.f32.mrb[0].mxu0
      %v1294 = vpop.f32.mrb[0].mxu0
      %v1295 = vadd.f32 0.0, %v1294
      %v1296 = vpop.f32.mrb[0].mxu0
      %1297 = vmatprep.mubr.bf16.mxu0 0
      %1298 = vmatmul.mubr.bf16.gmra.mrb[0].mxu0 %v1155
      %v1299 = vpop.f32.mrb[0].mxu0
      %v1300 = vadd.f32 0.0, %v1299
      %v1301 = vpop.f32.mrb[0].mxu0
      %v1302 = vpop.f32.mrb[0].mxu0
      %v1303 = vadd.f32 0.0, %v1302
      %v1304 = vpop.f32.mrb[0].mxu0
      %1305 = vmatprep.mubr.bf16.mxu0 0
      %1306 = vmatmul.mubr.bf16.gmra.mrb[0].mxu0 %v1158
      %v1307 = vpop.f32.mrb[0].mxu0
      %v1308 = vadd.f32 0.0, %v1307
      %v1309 = vpop.f32.mrb[0].mxu0
      %v1310 = vpop.f32.mrb[0].mxu0
      %v1311 = vadd.f32 0.0, %v1310
      %v1312 = vpop.f32.mrb[0].mxu0
      %1313 = vmatprep.mubr.bf16.mxu0 0
      %1314 = vmatmul.mubr.bf16.gmra.mrb[0].mxu0 %v1161
      %v1315 = vpop.f32.mrb[0].mxu0
      %v1316 = vadd.f32 0.0, %v1315
      %v1317 = vpop.f32.mrb[0].mxu0
      %v1318 = vpop.f32.mrb[0].mxu0
      %v1319 = vadd.f32 0.0, %v1318
      %v1320 = vpop.f32.mrb[0].mxu0
      %1321 = vmatprep.mubr.bf16.mxu0 0
      %1322 = vmatmul.mubr.bf16.gmra.mrb[0].mxu0 %v1164
      %v1323 = vpop.f32.mrb[0].mxu0
      %v1324 = vadd.f32 0.0, %v1323
      %v1325 = vpop.f32.mrb[0].mxu0
      %v1326 = vpop.f32.mrb[0].mxu0
      %v1327 = vadd.f32 0.0, %v1326
      %v1328 = vpop.f32.mrb[0].mxu0
      %1329 = vdwg.mxu0
      %v1330 = vadd.f32 %v1036, %v1204
      %v1331 = vadd.f32 %v1037, %v1207
      %v1332 = vadd.f32 %v1038, %v1212
      %v1333 = vadd.f32 %v1039, %v1215
      %v1334 = vadd.f32 %v1040, %v1220
      %v1335 = vadd.f32 %v1041, %v1223
      %v1336 = vadd.f32 %v1042, %v1228
      %v1337 = vadd.f32 %v1043, %v1231
      %v1338 = vadd.f32 %v1044, %v1236
      %v1339 = vadd.f32 %v1045, %v1239
      %v1340 = vadd.f32 %v1046, %v1244
      %v1341 = vadd.f32 %v1047, %v1247
      %v1342 = vadd.f32 %v1048, %v1252
      %v1343 = vadd.f32 %v1049, %v1255
      %v1344 = vadd.f32 %v1050, %v1260
      %v1345 = vadd.f32 %v1051, %v1263
      %v1346 = vadd.f32 %v1052, %v1268
      %v1347 = vadd.f32 %v1053, %v1271
      %v1348 = vadd.f32 %v1054, %v1276
      %v1349 = vadd.f32 %v1055, %v1279
      %v1350 = vadd.f32 %v1056, %v1284
      %v1351 = vadd.f32 %v1057, %v1287
      %v1352 = vadd.f32 %v1058, %v1292
      %v1353 = vadd.f32 %v1059, %v1295
      %v1354 = vadd.f32 %v1060, %v1300
      %v1355 = vadd.f32 %v1061, %v1303
      %v1356 = vadd.f32 %v1062, %v1308
      %v1357 = vadd.f32 %v1063, %v1311
      %v1358 = vadd.f32 %v1064, %v1316
      %v1359 = vadd.f32 %v1065, %v1319
      %v1360 = vadd.f32 %v1066, %v1324
      %v1361 = vadd.f32 %v1067, %v1327
      %1362 = vst [vmem:[%s170] sm:$0xff] %v1330
      %1363 = vst [vmem:[%s170 + $0x8] sm:$0xff] %v1331
      %1364 = vst [vmem:[%s170 + $0x10] sm:$0xff] %v1332
      %1365 = vst [vmem:[%s170 + $0x18] sm:$0xff] %v1333
      %1366 = vst [vmem:[%s170 + $0x20] sm:$0xff] %v1334
      %1367 = vst [vmem:[%s170 + $0x28] sm:$0xff] %v1335
      %1368 = vst [vmem:[%s170 + $0x30] sm:$0xff] %v1336
      %1369 = vst [vmem:[%s170 + $0x38] sm:$0xff] %v1337
      %1370 = vst [vmem:[%s170 + $0x40] sm:$0xff] %v1338
      %1371 = vst [vmem:[%s170 + $0x48] sm:$0xff] %v1339
      %1372 = vst [vmem:[%s170 + $0x50] sm:$0xff] %v1340
      %1373 = vst [vmem:[%s170 + $0x58] sm:$0xff] %v1341
      %1374 = vst [vmem:[%s170 + $0x60] sm:$0xff] %v1342
      %1375 = vst [vmem:[%s170 + $0x68] sm:$0xff] %v1343
      %1376 = vst [vmem:[%s170 + $0x70] sm:$0xff] %v1344
      %1377 = vst [vmem:[%s170 + $0x78] sm:$0xff] %v1345
      %1378 = vst [vmem:[%s170 + $0x80] sm:$0xff] %v1346
      %1379 = vst [vmem:[%s170 + $0x88] sm:$0xff] %v1347
      %1380 = vst [vmem:[%s170 + $0x90] sm:$0xff] %v1348
      %1381 = vst [vmem:[%s170 + $0x98] sm:$0xff] %v1349
      %1382 = vst [vmem:[%s170 + $0xa0] sm:$0xff] %v1350
      %1383 = vst [vmem:[%s170 + $0xa8] sm:$0xff] %v1351
      %1384 = vst [vmem:[%s170 + $0xb0] sm:$0xff] %v1352
      %1385 = vst [vmem:[%s170 + $0xb8] sm:$0xff] %v1353
      %1386 = vst [vmem:[%s170 + $0xc0] sm:$0xff] %v1354
      %1387 = vst [vmem:[%s170 + $0xc8] sm:$0xff] %v1355
      %1388 = vst [vmem:[%s170 + $0xd0] sm:$0xff] %v1356
      %1389 = vst [vmem:[%s170 + $0xd8] sm:$0xff] %v1357
      %1390 = vst [vmem:[%s170 + $0xe0] sm:$0xff] %v1358
      %1391 = vst [vmem:[%s170 + $0xe8] sm:$0xff] %v1359
      %1392 = vst [vmem:[%s170 + $0xf0] sm:$0xff] %v1360
      %1393 = vst [vmem:[%s170 + $0xf8] sm:$0xff] %v1361
      %vm1410 = vcmask 1042432
      %vm1411 = vcmask 1046532
      %vm1412 = vmor %vm1410, %vm1411
      %v1413 = vrot.slane %v172, 5
      %v1414 = vrot.slane %v1413, 4
      %v1415 = vrot.slane %v173, 5
      %v1416 = vsel %vm1412, %v1414, %v1415
      %v1417 = vrot.slane %v1415, 4
      %v1418 = vrot.slane %v174, 5
      %v1419 = vsel %vm1412, %v1417, %v1418
      %v1420 = vrot.slane %v175, 5
      %v1421 = vrot.slane %v1420, 4
      %v1422 = vrot.slane %v176, 5
      %v1423 = vsel %vm1412, %v1421, %v1422
      %v1424 = vrot.slane %v1422, 4
      %v1425 = vrot.slane %v177, 5
      %v1426 = vsel %vm1412, %v1424, %v1425
      %v1427 = vrot.slane %v178, 5
      %v1428 = vrot.slane %v1427, 4
      %v1429 = vrot.slane %v179, 5
      %v1430 = vsel %vm1412, %v1428, %v1429
      %v1431 = vrot.slane %v1429, 4
      %v1432 = vrot.slane %v180, 5
      %v1433 = vsel %vm1412, %v1431, %v1432
      %v1434 = vrot.slane %v181, 5
      %v1435 = vrot.slane %v1434, 4
      %v1436 = vrot.slane %v182, 5
      %v1437 = vsel %vm1412, %v1435, %v1436
      %v1438 = vrot.slane %v1436, 4
      %v1439 = vrot.slane %v183, 5
      %v1440 = vsel %vm1412, %v1438, %v1439
      %v1441 = vrot.slane %v184, 5
      %v1442 = vrot.slane %v1441, 4
      %v1443 = vrot.slane %v185, 5
      %v1444 = vsel %vm1412, %v1442, %v1443
      %v1445 = vrot.slane %v1443, 4
      %v1446 = vrot.slane %v186, 5
      %v1447 = vsel %vm1412, %v1445, %v1446
      %v1448 = vrot.slane %v187, 5
      %v1449 = vrot.slane %v1448, 4
      %v1450 = vrot.slane %v188, 5
      %v1451 = vsel %vm1412, %v1449, %v1450
      %v1452 = vrot.slane %v1450, 4
      %v1453 = vrot.slane %v189, 5
      %v1454 = vsel %vm1412, %v1452, %v1453
      %v1455 = vrot.slane %v190, 5
      %v1456 = vrot.slane %v1455, 4
      %v1457 = vrot.slane %v191, 5
      %v1458 = vsel %vm1412, %v1456, %v1457
      %v1459 = vrot.slane %v1457, 4
      %v1460 = vrot.slane %v192, 5
      %v1461 = vsel %vm1412, %v1459, %v1460
      %v1462 = vrot.slane %v193, 5
      %v1463 = vrot.slane %v1462, 4
      %v1464 = vrot.slane %v194, 5
      %v1465 = vsel %vm1412, %v1463, %v1464
      %v1466 = vrot.slane %v1464, 4
      %v1467 = vrot.slane %v195, 5
      %v1468 = vsel %vm1412, %v1466, %v1467
      %v1469 = vrot.slane %v196, 5
      %v1470 = vrot.slane %v1469, 4
      %v1471 = vrot.slane %v197, 5
      %v1472 = vsel %vm1412, %v1470, %v1471
      %v1473 = vrot.slane %v1471, 4
      %v1474 = vrot.slane %v198, 5
      %v1475 = vsel %vm1412, %v1473, %v1474
      %v1476 = vrot.slane %v199, 5
      %v1477 = vrot.slane %v1476, 4
      %v1478 = vrot.slane %v200, 5
      %v1479 = vsel %vm1412, %v1477, %v1478
      %v1480 = vrot.slane %v1478, 4
      %v1481 = vrot.slane %v201, 5
      %v1482 = vsel %vm1412, %v1480, %v1481
      %v1483 = vrot.slane %v202, 5
      %v1484 = vrot.slane %v1483, 4
      %v1485 = vrot.slane %v203, 5
      %v1486 = vsel %vm1412, %v1484, %v1485
      %v1487 = vrot.slane %v1485, 4
      %v1488 = vrot.slane %v204, 5
      %v1489 = vsel %vm1412, %v1487, %v1488
      %v1490 = vrot.slane %v205, 5
      %v1491 = vrot.slane %v1490, 4
      %v1492 = vrot.slane %v206, 5
      %v1493 = vsel %vm1412, %v1491, %v1492
      %v1494 = vrot.slane %v1492, 4
      %v1495 = vrot.slane %v207, 5
      %v1496 = vsel %vm1412, %v1494, %v1495
      %v1497 = vrot.slane %v208, 5
      %v1498 = vrot.slane %v1497, 4
      %v1499 = vrot.slane %v209, 5
      %v1500 = vsel %vm1412, %v1498, %v1499
      %v1501 = vrot.slane %v1499, 4
      %v1502 = vrot.slane %v210, 5
      %v1503 = vsel %vm1412, %v1501, %v1502
      %v1504 = vrot.slane %v211, 5
      %v1505 = vrot.slane %v1504, 4
      %v1506 = vrot.slane %v212, 5
      %v1507 = vsel %vm1412, %v1505, %v1506
      %v1508 = vrot.slane %v1506, 4
      %v1509 = vrot.slane %v213, 5
      %v1510 = vsel %vm1412, %v1508, %v1509
      %v1511 = vrot.slane %v214, 5
      %v1512 = vrot.slane %v1511, 4
      %v1513 = vrot.slane %v215, 5
      %v1514 = vsel %vm1412, %v1512, %v1513
      %v1515 = vrot.slane %v1513, 4
      %v1516 = vrot.slane %v216, 5
      %v1517 = vsel %vm1412, %v1515, %v1516
      %v1518 = vrot.slane %v217, 5
      %v1519 = vrot.slane %v1518, 4
      %v1520 = vrot.slane %v218, 5
      %v1521 = vsel %vm1412, %v1519, %v1520
      %v1522 = vrot.slane %v1520, 4
      %v1523 = vrot.slane %v219, 5
      %v1524 = vsel %vm1412, %v1522, %v1523
      %v1525 = vld [vmem:[%s170] sm:$0xff]
      %v1526 = vld [vmem:[%s170 + $0x8] sm:$0xff]
      %v1527 = vld [vmem:[%s170 + $0x10] sm:$0xff]
      %v1528 = vld [vmem:[%s170 + $0x18] sm:$0xff]
      %v1529 = vld [vmem:[%s170 + $0x20] sm:$0xff]
      %v1530 = vld [vmem:[%s170 + $0x28] sm:$0xff]
      %v1531 = vld [vmem:[%s170 + $0x30] sm:$0xff]
      %v1532 = vld [vmem:[%s170 + $0x38] sm:$0xff]
      %v1533 = vld [vmem:[%s170 + $0x40] sm:$0xff]
      %v1534 = vld [vmem:[%s170 + $0x48] sm:$0xff]
      %v1535 = vld [vmem:[%s170 + $0x50] sm:$0xff]
      %v1536 = vld [vmem:[%s170 + $0x58] sm:$0xff]
      %v1537 = vld [vmem:[%s170 + $0x60] sm:$0xff]
      %v1538 = vld [vmem:[%s170 + $0x68] sm:$0xff]
      %v1539 = vld [vmem:[%s170 + $0x70] sm:$0xff]
      %v1540 = vld [vmem:[%s170 + $0x78] sm:$0xff]
      %v1541 = vld [vmem:[%s170 + $0x80] sm:$0xff]
      %v1542 = vld [vmem:[%s170 + $0x88] sm:$0xff]
      %v1543 = vld [vmem:[%s170 + $0x90] sm:$0xff]
      %v1544 = vld [vmem:[%s170 + $0x98] sm:$0xff]
      %v1545 = vld [vmem:[%s170 + $0xa0] sm:$0xff]
      %v1546 = vld [vmem:[%s170 + $0xa8] sm:$0xff]
      %v1547 = vld [vmem:[%s170 + $0xb0] sm:$0xff]
      %v1548 = vld [vmem:[%s170 + $0xb8] sm:$0xff]
      %v1549 = vld [vmem:[%s170 + $0xc0] sm:$0xff]
      %v1550 = vld [vmem:[%s170 + $0xc8] sm:$0xff]
      %v1551 = vld [vmem:[%s170 + $0xd0] sm:$0xff]
      %v1552 = vld [vmem:[%s170 + $0xd8] sm:$0xff]
      %v1553 = vld [vmem:[%s170 + $0xe0] sm:$0xff]
      %v1554 = vld [vmem:[%s170 + $0xe8] sm:$0xff]
      %v1555 = vld [vmem:[%s170 + $0xf0] sm:$0xff]
      %v1556 = vld [vmem:[%s170 + $0xf8] sm:$0xff]
      %s1557 = scalar_lea.vmem %s1, 4
      %v1558 = vld [vmem:[%s1557] sm:$0x3]
      %v1559 = vunpack.c.l.b16 %v1416
      %v1560 = vunpack.c.l.b16 %v1419
      %v1561 = vunpack.c.l.b16 %v1423
      %v1562 = vunpack.c.l.b16 %v1426
      %v1563 = vunpack.c.l.b16 %v1430
      %v1564 = vunpack.c.l.b16 %v1433
      %v1565 = vunpack.c.l.b16 %v1437
      %v1566 = vunpack.c.l.b16 %v1440
      %v1567 = vunpack.c.l.b16 %v1444
      %v1568 = vunpack.c.l.b16 %v1447
      %v1569 = vunpack.c.l.b16 %v1451
      %v1570 = vunpack.c.l.b16 %v1454
      %v1571 = vunpack.c.l.b16 %v1458
      %v1572 = vunpack.c.l.b16 %v1461
      %v1573 = vunpack.c.l.b16 %v1465
      %v1574 = vunpack.c.l.b16 %v1468
      %v1575 = vunpack.c.l.b16 %v1472
      %v1576 = vunpack.c.l.b16 %v1475
      %v1577 = vunpack.c.l.b16 %v1479
      %v1578 = vunpack.c.l.b16 %v1482
      %v1579 = vunpack.c.l.b16 %v1486
      %v1580 = vunpack.c.l.b16 %v1489
      %v1581 = vunpack.c.l.b16 %v1493
      %v1582 = vunpack.c.l.b16 %v1496
      %v1583 = vunpack.c.l.b16 %v1500
      %v1584 = vunpack.c.l.b16 %v1503
      %v1585 = vunpack.c.l.b16 %v1507
      %v1586 = vunpack.c.l.b16 %v1510
      %v1587 = vunpack.c.l.b16 %v1514
      %v1588 = vunpack.c.l.b16 %v1517
      %v1589 = vunpack.c.l.b16 %v1521
      %v1590 = vunpack.c.l.b16 %v1524
      %v1591 = vpack.c.b16 %v1560, %v1559
      %v1592 = vpack.c.b16 %v1562, %v1561
      %v1593 = vpack.c.b16 %v1564, %v1563
      %v1594 = vpack.c.b16 %v1566, %v1565
      %v1595 = vpack.c.b16 %v1568, %v1567
      %v1596 = vpack.c.b16 %v1570, %v1569
      %v1597 = vpack.c.b16 %v1572, %v1571
      %v1598 = vpack.c.b16 %v1574, %v1573
      %v1599 = vpack.c.b16 %v1576, %v1575
      %v1600 = vpack.c.b16 %v1578, %v1577
      %v1601 = vpack.c.b16 %v1580, %v1579
      %v1602 = vpack.c.b16 %v1582, %v1581
      %v1603 = vpack.c.b16 %v1584, %v1583
      %v1604 = vpack.c.b16 %v1586, %v1585
      %v1605 = vpack.c.b16 %v1588, %v1587
      %v1606 = vpack.c.b16 %v1590, %v1589
      %v1608 = vsel %vm371, %v1591, 0
      %v1611 = vsel %vm371, %v1592, 0
      %v1614 = vsel %vm371, %v1593, 0
      %v1617 = vsel %vm371, %v1594, 0
      %v1620 = vsel %vm371, %v1595, 0
      %v1623 = vsel %vm371, %v1596, 0
      %v1626 = vsel %vm371, %v1597, 0
      %v1629 = vsel %vm371, %v1598, 0
      %v1632 = vsel %vm371, %v1599, 0
      %v1635 = vsel %vm371, %v1600, 0
      %v1638 = vsel %vm371, %v1601, 0
      %v1641 = vsel %vm371, %v1602, 0
      %v1644 = vsel %vm371, %v1603, 0
      %v1647 = vsel %vm371, %v1604, 0
      %v1650 = vsel %vm371, %v1605, 0
      %v1653 = vsel %vm371, %v1606, 0
      %v1656 = vsel %vm420, %v1558, 0
      %1658 = vmatprep.subr.bf16.mxu0 0
      %1659 = vmatpush1.bf16.msra.mxu0 %v1656
      %1660 = vmatprep.subr.bf16.mxu0 0
      %1661 = vmatpush1.bf16.msra.mxu0 0
      %1662 = vmatprep.subr.bf16.mxu0 0
      %1663 = vmatpush1.bf16.msra.mxu0 0
      %1664 = vmatprep.subr.bf16.mxu0 0
      %1665 = vmatpush1.bf16.msra.mxu0 0
      %1666 = vmatprep.subr.bf16.mxu0 0
      %1667 = vmatpush1.bf16.msra.mxu0 0
      %1668 = vmatprep.subr.bf16.mxu0 0
      %1669 = vmatpush1.bf16.msra.mxu0 0
      %1670 = vmatprep.subr.bf16.mxu0 0
      %1671 = vmatpush1.bf16.msra.mxu0 0
      %1672 = vmatprep.subr.bf16.mxu0 0
      %1673 = vmatpush1.bf16.msra.mxu0 0
      %1674 = vmatprep.subr.bf16.mxu0 0
      %1675 = vmatpush1.bf16.msra.mxu0 0
      %1676 = vmatprep.subr.bf16.mxu0 0
      %1677 = vmatpush1.bf16.msra.mxu0 0
      %1678 = vmatprep.subr.bf16.mxu0 0
      %1679 = vmatpush1.bf16.msra.mxu0 0
      %1680 = vmatprep.subr.bf16.mxu0 0
      %1681 = vmatpush1.bf16.msra.mxu0 0
      %1682 = vmatprep.subr.bf16.mxu0 0
      %1683 = vmatpush1.bf16.msra.mxu0 0
      %1684 = vmatprep.subr.bf16.mxu0 0
      %1685 = vmatpush1.bf16.msra.mxu0 0
      %1686 = vmatprep.subr.bf16.mxu0 0
      %1687 = vmatpush1.bf16.msra.mxu0 0
      %1688 = vmatprep.subr.bf16.mxu0 0
      %1689 = vmatpush1.bf16.msra.mxu0 0
      %1690 = vmatprep.mubr.bf16.mxu0 0
      %1691 = vmatmul.mubr.bf16.gmra.mrb[0].mxu0 %v1608
      %v1692 = vpop.f32.mrb[0].mxu0
      %v1693 = vadd.f32 0.0, %v1692
      %v1694 = vpop.f32.mrb[0].mxu0
      %v1695 = vpop.f32.mrb[0].mxu0
      %v1696 = vadd.f32 0.0, %v1695
      %v1697 = vpop.f32.mrb[0].mxu0
      %1698 = vmatprep.mubr.bf16.mxu0 0
      %1699 = vmatmul.mubr.bf16.gmra.mrb[0].mxu0 %v1611
      %v1700 = vpop.f32.mrb[0].mxu0
      %v1701 = vadd.f32 0.0, %v1700
      %v1702 = vpop.f32.mrb[0].mxu0
      %v1703 = vpop.f32.mrb[0].mxu0
      %v1704 = vadd.f32 0.0, %v1703
      %v1705 = vpop.f32.mrb[0].mxu0
      %1706 = vmatprep.mubr.bf16.mxu0 0
      %1707 = vmatmul.mubr.bf16.gmra.mrb[0].mxu0 %v1614
      %v1708 = vpop.f32.mrb[0].mxu0
      %v1709 = vadd.f32 0.0, %v1708
      %v1710 = vpop.f32.mrb[0].mxu0
      %v1711 = vpop.f32.mrb[0].mxu0
      %v1712 = vadd.f32 0.0, %v1711
      %v1713 = vpop.f32.mrb[0].mxu0
      %1714 = vmatprep.mubr.bf16.mxu0 0
      %1715 = vmatmul.mubr.bf16.gmra.mrb[0].mxu0 %v1617
      %v1716 = vpop.f32.mrb[0].mxu0
      %v1717 = vadd.f32 0.0, %v1716
      %v1718 = vpop.f32.mrb[0].mxu0
      %v1719 = vpop.f32.mrb[0].mxu0
      %v1720 = vadd.f32 0.0, %v1719
      %v1721 = vpop.f32.mrb[0].mxu0
      %1722 = vmatprep.mubr.bf16.mxu0 0
      %1723 = vmatmul.mubr.bf16.gmra.mrb[0].mxu0 %v1620
      %v1724 = vpop.f32.mrb[0].mxu0
      %v1725 = vadd.f32 0.0, %v1724
      %v1726 = vpop.f32.mrb[0].mxu0
      %v1727 = vpop.f32.mrb[0].mxu0
      %v1728 = vadd.f32 0.0, %v1727
      %v1729 = vpop.f32.mrb[0].mxu0
      %1730 = vmatprep.mubr.bf16.mxu0 0
      %1731 = vmatmul.mubr.bf16.gmra.mrb[0].mxu0 %v1623
      %v1732 = vpop.f32.mrb[0].mxu0
      %v1733 = vadd.f32 0.0, %v1732
      %v1734 = vpop.f32.mrb[0].mxu0
      %v1735 = vpop.f32.mrb[0].mxu0
      %v1736 = vadd.f32 0.0, %v1735
      %v1737 = vpop.f32.mrb[0].mxu0
      %1738 = vmatprep.mubr.bf16.mxu0 0
      %1739 = vmatmul.mubr.bf16.gmra.mrb[0].mxu0 %v1626
      %v1740 = vpop.f32.mrb[0].mxu0
      %v1741 = vadd.f32 0.0, %v1740
      %v1742 = vpop.f32.mrb[0].mxu0
      %v1743 = vpop.f32.mrb[0].mxu0
      %v1744 = vadd.f32 0.0, %v1743
      %v1745 = vpop.f32.mrb[0].mxu0
      %1746 = vmatprep.mubr.bf16.mxu0 0
      %1747 = vmatmul.mubr.bf16.gmra.mrb[0].mxu0 %v1629
      %v1748 = vpop.f32.mrb[0].mxu0
      %v1749 = vadd.f32 0.0, %v1748
      %v1750 = vpop.f32.mrb[0].mxu0
      %v1751 = vpop.f32.mrb[0].mxu0
      %v1752 = vadd.f32 0.0, %v1751
      %v1753 = vpop.f32.mrb[0].mxu0
      %1754 = vmatprep.mubr.bf16.mxu0 0
      %1755 = vmatmul.mubr.bf16.gmra.mrb[0].mxu0 %v1632
      %v1756 = vpop.f32.mrb[0].mxu0
      %v1757 = vadd.f32 0.0, %v1756
      %v1758 = vpop.f32.mrb[0].mxu0
      %v1759 = vpop.f32.mrb[0].mxu0
      %v1760 = vadd.f32 0.0, %v1759
      %v1761 = vpop.f32.mrb[0].mxu0
      %1762 = vmatprep.mubr.bf16.mxu0 0
      %1763 = vmatmul.mubr.bf16.gmra.mrb[0].mxu0 %v1635
      %v1764 = vpop.f32.mrb[0].mxu0
      %v1765 = vadd.f32 0.0, %v1764
      %v1766 = vpop.f32.mrb[0].mxu0
      %v1767 = vpop.f32.mrb[0].mxu0
      %v1768 = vadd.f32 0.0, %v1767
      %v1769 = vpop.f32.mrb[0].mxu0
      %1770 = vmatprep.mubr.bf16.mxu0 0
      %1771 = vmatmul.mubr.bf16.gmra.mrb[0].mxu0 %v1638
      %v1772 = vpop.f32.mrb[0].mxu0
      %v1773 = vadd.f32 0.0, %v1772
      %v1774 = vpop.f32.mrb[0].mxu0
      %v1775 = vpop.f32.mrb[0].mxu0
      %v1776 = vadd.f32 0.0, %v1775
      %v1777 = vpop.f32.mrb[0].mxu0
      %1778 = vmatprep.mubr.bf16.mxu0 0
      %1779 = vmatmul.mubr.bf16.gmra.mrb[0].mxu0 %v1641
      %v1780 = vpop.f32.mrb[0].mxu0
      %v1781 = vadd.f32 0.0, %v1780
      %v1782 = vpop.f32.mrb[0].mxu0
      %v1783 = vpop.f32.mrb[0].mxu0
      %v1784 = vadd.f32 0.0, %v1783
      %v1785 = vpop.f32.mrb[0].mxu0
      %1786 = vmatprep.mubr.bf16.mxu0 0
      %1787 = vmatmul.mubr.bf16.gmra.mrb[0].mxu0 %v1644
      %v1788 = vpop.f32.mrb[0].mxu0
      %v1789 = vadd.f32 0.0, %v1788
      %v1790 = vpop.f32.mrb[0].mxu0
      %v1791 = vpop.f32.mrb[0].mxu0
      %v1792 = vadd.f32 0.0, %v1791
      %v1793 = vpop.f32.mrb[0].mxu0
      %1794 = vmatprep.mubr.bf16.mxu0 0
      %1795 = vmatmul.mubr.bf16.gmra.mrb[0].mxu0 %v1647
      %v1796 = vpop.f32.mrb[0].mxu0
      %v1797 = vadd.f32 0.0, %v1796
      %v1798 = vpop.f32.mrb[0].mxu0
      %v1799 = vpop.f32.mrb[0].mxu0
      %v1800 = vadd.f32 0.0, %v1799
      %v1801 = vpop.f32.mrb[0].mxu0
      %1802 = vmatprep.mubr.bf16.mxu0 0
      %1803 = vmatmul.mubr.bf16.gmra.mrb[0].mxu0 %v1650
      %v1804 = vpop.f32.mrb[0].mxu0
      %v1805 = vadd.f32 0.0, %v1804
      %v1806 = vpop.f32.mrb[0].mxu0
      %v1807 = vpop.f32.mrb[0].mxu0
      %v1808 = vadd.f32 0.0, %v1807
      %v1809 = vpop.f32.mrb[0].mxu0
      %1810 = vmatprep.mubr.bf16.mxu0 0
      %1811 = vmatmul.mubr.bf16.gmra.mrb[0].mxu0 %v1653
      %v1812 = vpop.f32.mrb[0].mxu0
      %v1813 = vadd.f32 0.0, %v1812
      %v1814 = vpop.f32.mrb[0].mxu0
      %v1815 = vpop.f32.mrb[0].mxu0
      %v1816 = vadd.f32 0.0, %v1815
      %v1817 = vpop.f32.mrb[0].mxu0
      %1818 = vdwg.mxu0
      %v1819 = vadd.f32 %v1525, %v1693
      %v1820 = vadd.f32 %v1526, %v1696
      %v1821 = vadd.f32 %v1527, %v1701
      %v1822 = vadd.f32 %v1528, %v1704
      %v1823 = vadd.f32 %v1529, %v1709
      %v1824 = vadd.f32 %v1530, %v1712
      %v1825 = vadd.f32 %v1531, %v1717
      %v1826 = vadd.f32 %v1532, %v1720
      %v1827 = vadd.f32 %v1533, %v1725
      %v1828 = vadd.f32 %v1534, %v1728
      %v1829 = vadd.f32 %v1535, %v1733
      %v1830 = vadd.f32 %v1536, %v1736
      %v1831 = vadd.f32 %v1537, %v1741
      %v1832 = vadd.f32 %v1538, %v1744
      %v1833 = vadd.f32 %v1539, %v1749
      %v1834 = vadd.f32 %v1540, %v1752
      %v1835 = vadd.f32 %v1541, %v1757
      %v1836 = vadd.f32 %v1542, %v1760
      %v1837 = vadd.f32 %v1543, %v1765
      %v1838 = vadd.f32 %v1544, %v1768
      %v1839 = vadd.f32 %v1545, %v1773
      %v1840 = vadd.f32 %v1546, %v1776
      %v1841 = vadd.f32 %v1547, %v1781
      %v1842 = vadd.f32 %v1548, %v1784
      %v1843 = vadd.f32 %v1549, %v1789
      %v1844 = vadd.f32 %v1550, %v1792
      %v1845 = vadd.f32 %v1551, %v1797
      %v1846 = vadd.f32 %v1552, %v1800
      %v1847 = vadd.f32 %v1553, %v1805
      %v1848 = vadd.f32 %v1554, %v1808
      %v1849 = vadd.f32 %v1555, %v1813
      %v1850 = vadd.f32 %v1556, %v1816
      %1851 = vst [vmem:[%s170] sm:$0xff] %v1819
      %1852 = vst [vmem:[%s170 + $0x8] sm:$0xff] %v1820
      %1853 = vst [vmem:[%s170 + $0x10] sm:$0xff] %v1821
      %1854 = vst [vmem:[%s170 + $0x18] sm:$0xff] %v1822
      %1855 = vst [vmem:[%s170 + $0x20] sm:$0xff] %v1823
      %1856 = vst [vmem:[%s170 + $0x28] sm:$0xff] %v1824
      %1857 = vst [vmem:[%s170 + $0x30] sm:$0xff] %v1825
      %1858 = vst [vmem:[%s170 + $0x38] sm:$0xff] %v1826
      %1859 = vst [vmem:[%s170 + $0x40] sm:$0xff] %v1827
      %1860 = vst [vmem:[%s170 + $0x48] sm:$0xff] %v1828
      %1861 = vst [vmem:[%s170 + $0x50] sm:$0xff] %v1829
      %1862 = vst [vmem:[%s170 + $0x58] sm:$0xff] %v1830
      %1863 = vst [vmem:[%s170 + $0x60] sm:$0xff] %v1831
      %1864 = vst [vmem:[%s170 + $0x68] sm:$0xff] %v1832
      %1865 = vst [vmem:[%s170 + $0x70] sm:$0xff] %v1833
      %1866 = vst [vmem:[%s170 + $0x78] sm:$0xff] %v1834
      %1867 = vst [vmem:[%s170 + $0x80] sm:$0xff] %v1835
      %1868 = vst [vmem:[%s170 + $0x88] sm:$0xff] %v1836
      %1869 = vst [vmem:[%s170 + $0x90] sm:$0xff] %v1837
      %1870 = vst [vmem:[%s170 + $0x98] sm:$0xff] %v1838
      %1871 = vst [vmem:[%s170 + $0xa0] sm:$0xff] %v1839
      %1872 = vst [vmem:[%s170 + $0xa8] sm:$0xff] %v1840
      %1873 = vst [vmem:[%s170 + $0xb0] sm:$0xff] %v1841
      %1874 = vst [vmem:[%s170 + $0xb8] sm:$0xff] %v1842
      %1875 = vst [vmem:[%s170 + $0xc0] sm:$0xff] %v1843
      %1876 = vst [vmem:[%s170 + $0xc8] sm:$0xff] %v1844
      %1877 = vst [vmem:[%s170 + $0xd0] sm:$0xff] %v1845
      %1878 = vst [vmem:[%s170 + $0xd8] sm:$0xff] %v1846
      %1879 = vst [vmem:[%s170 + $0xe0] sm:$0xff] %v1847
      %1880 = vst [vmem:[%s170 + $0xe8] sm:$0xff] %v1848
      %1881 = vst [vmem:[%s170 + $0xf0] sm:$0xff] %v1849
      %1882 = vst [vmem:[%s170 + $0xf8] sm:$0xff] %v1850
      %v1883 = vld [vmem:[%s170] sm:$0xff]
      %v1884 = vld [vmem:[%s170 + $0x8] sm:$0xff]
      %v1885 = vld [vmem:[%s170 + $0x10] sm:$0xff]
      %v1886 = vld [vmem:[%s170 + $0x18] sm:$0xff]
      %v1887 = vld [vmem:[%s170 + $0x20] sm:$0xff]
      %v1888 = vld [vmem:[%s170 + $0x28] sm:$0xff]
      %v1889 = vld [vmem:[%s170 + $0x30] sm:$0xff]
      %v1890 = vld [vmem:[%s170 + $0x38] sm:$0xff]
      %v1891 = vld [vmem:[%s170 + $0x40] sm:$0xff]
      %v1892 = vld [vmem:[%s170 + $0x48] sm:$0xff]
      %v1893 = vld [vmem:[%s170 + $0x50] sm:$0xff]
      %v1894 = vld [vmem:[%s170 + $0x58] sm:$0xff]
      %v1895 = vld [vmem:[%s170 + $0x60] sm:$0xff]
      %v1896 = vld [vmem:[%s170 + $0x68] sm:$0xff]
      %v1897 = vld [vmem:[%s170 + $0x70] sm:$0xff]
      %v1898 = vld [vmem:[%s170 + $0x78] sm:$0xff]
      %v1899 = vld [vmem:[%s170 + $0x80] sm:$0xff]
      %v1900 = vld [vmem:[%s170 + $0x88] sm:$0xff]
      %v1901 = vld [vmem:[%s170 + $0x90] sm:$0xff]
      %v1902 = vld [vmem:[%s170 + $0x98] sm:$0xff]
      %v1903 = vld [vmem:[%s170 + $0xa0] sm:$0xff]
      %v1904 = vld [vmem:[%s170 + $0xa8] sm:$0xff]
      %v1905 = vld [vmem:[%s170 + $0xb0] sm:$0xff]
      %v1906 = vld [vmem:[%s170 + $0xb8] sm:$0xff]
      %v1907 = vld [vmem:[%s170 + $0xc0] sm:$0xff]
      %v1908 = vld [vmem:[%s170 + $0xc8] sm:$0xff]
      %v1909 = vld [vmem:[%s170 + $0xd0] sm:$0xff]
      %v1910 = vld [vmem:[%s170 + $0xd8] sm:$0xff]
      %v1911 = vld [vmem:[%s170 + $0xe0] sm:$0xff]
      %v1912 = vld [vmem:[%s170 + $0xe8] sm:$0xff]
      %v1913 = vld [vmem:[%s170 + $0xf0] sm:$0xff]
      %v1914 = vld [vmem:[%s170 + $0xf8] sm:$0xff]
      %s1915 = scalar_lea.vmem %s1, 6
      %v1916 = vld [vmem:[%s1915] sm:$0x3]
      %v1919 = vunpack.c.l.b16 %v220
      %v1920 = vunpack.c.l.b16 %v221
      %v1921 = vpack.c.b16 %v1920, %v1919
      %v1923 = vsel %vm371, %v1921, 0
      %v1926 = vsel %vm420, %v1916, 0
      %1928 = vmatprep.subr.bf16.mxu0 0
      %1929 = vmatpush1.bf16.msra.mxu0 %v1926
      %1930 = vmatprep.subr.bf16.mxu0 0
      %1931 = vmatpush1.bf16.msra.mxu0 0
      %1932 = vmatprep.subr.bf16.mxu0 0
      %1933 = vmatpush1.bf16.msra.mxu0 0
      %1934 = vmatprep.subr.bf16.mxu0 0
      %1935 = vmatpush1.bf16.msra.mxu0 0
      %1936 = vmatprep.subr.bf16.mxu0 0
      %1937 = vmatpush1.bf16.msra.mxu0 0
      %1938 = vmatprep.subr.bf16.mxu0 0
      %1939 = vmatpush1.bf16.msra.mxu0 0
      %1940 = vmatprep.subr.bf16.mxu0 0
      %1941 = vmatpush1.bf16.msra.mxu0 0
      %1942 = vmatprep.subr.bf16.mxu0 0
      %1943 = vmatpush1.bf16.msra.mxu0 0
      %1944 = vmatprep.subr.bf16.mxu0 0
      %1945 = vmatpush1.bf16.msra.mxu0 0
      %1946 = vmatprep.subr.bf16.mxu0 0
      %1947 = vmatpush1.bf16.msra.mxu0 0
      %1948 = vmatprep.subr.bf16.mxu0 0
      %1949 = vmatpush1.bf16.msra.mxu0 0
      %1950 = vmatprep.subr.bf16.mxu0 0
      %1951 = vmatpush1.bf16.msra.mxu0 0
      %1952 = vmatprep.subr.bf16.mxu0 0
      %1953 = vmatpush1.bf16.msra.mxu0 0
      %1954 = vmatprep.subr.bf16.mxu0 0
      %1955 = vmatpush1.bf16.msra.mxu0 0
      %1956 = vmatprep.subr.bf16.mxu0 0
      %1957 = vmatpush1.bf16.msra.mxu0 0
      %1958 = vmatprep.subr.bf16.mxu0 0
      %1959 = vmatpush1.bf16.msra.mxu0 0
      %1960 = vmatprep.mubr.bf16.mxu0 0
      %1961 = vmatmul.mubr.bf16.gmra.mrb[0].mxu0 %v376
      %v1962 = vpop.f32.mrb[0].mxu0
      %v1963 = vadd.f32 0.0, %v1962
      %v1964 = vpop.f32.mrb[0].mxu0
      %v1965 = vpop.f32.mrb[0].mxu0
      %v1966 = vadd.f32 0.0, %v1965
      %v1967 = vpop.f32.mrb[0].mxu0
      %1968 = vmatprep.mubr.bf16.mxu0 0
      %1969 = vmatmul.mubr.bf16.gmra.mrb[0].mxu0 %v379
      %v1970 = vpop.f32.mrb[0].mxu0
      %v1971 = vadd.f32 0.0, %v1970
      %v1972 = vpop.f32.mrb[0].mxu0
      %v1973 = vpop.f32.mrb[0].mxu0
      %v1974 = vadd.f32 0.0, %v1973
      %v1975 = vpop.f32.mrb[0].mxu0
      %1976 = vmatprep.mubr.bf16.mxu0 0
      %1977 = vmatmul.mubr.bf16.gmra.mrb[0].mxu0 %v382
      %v1978 = vpop.f32.mrb[0].mxu0
      %v1979 = vadd.f32 0.0, %v1978
      %v1980 = vpop.f32.mrb[0].mxu0
      %v1981 = vpop.f32.mrb[0].mxu0
      %v1982 = vadd.f32 0.0, %v1981
      %v1983 = vpop.f32.mrb[0].mxu0
      %1984 = vmatprep.mubr.bf16.mxu0 0
      %1985 = vmatmul.mubr.bf16.gmra.mrb[0].mxu0 %v385
      %v1986 = vpop.f32.mrb[0].mxu0
      %v1987 = vadd.f32 0.0, %v1986
      %v1988 = vpop.f32.mrb[0].mxu0
      %v1989 = vpop.f32.mrb[0].mxu0
      %v1990 = vadd.f32 0.0, %v1989
      %v1991 = vpop.f32.mrb[0].mxu0
      %1992 = vmatprep.mubr.bf16.mxu0 0
      %1993 = vmatmul.mubr.bf16.gmra.mrb[0].mxu0 %v388
      %v1994 = vpop.f32.mrb[0].mxu0
      %v1995 = vadd.f32 0.0, %v1994
      %v1996 = vpop.f32.mrb[0].mxu0
      %v1997 = vpop.f32.mrb[0].mxu0
      %v1998 = vadd.f32 0.0, %v1997
      %v1999 = vpop.f32.mrb[0].mxu0
      %2000 = vmatprep.mubr.bf16.mxu0 0
      %2001 = vmatmul.mubr.bf16.gmra.mrb[0].mxu0 %v391
      %v2002 = vpop.f32.mrb[0].mxu0
      %v2003 = vadd.f32 0.0, %v2002
      %v2004 = vpop.f32.mrb[0].mxu0
      %v2005 = vpop.f32.mrb[0].mxu0
      %v2006 = vadd.f32 0.0, %v2005
      %v2007 = vpop.f32.mrb[0].mxu0
      %2008 = vmatprep.mubr.bf16.mxu0 0
      %2009 = vmatmul.mubr.bf16.gmra.mrb[0].mxu0 %v394
      %v2010 = vpop.f32.mrb[0].mxu0
      %v2011 = vadd.f32 0.0, %v2010
      %v2012 = vpop.f32.mrb[0].mxu0
      %v2013 = vpop.f32.mrb[0].mxu0
      %v2014 = vadd.f32 0.0, %v2013
      %v2015 = vpop.f32.mrb[0].mxu0
      %2016 = vmatprep.mubr.bf16.mxu0 0
      %2017 = vmatmul.mubr.bf16.gmra.mrb[0].mxu0 %v397
      %v2018 = vpop.f32.mrb[0].mxu0
      %v2019 = vadd.f32 0.0, %v2018
      %v2020 = vpop.f32.mrb[0].mxu0
      %v2021 = vpop.f32.mrb[0].mxu0
      %v2022 = vadd.f32 0.0, %v2021
      %v2023 = vpop.f32.mrb[0].mxu0
      %2024 = vmatprep.mubr.bf16.mxu0 0
      %2025 = vmatmul.mubr.bf16.gmra.mrb[0].mxu0 %v400
      %v2026 = vpop.f32.mrb[0].mxu0
      %v2027 = vadd.f32 0.0, %v2026
      %v2028 = vpop.f32.mrb[0].mxu0
      %v2029 = vpop.f32.mrb[0].mxu0
      %v2030 = vadd.f32 0.0, %v2029
      %v2031 = vpop.f32.mrb[0].mxu0
      %2032 = vmatprep.mubr.bf16.mxu0 0
      %2033 = vmatmul.mubr.bf16.gmra.mrb[0].mxu0 %v403
      %v2034 = vpop.f32.mrb[0].mxu0
      %v2035 = vadd.f32 0.0, %v2034
      %v2036 = vpop.f32.mrb[0].mxu0
      %v2037 = vpop.f32.mrb[0].mxu0
      %v2038 = vadd.f32 0.0, %v2037
      %v2039 = vpop.f32.mrb[0].mxu0
      %2040 = vmatprep.mubr.bf16.mxu0 0
      %2041 = vmatmul.mubr.bf16.gmra.mrb[0].mxu0 %v406
      %v2042 = vpop.f32.mrb[0].mxu0
      %v2043 = vadd.f32 0.0, %v2042
      %v2044 = vpop.f32.mrb[0].mxu0
      %v2045 = vpop.f32.mrb[0].mxu0
      %v2046 = vadd.f32 0.0, %v2045
      %v2047 = vpop.f32.mrb[0].mxu0
      %2048 = vmatprep.mubr.bf16.mxu0 0
      %2049 = vmatmul.mubr.bf16.gmra.mrb[0].mxu0 %v409
      %v2050 = vpop.f32.mrb[0].mxu0
      %v2051 = vadd.f32 0.0, %v2050
      %v2052 = vpop.f32.mrb[0].mxu0
      %v2053 = vpop.f32.mrb[0].mxu0
      %v2054 = vadd.f32 0.0, %v2053
      %v2055 = vpop.f32.mrb[0].mxu0
      %2056 = vmatprep.mubr.bf16.mxu0 0
      %2057 = vmatmul.mubr.bf16.gmra.mrb[0].mxu0 %v412
      %v2058 = vpop.f32.mrb[0].mxu0
      %v2059 = vadd.f32 0.0, %v2058
      %v2060 = vpop.f32.mrb[0].mxu0
      %v2061 = vpop.f32.mrb[0].mxu0
      %v2062 = vadd.f32 0.0, %v2061
      %v2063 = vpop.f32.mrb[0].mxu0
      %2064 = vmatprep.mubr.bf16.mxu0 0
      %2065 = vmatmul.mubr.bf16.gmra.mrb[0].mxu0 %v415
      %v2066 = vpop.f32.mrb[0].mxu0
      %v2067 = vadd.f32 0.0, %v2066
      %v2068 = vpop.f32.mrb[0].mxu0
      %v2069 = vpop.f32.mrb[0].mxu0
      %v2070 = vadd.f32 0.0, %v2069
      %v2071 = vpop.f32.mrb[0].mxu0
      %2072 = vmatprep.mubr.bf16.mxu0 0
      %2073 = vmatmul.mubr.bf16.gmra.mrb[0].mxu0 %v418
      %v2074 = vpop.f32.mrb[0].mxu0
      %v2075 = vadd.f32 0.0, %v2074
      %v2076 = vpop.f32.mrb[0].mxu0
      %v2077 = vpop.f32.mrb[0].mxu0
      %v2078 = vadd.f32 0.0, %v2077
      %v2079 = vpop.f32.mrb[0].mxu0
      %2080 = vmatprep.mubr.bf16.mxu0 0
      %2081 = vmatmul.mubr.bf16.gmra.mrb[0].mxu0 %v1923
      %v2082 = vpop.f32.mrb[0].mxu0
      %v2083 = vadd.f32 0.0, %v2082
      %v2084 = vpop.f32.mrb[0].mxu0
      %v2085 = vpop.f32.mrb[0].mxu0
      %v2086 = vadd.f32 0.0, %v2085
      %v2087 = vpop.f32.mrb[0].mxu0
      %2088 = vdwg.mxu0
      %v2089 = vadd.f32 %v1883, %v1963
      %v2090 = vadd.f32 %v1884, %v1966
      %v2091 = vadd.f32 %v1885, %v1971
      %v2092 = vadd.f32 %v1886, %v1974
      %v2093 = vadd.f32 %v1887, %v1979
      %v2094 = vadd.f32 %v1888, %v1982
      %v2095 = vadd.f32 %v1889, %v1987
      %v2096 = vadd.f32 %v1890, %v1990
      %v2097 = vadd.f32 %v1891, %v1995
      %v2098 = vadd.f32 %v1892, %v1998
      %v2099 = vadd.f32 %v1893, %v2003
      %v2100 = vadd.f32 %v1894, %v2006
      %v2101 = vadd.f32 %v1895, %v2011
      %v2102 = vadd.f32 %v1896, %v2014
      %v2103 = vadd.f32 %v1897, %v2019
      %v2104 = vadd.f32 %v1898, %v2022
      %v2105 = vadd.f32 %v1899, %v2027
      %v2106 = vadd.f32 %v1900, %v2030
      %v2107 = vadd.f32 %v1901, %v2035
      %v2108 = vadd.f32 %v1902, %v2038
      %v2109 = vadd.f32 %v1903, %v2043
      %v2110 = vadd.f32 %v1904, %v2046
      %v2111 = vadd.f32 %v1905, %v2051
      %v2112 = vadd.f32 %v1906, %v2054
      %v2113 = vadd.f32 %v1907, %v2059
      %v2114 = vadd.f32 %v1908, %v2062
      %v2115 = vadd.f32 %v1909, %v2067
      %v2116 = vadd.f32 %v1910, %v2070
      %v2117 = vadd.f32 %v1911, %v2075
      %v2118 = vadd.f32 %v1912, %v2078
      %v2119 = vadd.f32 %v1913, %v2083
      %v2120 = vadd.f32 %v1914, %v2086
      %2121 = vst [vmem:[%s170] sm:$0xff] %v2089
      %2122 = vst [vmem:[%s170 + $0x8] sm:$0xff] %v2090
      %2123 = vst [vmem:[%s170 + $0x10] sm:$0xff] %v2091
      %2124 = vst [vmem:[%s170 + $0x18] sm:$0xff] %v2092
      %2125 = vst [vmem:[%s170 + $0x20] sm:$0xff] %v2093
      %2126 = vst [vmem:[%s170 + $0x28] sm:$0xff] %v2094
      %2127 = vst [vmem:[%s170 + $0x30] sm:$0xff] %v2095
      %2128 = vst [vmem:[%s170 + $0x38] sm:$0xff] %v2096
      %2129 = vst [vmem:[%s170 + $0x40] sm:$0xff] %v2097
      %2130 = vst [vmem:[%s170 + $0x48] sm:$0xff] %v2098
      %2131 = vst [vmem:[%s170 + $0x50] sm:$0xff] %v2099
      %2132 = vst [vmem:[%s170 + $0x58] sm:$0xff] %v2100
      %2133 = vst [vmem:[%s170 + $0x60] sm:$0xff] %v2101
      %2134 = vst [vmem:[%s170 + $0x68] sm:$0xff] %v2102
      %2135 = vst [vmem:[%s170 + $0x70] sm:$0xff] %v2103
      %2136 = vst [vmem:[%s170 + $0x78] sm:$0xff] %v2104
      %2137 = vst [vmem:[%s170 + $0x80] sm:$0xff] %v2105
      %2138 = vst [vmem:[%s170 + $0x88] sm:$0xff] %v2106
      %2139 = vst [vmem:[%s170 + $0x90] sm:$0xff] %v2107
      %2140 = vst [vmem:[%s170 + $0x98] sm:$0xff] %v2108
      %2141 = vst [vmem:[%s170 + $0xa0] sm:$0xff] %v2109
      %2142 = vst [vmem:[%s170 + $0xa8] sm:$0xff] %v2110
      %2143 = vst [vmem:[%s170 + $0xb0] sm:$0xff] %v2111
      %2144 = vst [vmem:[%s170 + $0xb8] sm:$0xff] %v2112
      %2145 = vst [vmem:[%s170 + $0xc0] sm:$0xff] %v2113
      %2146 = vst [vmem:[%s170 + $0xc8] sm:$0xff] %v2114
      %2147 = vst [vmem:[%s170 + $0xd0] sm:$0xff] %v2115
      %2148 = vst [vmem:[%s170 + $0xd8] sm:$0xff] %v2116
      %2149 = vst [vmem:[%s170 + $0xe0] sm:$0xff] %v2117
      %2150 = vst [vmem:[%s170 + $0xe8] sm:$0xff] %v2118
      %2151 = vst [vmem:[%s170 + $0xf0] sm:$0xff] %v2119
      %2152 = vst [vmem:[%s170 + $0xf8] sm:$0xff] %v2120
      %v2154 = vshrl.u32 %v220, 16
      %v2156 = vrot.slane %v2154, 4
      %v2157 = vshll.u32 %v220, 16
      %v2159 = vrot.slane %v2157, 5
      %v2160 = vor.u32 %v2156, %v2159
      %v2161 = vrot.slane %v2160, 4
      %v2163 = vshll.u32 %v221, 16
      %v2165 = vrot.slane %v2163, 5
      %v2166 = vsel %vm651, %v2161, %v2165
      %v2167 = vshrl.u32 %v221, 16
      %v2169 = vrot.slane %v2167, 4
      %v2170 = vor.u32 %v2169, %v2165
      %v2171 = vrot.slane %v2170, 4
      %v2173 = vshll.u32 %v222, 16
      %v2175 = vrot.slane %v2173, 5
      %v2176 = vsel %vm651, %v2171, %v2175
      %v2177 = vld [vmem:[%s170] sm:$0xff]
      %v2178 = vld [vmem:[%s170 + $0x8] sm:$0xff]
      %v2179 = vld [vmem:[%s170 + $0x10] sm:$0xff]
      %v2180 = vld [vmem:[%s170 + $0x18] sm:$0xff]
      %v2181 = vld [vmem:[%s170 + $0x20] sm:$0xff]
      %v2182 = vld [vmem:[%s170 + $0x28] sm:$0xff]
      %v2183 = vld [vmem:[%s170 + $0x30] sm:$0xff]
      %v2184 = vld [vmem:[%s170 + $0x38] sm:$0xff]
      %v2185 = vld [vmem:[%s170 + $0x40] sm:$0xff]
      %v2186 = vld [vmem:[%s170 + $0x48] sm:$0xff]
      %v2187 = vld [vmem:[%s170 + $0x50] sm:$0xff]
      %v2188 = vld [vmem:[%s170 + $0x58] sm:$0xff]
      %v2189 = vld [vmem:[%s170 + $0x60] sm:$0xff]
      %v2190 = vld [vmem:[%s170 + $0x68] sm:$0xff]
      %v2191 = vld [vmem:[%s170 + $0x70] sm:$0xff]
      %v2192 = vld [vmem:[%s170 + $0x78] sm:$0xff]
      %v2193 = vld [vmem:[%s170 + $0x80] sm:$0xff]
      %v2194 = vld [vmem:[%s170 + $0x88] sm:$0xff]
      %v2195 = vld [vmem:[%s170 + $0x90] sm:$0xff]
      %v2196 = vld [vmem:[%s170 + $0x98] sm:$0xff]
      %v2197 = vld [vmem:[%s170 + $0xa0] sm:$0xff]
      %v2198 = vld [vmem:[%s170 + $0xa8] sm:$0xff]
      %v2199 = vld [vmem:[%s170 + $0xb0] sm:$0xff]
      %v2200 = vld [vmem:[%s170 + $0xb8] sm:$0xff]
      %v2201 = vld [vmem:[%s170 + $0xc0] sm:$0xff]
      %v2202 = vld [vmem:[%s170 + $0xc8] sm:$0xff]
      %v2203 = vld [vmem:[%s170 + $0xd0] sm:$0xff]
      %v2204 = vld [vmem:[%s170 + $0xd8] sm:$0xff]
      %v2205 = vld [vmem:[%s170 + $0xe0] sm:$0xff]
      %v2206 = vld [vmem:[%s170 + $0xe8] sm:$0xff]
      %v2207 = vld [vmem:[%s170 + $0xf0] sm:$0xff]
      %v2208 = vld [vmem:[%s170 + $0xf8] sm:$0xff]
      %s2209 = scalar_lea.vmem %s1, 8
      %v2210 = vld [vmem:[%s2209] sm:$0x3]
      %v2211 = vunpack.c.l.b16 %v2166
      %v2212 = vunpack.c.l.b16 %v2176
      %v2213 = vpack.c.b16 %v2212, %v2211
      %v2215 = vsel %vm371, %v2213, 0
      %v2218 = vsel %vm420, %v2210, 0
      %2220 = vmatprep.subr.bf16.mxu0 0
      %2221 = vmatpush1.bf16.msra.mxu0 %v2218
      %2222 = vmatprep.subr.bf16.mxu0 0
      %2223 = vmatpush1.bf16.msra.mxu0 0
      %2224 = vmatprep.subr.bf16.mxu0 0
      %2225 = vmatpush1.bf16.msra.mxu0 0
      %2226 = vmatprep.subr.bf16.mxu0 0
      %2227 = vmatpush1.bf16.msra.mxu0 0
      %2228 = vmatprep.subr.bf16.mxu0 0
      %2229 = vmatpush1.bf16.msra.mxu0 0
      %2230 = vmatprep.subr.bf16.mxu0 0
      %2231 = vmatpush1.bf16.msra.mxu0 0
      %2232 = vmatprep.subr.bf16.mxu0 0
      %2233 = vmatpush1.bf16.msra.mxu0 0
      %2234 = vmatprep.subr.bf16.mxu0 0
      %2235 = vmatpush1.bf16.msra.mxu0 0
      %2236 = vmatprep.subr.bf16.mxu0 0
      %2237 = vmatpush1.bf16.msra.mxu0 0
      %2238 = vmatprep.subr.bf16.mxu0 0
      %2239 = vmatpush1.bf16.msra.mxu0 0
      %2240 = vmatprep.subr.bf16.mxu0 0
      %2241 = vmatpush1.bf16.msra.mxu0 0
      %2242 = vmatprep.subr.bf16.mxu0 0
      %2243 = vmatpush1.bf16.msra.mxu0 0
      %2244 = vmatprep.subr.bf16.mxu0 0
      %2245 = vmatpush1.bf16.msra.mxu0 0
      %2246 = vmatprep.subr.bf16.mxu0 0
      %2247 = vmatpush1.bf16.msra.mxu0 0
      %2248 = vmatprep.subr.bf16.mxu0 0
      %2249 = vmatpush1.bf16.msra.mxu0 0
      %2250 = vmatprep.subr.bf16.mxu0 0
      %2251 = vmatpush1.bf16.msra.mxu0 0
      %2252 = vmatprep.mubr.bf16.mxu0 0
      %2253 = vmatmul.mubr.bf16.gmra.mrb[0].mxu0 %v1122
      %v2254 = vpop.f32.mrb[0].mxu0
      %v2255 = vadd.f32 0.0, %v2254
      %v2256 = vpop.f32.mrb[0].mxu0
      %v2257 = vpop.f32.mrb[0].mxu0
      %v2258 = vadd.f32 0.0, %v2257
      %v2259 = vpop.f32.mrb[0].mxu0
      %2260 = vmatprep.mubr.bf16.mxu0 0
      %2261 = vmatmul.mubr.bf16.gmra.mrb[0].mxu0 %v1125
      %v2262 = vpop.f32.mrb[0].mxu0
      %v2263 = vadd.f32 0.0, %v2262
      %v2264 = vpop.f32.mrb[0].mxu0
      %v2265 = vpop.f32.mrb[0].mxu0
      %v2266 = vadd.f32 0.0, %v2265
      %v2267 = vpop.f32.mrb[0].mxu0
      %2268 = vmatprep.mubr.bf16.mxu0 0
      %2269 = vmatmul.mubr.bf16.gmra.mrb[0].mxu0 %v1128
      %v2270 = vpop.f32.mrb[0].mxu0
      %v2271 = vadd.f32 0.0, %v2270
      %v2272 = vpop.f32.mrb[0].mxu0
      %v2273 = vpop.f32.mrb[0].mxu0
      %v2274 = vadd.f32 0.0, %v2273
      %v2275 = vpop.f32.mrb[0].mxu0
      %2276 = vmatprep.mubr.bf16.mxu0 0
      %2277 = vmatmul.mubr.bf16.gmra.mrb[0].mxu0 %v1131
      %v2278 = vpop.f32.mrb[0].mxu0
      %v2279 = vadd.f32 0.0, %v2278
      %v2280 = vpop.f32.mrb[0].mxu0
      %v2281 = vpop.f32.mrb[0].mxu0
      %v2282 = vadd.f32 0.0, %v2281
      %v2283 = vpop.f32.mrb[0].mxu0
      %2284 = vmatprep.mubr.bf16.mxu0 0
      %2285 = vmatmul.mubr.bf16.gmra.mrb[0].mxu0 %v1134
      %v2286 = vpop.f32.mrb[0].mxu0
      %v2287 = vadd.f32 0.0, %v2286
      %v2288 = vpop.f32.mrb[0].mxu0
      %v2289 = vpop.f32.mrb[0].mxu0
      %v2290 = vadd.f32 0.0, %v2289
      %v2291 = vpop.f32.mrb[0].mxu0
      %2292 = vmatprep.mubr.bf16.mxu0 0
      %2293 = vmatmul.mubr.bf16.gmra.mrb[0].mxu0 %v1137
      %v2294 = vpop.f32.mrb[0].mxu0
      %v2295 = vadd.f32 0.0, %v2294
      %v2296 = vpop.f32.mrb[0].mxu0
      %v2297 = vpop.f32.mrb[0].mxu0
      %v2298 = vadd.f32 0.0, %v2297
      %v2299 = vpop.f32.mrb[0].mxu0
      %2300 = vmatprep.mubr.bf16.mxu0 0
      %2301 = vmatmul.mubr.bf16.gmra.mrb[0].mxu0 %v1140
      %v2302 = vpop.f32.mrb[0].mxu0
      %v2303 = vadd.f32 0.0, %v2302
      %v2304 = vpop.f32.mrb[0].mxu0
      %v2305 = vpop.f32.mrb[0].mxu0
      %v2306 = vadd.f32 0.0, %v2305
      %v2307 = vpop.f32.mrb[0].mxu0
      %2308 = vmatprep.mubr.bf16.mxu0 0
      %2309 = vmatmul.mubr.bf16.gmra.mrb[0].mxu0 %v1143
      %v2310 = vpop.f32.mrb[0].mxu0
      %v2311 = vadd.f32 0.0, %v2310
      %v2312 = vpop.f32.mrb[0].mxu0
      %v2313 = vpop.f32.mrb[0].mxu0
      %v2314 = vadd.f32 0.0, %v2313
      %v2315 = vpop.f32.mrb[0].mxu0
      %2316 = vmatprep.mubr.bf16.mxu0 0
      %2317 = vmatmul.mubr.bf16.gmra.mrb[0].mxu0 %v1146
      %v2318 = vpop.f32.mrb[0].mxu0
      %v2319 = vadd.f32 0.0, %v2318
      %v2320 = vpop.f32.mrb[0].mxu0
      %v2321 = vpop.f32.mrb[0].mxu0
      %v2322 = vadd.f32 0.0, %v2321
      %v2323 = vpop.f32.mrb[0].mxu0
      %2324 = vmatprep.mubr.bf16.mxu0 0
      %2325 = vmatmul.mubr.bf16.gmra.mrb[0].mxu0 %v1149
      %v2326 = vpop.f32.mrb[0].mxu0
      %v2327 = vadd.f32 0.0, %v2326
      %v2328 = vpop.f32.mrb[0].mxu0
      %v2329 = vpop.f32.mrb[0].mxu0
      %v2330 = vadd.f32 0.0, %v2329
      %v2331 = vpop.f32.mrb[0].mxu0
      %2332 = vmatprep.mubr.bf16.mxu0 0
      %2333 = vmatmul.mubr.bf16.gmra.mrb[0].mxu0 %v1152
      %v2334 = vpop.f32.mrb[0].mxu0
      %v2335 = vadd.f32 0.0, %v2334
      %v2336 = vpop.f32.mrb[0].mxu0
      %v2337 = vpop.f32.mrb[0].mxu0
      %v2338 = vadd.f32 0.0, %v2337
      %v2339 = vpop.f32.mrb[0].mxu0
      %2340 = vmatprep.mubr.bf16.mxu0 0
      %2341 = vmatmul.mubr.bf16.gmra.mrb[0].mxu0 %v1155
      %v2342 = vpop.f32.mrb[0].mxu0
      %v2343 = vadd.f32 0.0, %v2342
      %v2344 = vpop.f32.mrb[0].mxu0
      %v2345 = vpop.f32.mrb[0].mxu0
      %v2346 = vadd.f32 0.0, %v2345
      %v2347 = vpop.f32.mrb[0].mxu0
      %2348 = vmatprep.mubr.bf16.mxu0 0
      %2349 = vmatmul.mubr.bf16.gmra.mrb[0].mxu0 %v1158
      %v2350 = vpop.f32.mrb[0].mxu0
      %v2351 = vadd.f32 0.0, %v2350
      %v2352 = vpop.f32.mrb[0].mxu0
      %v2353 = vpop.f32.mrb[0].mxu0
      %v2354 = vadd.f32 0.0, %v2353
      %v2355 = vpop.f32.mrb[0].mxu0
      %2356 = vmatprep.mubr.bf16.mxu0 0
      %2357 = vmatmul.mubr.bf16.gmra.mrb[0].mxu0 %v1161
      %v2358 = vpop.f32.mrb[0].mxu0
      %v2359 = vadd.f32 0.0, %v2358
      %v2360 = vpop.f32.mrb[0].mxu0
      %v2361 = vpop.f32.mrb[0].mxu0
      %v2362 = vadd.f32 0.0, %v2361
      %v2363 = vpop.f32.mrb[0].mxu0
      %2364 = vmatprep.mubr.bf16.mxu0 0
      %2365 = vmatmul.mubr.bf16.gmra.mrb[0].mxu0 %v1164
      %v2366 = vpop.f32.mrb[0].mxu0
      %v2367 = vadd.f32 0.0, %v2366
      %v2368 = vpop.f32.mrb[0].mxu0
      %v2369 = vpop.f32.mrb[0].mxu0
      %v2370 = vadd.f32 0.0, %v2369
      %v2371 = vpop.f32.mrb[0].mxu0
      %2372 = vmatprep.mubr.bf16.mxu0 0
      %2373 = vmatmul.mubr.bf16.gmra.mrb[0].mxu0 %v2215
      %v2374 = vpop.f32.mrb[0].mxu0
      %v2375 = vadd.f32 0.0, %v2374
      %v2376 = vpop.f32.mrb[0].mxu0
      %v2377 = vpop.f32.mrb[0].mxu0
      %v2378 = vadd.f32 0.0, %v2377
      %v2379 = vpop.f32.mrb[0].mxu0
      %2380 = vdwg.mxu0
      %v2381 = vadd.f32 %v2177, %v2255
      %v2382 = vadd.f32 %v2178, %v2258
      %v2383 = vadd.f32 %v2179, %v2263
      %v2384 = vadd.f32 %v2180, %v2266
      %v2385 = vadd.f32 %v2181, %v2271
      %v2386 = vadd.f32 %v2182, %v2274
      %v2387 = vadd.f32 %v2183, %v2279
      %v2388 = vadd.f32 %v2184, %v2282
      %v2389 = vadd.f32 %v2185, %v2287
      %v2390 = vadd.f32 %v2186, %v2290
      %v2391 = vadd.f32 %v2187, %v2295
      %v2392 = vadd.f32 %v2188, %v2298
      %v2393 = vadd.f32 %v2189, %v2303
      %v2394 = vadd.f32 %v2190, %v2306
      %v2395 = vadd.f32 %v2191, %v2311
      %v2396 = vadd.f32 %v2192, %v2314
      %v2397 = vadd.f32 %v2193, %v2319
      %v2398 = vadd.f32 %v2194, %v2322
      %v2399 = vadd.f32 %v2195, %v2327
      %v2400 = vadd.f32 %v2196, %v2330
      %v2401 = vadd.f32 %v2197, %v2335
      %v2402 = vadd.f32 %v2198, %v2338
      %v2403 = vadd.f32 %v2199, %v2343
      %v2404 = vadd.f32 %v2200, %v2346
      %v2405 = vadd.f32 %v2201, %v2351
      %v2406 = vadd.f32 %v2202, %v2354
      %v2407 = vadd.f32 %v2203, %v2359
      %v2408 = vadd.f32 %v2204, %v2362
      %v2409 = vadd.f32 %v2205, %v2367
      %v2410 = vadd.f32 %v2206, %v2370
      %v2411 = vadd.f32 %v2207, %v2375
      %v2412 = vadd.f32 %v2208, %v2378
      %2413 = vst [vmem:[%s170] sm:$0xff] %v2381
      %2414 = vst [vmem:[%s170 + $0x8] sm:$0xff] %v2382
      %2415 = vst [vmem:[%s170 + $0x10] sm:$0xff] %v2383
      %2416 = vst [vmem:[%s170 + $0x18] sm:$0xff] %v2384
      %2417 = vst [vmem:[%s170 + $0x20] sm:$0xff] %v2385
      %2418 = vst [vmem:[%s170 + $0x28] sm:$0xff] %v2386
      %2419 = vst [vmem:[%s170 + $0x30] sm:$0xff] %v2387
      %2420 = vst [vmem:[%s170 + $0x38] sm:$0xff] %v2388
      %2421 = vst [vmem:[%s170 + $0x40] sm:$0xff] %v2389
      %2422 = vst [vmem:[%s170 + $0x48] sm:$0xff] %v2390
      %2423 = vst [vmem:[%s170 + $0x50] sm:$0xff] %v2391
      %2424 = vst [vmem:[%s170 + $0x58] sm:$0xff] %v2392
      %2425 = vst [vmem:[%s170 + $0x60] sm:$0xff] %v2393
      %2426 = vst [vmem:[%s170 + $0x68] sm:$0xff] %v2394
      %2427 = vst [vmem:[%s170 + $0x70] sm:$0xff] %v2395
      %2428 = vst [vmem:[%s170 + $0x78] sm:$0xff] %v2396
      %2429 = vst [vmem:[%s170 + $0x80] sm:$0xff] %v2397
      %2430 = vst [vmem:[%s170 + $0x88] sm:$0xff] %v2398
      %2431 = vst [vmem:[%s170 + $0x90] sm:$0xff] %v2399
      %2432 = vst [vmem:[%s170 + $0x98] sm:$0xff] %v2400
      %2433 = vst [vmem:[%s170 + $0xa0] sm:$0xff] %v2401
      %2434 = vst [vmem:[%s170 + $0xa8] sm:$0xff] %v2402
      %2435 = vst [vmem:[%s170 + $0xb0] sm:$0xff] %v2403
      %2436 = vst [vmem:[%s170 + $0xb8] sm:$0xff] %v2404
      %2437 = vst [vmem:[%s170 + $0xc0] sm:$0xff] %v2405
      %2438 = vst [vmem:[%s170 + $0xc8] sm:$0xff] %v2406
      %2439 = vst [vmem:[%s170 + $0xd0] sm:$0xff] %v2407
      %2440 = vst [vmem:[%s170 + $0xd8] sm:$0xff] %v2408
      %2441 = vst [vmem:[%s170 + $0xe0] sm:$0xff] %v2409
      %2442 = vst [vmem:[%s170 + $0xe8] sm:$0xff] %v2410
      %2443 = vst [vmem:[%s170 + $0xf0] sm:$0xff] %v2411
      %2444 = vst [vmem:[%s170 + $0xf8] sm:$0xff] %v2412
      %v2446 = vrot.slane %v220, 5
      %v2447 = vrot.slane %v2446, 4
      %v2448 = vrot.slane %v221, 5
      %v2449 = vsel %vm1412, %v2447, %v2448
      %v2450 = vrot.slane %v2448, 4
      %v2451 = vrot.slane %v222, 5
      %v2452 = vsel %vm1412, %v2450, %v2451
      %v2453 = vld [vmem:[%s170] sm:$0xff]
      %v2454 = vld [vmem:[%s170 + $0x8] sm:$0xff]
      %v2455 = vld [vmem:[%s170 + $0x10] sm:$0xff]
      %v2456 = vld [vmem:[%s170 + $0x18] sm:$0xff]
      %v2457 = vld [vmem:[%s170 + $0x20] sm:$0xff]
      %v2458 = vld [vmem:[%s170 + $0x28] sm:$0xff]
      %v2459 = vld [vmem:[%s170 + $0x30] sm:$0xff]
      %v2460 = vld [vmem:[%s170 + $0x38] sm:$0xff]
      %v2461 = vld [vmem:[%s170 + $0x40] sm:$0xff]
      %v2462 = vld [vmem:[%s170 + $0x48] sm:$0xff]
      %v2463 = vld [vmem:[%s170 + $0x50] sm:$0xff]
      %v2464 = vld [vmem:[%s170 + $0x58] sm:$0xff]
      %v2465 = vld [vmem:[%s170 + $0x60] sm:$0xff]
      %v2466 = vld [vmem:[%s170 + $0x68] sm:$0xff]
      %v2467 = vld [vmem:[%s170 + $0x70] sm:$0xff]
      %v2468 = vld [vmem:[%s170 + $0x78] sm:$0xff]
      %v2469 = vld [vmem:[%s170 + $0x80] sm:$0xff]
      %v2470 = vld [vmem:[%s170 + $0x88] sm:$0xff]
      %v2471 = vld [vmem:[%s170 + $0x90] sm:$0xff]
      %v2472 = vld [vmem:[%s170 + $0x98] sm:$0xff]
      %v2473 = vld [vmem:[%s170 + $0xa0] sm:$0xff]
      %v2474 = vld [vmem:[%s170 + $0xa8] sm:$0xff]
      %v2475 = vld [vmem:[%s170 + $0xb0] sm:$0xff]
      %v2476 = vld [vmem:[%s170 + $0xb8] sm:$0xff]
      %v2477 = vld [vmem:[%s170 + $0xc0] sm:$0xff]
      %v2478 = vld [vmem:[%s170 + $0xc8] sm:$0xff]
      %v2479 = vld [vmem:[%s170 + $0xd0] sm:$0xff]
      %v2480 = vld [vmem:[%s170 + $0xd8] sm:$0xff]
      %v2481 = vld [vmem:[%s170 + $0xe0] sm:$0xff]
      %v2482 = vld [vmem:[%s170 + $0xe8] sm:$0xff]
      %v2483 = vld [vmem:[%s170 + $0xf0] sm:$0xff]
      %v2484 = vld [vmem:[%s170 + $0xf8] sm:$0xff]
      %s2485 = scalar_lea.vmem %s1, 10
      %v2486 = vld [vmem:[%s2485] sm:$0x3]
      %v2487 = vunpack.c.l.b16 %v2449
      %v2488 = vunpack.c.l.b16 %v2452
      %v2489 = vpack.c.b16 %v2488, %v2487
      %v2491 = vsel %vm371, %v2489, 0
      %v2494 = vsel %vm420, %v2486, 0
      %2496 = vmatprep.subr.bf16.mxu0 0
      %2497 = vmatpush1.bf16.msra.mxu0 %v2494
      %2498 = vmatprep.subr.bf16.mxu0 0
      %2499 = vmatpush1.bf16.msra.mxu0 0
      %2500 = vmatprep.subr.bf16.mxu0 0
      %2501 = vmatpush1.bf16.msra.mxu0 0
      %2502 = vmatprep.subr.bf16.mxu0 0
      %2503 = vmatpush1.bf16.msra.mxu0 0
      %2504 = vmatprep.subr.bf16.mxu0 0
      %2505 = vmatpush1.bf16.msra.mxu0 0
      %2506 = vmatprep.subr.bf16.mxu0 0
      %2507 = vmatpush1.bf16.msra.mxu0 0
      %2508 = vmatprep.subr.bf16.mxu0 0
      %2509 = vmatpush1.bf16.msra.mxu0 0
      %2510 = vmatprep.subr.bf16.mxu0 0
      %2511 = vmatpush1.bf16.msra.mxu0 0
      %2512 = vmatprep.subr.bf16.mxu0 0
      %2513 = vmatpush1.bf16.msra.mxu0 0
      %2514 = vmatprep.subr.bf16.mxu0 0
      %2515 = vmatpush1.bf16.msra.mxu0 0
      %2516 = vmatprep.subr.bf16.mxu0 0
      %2517 = vmatpush1.bf16.msra.mxu0 0
      %2518 = vmatprep.subr.bf16.mxu0 0
      %2519 = vmatpush1.bf16.msra.mxu0 0
      %2520 = vmatprep.subr.bf16.mxu0 0
      %2521 = vmatpush1.bf16.msra.mxu0 0
      %2522 = vmatprep.subr.bf16.mxu0 0
      %2523 = vmatpush1.bf16.msra.mxu0 0
      %2524 = vmatprep.subr.bf16.mxu0 0
      %2525 = vmatpush1.bf16.msra.mxu0 0
      %2526 = vmatprep.subr.bf16.mxu0 0
      %2527 = vmatpush1.bf16.msra.mxu0 0
      %2528 = vmatprep.mubr.bf16.mxu0 0
      %2529 = vmatmul.mubr.bf16.gmra.mrb[0].mxu0 %v1611
      %v2530 = vpop.f32.mrb[0].mxu0
      %v2531 = vadd.f32 0.0, %v2530
      %v2532 = vpop.f32.mrb[0].mxu0
      %v2533 = vpop.f32.mrb[0].mxu0
      %v2534 = vadd.f32 0.0, %v2533
      %v2535 = vpop.f32.mrb[0].mxu0
      %2536 = vmatprep.mubr.bf16.mxu0 0
      %2537 = vmatmul.mubr.bf16.gmra.mrb[0].mxu0 %v1614
      %v2538 = vpop.f32.mrb[0].mxu0
      %v2539 = vadd.f32 0.0, %v2538
      %v2540 = vpop.f32.mrb[0].mxu0
      %v2541 = vpop.f32.mrb[0].mxu0
      %v2542 = vadd.f32 0.0, %v2541
      %v2543 = vpop.f32.mrb[0].mxu0
      %2544 = vmatprep.mubr.bf16.mxu0 0
      %2545 = vmatmul.mubr.bf16.gmra.mrb[0].mxu0 %v1617
      %v2546 = vpop.f32.mrb[0].mxu0
      %v2547 = vadd.f32 0.0, %v2546
      %v2548 = vpop.f32.mrb[0].mxu0
      %v2549 = vpop.f32.mrb[0].mxu0
      %v2550 = vadd.f32 0.0, %v2549
      %v2551 = vpop.f32.mrb[0].mxu0
      %2552 = vmatprep.mubr.bf16.mxu0 0
      %2553 = vmatmul.mubr.bf16.gmra.mrb[0].mxu0 %v1620
      %v2554 = vpop.f32.mrb[0].mxu0
      %v2555 = vadd.f32 0.0, %v2554
      %v2556 = vpop.f32.mrb[0].mxu0
      %v2557 = vpop.f32.mrb[0].mxu0
      %v2558 = vadd.f32 0.0, %v2557
      %v2559 = vpop.f32.mrb[0].mxu0
      %2560 = vmatprep.mubr.bf16.mxu0 0
      %2561 = vmatmul.mubr.bf16.gmra.mrb[0].mxu0 %v1623
      %v2562 = vpop.f32.mrb[0].mxu0
      %v2563 = vadd.f32 0.0, %v2562
      %v2564 = vpop.f32.mrb[0].mxu0
      %v2565 = vpop.f32.mrb[0].mxu0
      %v2566 = vadd.f32 0.0, %v2565
      %v2567 = vpop.f32.mrb[0].mxu0
      %2568 = vmatprep.mubr.bf16.mxu0 0
      %2569 = vmatmul.mubr.bf16.gmra.mrb[0].mxu0 %v1626
      %v2570 = vpop.f32.mrb[0].mxu0
      %v2571 = vadd.f32 0.0, %v2570
      %v2572 = vpop.f32.mrb[0].mxu0
      %v2573 = vpop.f32.mrb[0].mxu0
      %v2574 = vadd.f32 0.0, %v2573
      %v2575 = vpop.f32.mrb[0].mxu0
      %2576 = vmatprep.mubr.bf16.mxu0 0
      %2577 = vmatmul.mubr.bf16.gmra.mrb[0].mxu0 %v1629
      %v2578 = vpop.f32.mrb[0].mxu0
      %v2579 = vadd.f32 0.0, %v2578
      %v2580 = vpop.f32.mrb[0].mxu0
      %v2581 = vpop.f32.mrb[0].mxu0
      %v2582 = vadd.f32 0.0, %v2581
      %v2583 = vpop.f32.mrb[0].mxu0
      %2584 = vmatprep.mubr.bf16.mxu0 0
      %2585 = vmatmul.mubr.bf16.gmra.mrb[0].mxu0 %v1632
      %v2586 = vpop.f32.mrb[0].mxu0
      %v2587 = vadd.f32 0.0, %v2586
      %v2588 = vpop.f32.mrb[0].mxu0
      %v2589 = vpop.f32.mrb[0].mxu0
      %v2590 = vadd.f32 0.0, %v2589
      %v2591 = vpop.f32.mrb[0].mxu0
      %2592 = vmatprep.mubr.bf16.mxu0 0
      %2593 = vmatmul.mubr.bf16.gmra.mrb[0].mxu0 %v1635
      %v2594 = vpop.f32.mrb[0].mxu0
      %v2595 = vadd.f32 0.0, %v2594
      %v2596 = vpop.f32.mrb[0].mxu0
      %v2597 = vpop.f32.mrb[0].mxu0
      %v2598 = vadd.f32 0.0, %v2597
      %v2599 = vpop.f32.mrb[0].mxu0
      %2600 = vmatprep.mubr.bf16.mxu0 0
      %2601 = vmatmul.mubr.bf16.gmra.mrb[0].mxu0 %v1638
      %v2602 = vpop.f32.mrb[0].mxu0
      %v2603 = vadd.f32 0.0, %v2602
      %v2604 = vpop.f32.mrb[0].mxu0
      %v2605 = vpop.f32.mrb[0].mxu0
      %v2606 = vadd.f32 0.0, %v2605
      %v2607 = vpop.f32.mrb[0].mxu0
      %2608 = vmatprep.mubr.bf16.mxu0 0
      %2609 = vmatmul.mubr.bf16.gmra.mrb[0].mxu0 %v1641
      %v2610 = vpop.f32.mrb[0].mxu0
      %v2611 = vadd.f32 0.0, %v2610
      %v2612 = vpop.f32.mrb[0].mxu0
      %v2613 = vpop.f32.mrb[0].mxu0
      %v2614 = vadd.f32 0.0, %v2613
      %v2615 = vpop.f32.mrb[0].mxu0
      %2616 = vmatprep.mubr.bf16.mxu0 0
      %2617 = vmatmul.mubr.bf16.gmra.mrb[0].mxu0 %v1644
      %v2618 = vpop.f32.mrb[0].mxu0
      %v2619 = vadd.f32 0.0, %v2618
      %v2620 = vpop.f32.mrb[0].mxu0
      %v2621 = vpop.f32.mrb[0].mxu0
      %v2622 = vadd.f32 0.0, %v2621
      %v2623 = vpop.f32.mrb[0].mxu0
      %2624 = vmatprep.mubr.bf16.mxu0 0
      %2625 = vmatmul.mubr.bf16.gmra.mrb[0].mxu0 %v1647
      %v2626 = vpop.f32.mrb[0].mxu0
      %v2627 = vadd.f32 0.0, %v2626
      %v2628 = vpop.f32.mrb[0].mxu0
      %v2629 = vpop.f32.mrb[0].mxu0
      %v2630 = vadd.f32 0.0, %v2629
      %v2631 = vpop.f32.mrb[0].mxu0
      %2632 = vmatprep.mubr.bf16.mxu0 0
      %2633 = vmatmul.mubr.bf16.gmra.mrb[0].mxu0 %v1650
      %v2634 = vpop.f32.mrb[0].mxu0
      %v2635 = vadd.f32 0.0, %v2634
      %v2636 = vpop.f32.mrb[0].mxu0
      %v2637 = vpop.f32.mrb[0].mxu0
      %v2638 = vadd.f32 0.0, %v2637
      %v2639 = vpop.f32.mrb[0].mxu0
      %2640 = vmatprep.mubr.bf16.mxu0 0
      %2641 = vmatmul.mubr.bf16.gmra.mrb[0].mxu0 %v1653
      %v2642 = vpop.f32.mrb[0].mxu0
      %v2643 = vadd.f32 0.0, %v2642
      %v2644 = vpop.f32.mrb[0].mxu0
      %v2645 = vpop.f32.mrb[0].mxu0
      %v2646 = vadd.f32 0.0, %v2645
      %v2647 = vpop.f32.mrb[0].mxu0
      %2648 = vmatprep.mubr.bf16.mxu0 0
      %2649 = vmatmul.mubr.bf16.gmra.mrb[0].mxu0 %v2491
      %v2650 = vpop.f32.mrb[0].mxu0
      %v2651 = vadd.f32 0.0, %v2650
      %v2652 = vpop.f32.mrb[0].mxu0
      %v2653 = vpop.f32.mrb[0].mxu0
      %v2654 = vadd.f32 0.0, %v2653
      %v2655 = vpop.f32.mrb[0].mxu0
      %2656 = vdwg.mxu0
      %v2657 = vadd.f32 %v2453, %v2531
      %v2658 = vadd.f32 %v2454, %v2534
      %v2659 = vadd.f32 %v2455, %v2539
      %v2660 = vadd.f32 %v2456, %v2542
      %v2661 = vadd.f32 %v2457, %v2547
      %v2662 = vadd.f32 %v2458, %v2550
      %v2663 = vadd.f32 %v2459, %v2555
      %v2664 = vadd.f32 %v2460, %v2558
      %v2665 = vadd.f32 %v2461, %v2563
      %v2666 = vadd.f32 %v2462, %v2566
      %v2667 = vadd.f32 %v2463, %v2571
      %v2668 = vadd.f32 %v2464, %v2574
      %v2669 = vadd.f32 %v2465, %v2579
      %v2670 = vadd.f32 %v2466, %v2582
      %v2671 = vadd.f32 %v2467, %v2587
      %v2672 = vadd.f32 %v2468, %v2590
      %v2673 = vadd.f32 %v2469, %v2595
      %v2674 = vadd.f32 %v2470, %v2598
      %v2675 = vadd.f32 %v2471, %v2603
      %v2676 = vadd.f32 %v2472, %v2606
      %v2677 = vadd.f32 %v2473, %v2611
      %v2678 = vadd.f32 %v2474, %v2614
      %v2679 = vadd.f32 %v2475, %v2619
      %v2680 = vadd.f32 %v2476, %v2622
      %v2681 = vadd.f32 %v2477, %v2627
      %v2682 = vadd.f32 %v2478, %v2630
      %v2683 = vadd.f32 %v2479, %v2635
      %v2684 = vadd.f32 %v2480, %v2638
      %v2685 = vadd.f32 %v2481, %v2643
      %v2686 = vadd.f32 %v2482, %v2646
      %v2687 = vadd.f32 %v2483, %v2651
      %v2688 = vadd.f32 %v2484, %v2654
      %2689 = vst [vmem:[%s170] sm:$0xff] %v2657
      %2690 = vst [vmem:[%s170 + $0x8] sm:$0xff] %v2658
      %2691 = vst [vmem:[%s170 + $0x10] sm:$0xff] %v2659
      %2692 = vst [vmem:[%s170 + $0x18] sm:$0xff] %v2660
      %2693 = vst [vmem:[%s170 + $0x20] sm:$0xff] %v2661
      %2694 = vst [vmem:[%s170 + $0x28] sm:$0xff] %v2662
      %2695 = vst [vmem:[%s170 + $0x30] sm:$0xff] %v2663
      %2696 = vst [vmem:[%s170 + $0x38] sm:$0xff] %v2664
      %2697 = vst [vmem:[%s170 + $0x40] sm:$0xff] %v2665
      %2698 = vst [vmem:[%s170 + $0x48] sm:$0xff] %v2666
      %2699 = vst [vmem:[%s170 + $0x50] sm:$0xff] %v2667
      %2700 = vst [vmem:[%s170 + $0x58] sm:$0xff] %v2668
      %2701 = vst [vmem:[%s170 + $0x60] sm:$0xff] %v2669
      %2702 = vst [vmem:[%s170 + $0x68] sm:$0xff] %v2670
      %2703 = vst [vmem:[%s170 + $0x70] sm:$0xff] %v2671
      %2704 = vst [vmem:[%s170 + $0x78] sm:$0xff] %v2672
      %2705 = vst [vmem:[%s170 + $0x80] sm:$0xff] %v2673
      %2706 = vst [vmem:[%s170 + $0x88] sm:$0xff] %v2674
      %2707 = vst [vmem:[%s170 + $0x90] sm:$0xff] %v2675
      %2708 = vst [vmem:[%s170 + $0x98] sm:$0xff] %v2676
      %2709 = vst [vmem:[%s170 + $0xa0] sm:$0xff] %v2677
      %2710 = vst [vmem:[%s170 + $0xa8] sm:$0xff] %v2678
      %2711 = vst [vmem:[%s170 + $0xb0] sm:$0xff] %v2679
      %2712 = vst [vmem:[%s170 + $0xb8] sm:$0xff] %v2680
      %2713 = vst [vmem:[%s170 + $0xc0] sm:$0xff] %v2681
      %2714 = vst [vmem:[%s170 + $0xc8] sm:$0xff] %v2682
      %2715 = vst [vmem:[%s170 + $0xd0] sm:$0xff] %v2683
      %2716 = vst [vmem:[%s170 + $0xd8] sm:$0xff] %v2684
      %2717 = vst [vmem:[%s170 + $0xe0] sm:$0xff] %v2685
      %2718 = vst [vmem:[%s170 + $0xe8] sm:$0xff] %v2686
      %2719 = vst [vmem:[%s170 + $0xf0] sm:$0xff] %v2687
      %2720 = vst [vmem:[%s170 + $0xf8] sm:$0xff] %v2688
      %v2721 = vld [vmem:[%s170] sm:$0xff]
      %v2722 = vld [vmem:[%s170 + $0x8] sm:$0xff]
      %v2723 = vld [vmem:[%s170 + $0x10] sm:$0xff]
      %v2724 = vld [vmem:[%s170 + $0x18] sm:$0xff]
      %v2725 = vld [vmem:[%s170 + $0x20] sm:$0xff]
      %v2726 = vld [vmem:[%s170 + $0x28] sm:$0xff]
      %v2727 = vld [vmem:[%s170 + $0x30] sm:$0xff]
      %v2728 = vld [vmem:[%s170 + $0x38] sm:$0xff]
      %v2729 = vld [vmem:[%s170 + $0x40] sm:$0xff]
      %v2730 = vld [vmem:[%s170 + $0x48] sm:$0xff]
      %v2731 = vld [vmem:[%s170 + $0x50] sm:$0xff]
      %v2732 = vld [vmem:[%s170 + $0x58] sm:$0xff]
      %v2733 = vld [vmem:[%s170 + $0x60] sm:$0xff]
      %v2734 = vld [vmem:[%s170 + $0x68] sm:$0xff]
      %v2735 = vld [vmem:[%s170 + $0x70] sm:$0xff]
      %v2736 = vld [vmem:[%s170 + $0x78] sm:$0xff]
      %v2737 = vld [vmem:[%s170 + $0x80] sm:$0xff]
      %v2738 = vld [vmem:[%s170 + $0x88] sm:$0xff]
      %v2739 = vld [vmem:[%s170 + $0x90] sm:$0xff]
      %v2740 = vld [vmem:[%s170 + $0x98] sm:$0xff]
      %v2741 = vld [vmem:[%s170 + $0xa0] sm:$0xff]
      %v2742 = vld [vmem:[%s170 + $0xa8] sm:$0xff]
      %v2743 = vld [vmem:[%s170 + $0xb0] sm:$0xff]
      %v2744 = vld [vmem:[%s170 + $0xb8] sm:$0xff]
      %v2745 = vld [vmem:[%s170 + $0xc0] sm:$0xff]
      %v2746 = vld [vmem:[%s170 + $0xc8] sm:$0xff]
      %v2747 = vld [vmem:[%s170 + $0xd0] sm:$0xff]
      %v2748 = vld [vmem:[%s170 + $0xd8] sm:$0xff]
      %v2749 = vld [vmem:[%s170 + $0xe0] sm:$0xff]
      %v2750 = vld [vmem:[%s170 + $0xe8] sm:$0xff]
      %v2751 = vld [vmem:[%s170 + $0xf0] sm:$0xff]
      %v2752 = vld [vmem:[%s170 + $0xf8] sm:$0xff]
      %s2753 = scalar_lea.vmem %s1, 12
      %v2754 = vld [vmem:[%s2753] sm:$0x3]
      %v2757 = vunpack.c.l.b16 %v223
      %v2758 = vunpack.c.l.b16 %v224
      %v2759 = vpack.c.b16 %v2758, %v2757
      %v2761 = vsel %vm371, %v2759, 0
      %v2764 = vsel %vm420, %v2754, 0
      %2766 = vmatprep.subr.bf16.mxu0 0
      %2767 = vmatpush1.bf16.msra.mxu0 %v2764
      %2768 = vmatprep.subr.bf16.mxu0 0
      %2769 = vmatpush1.bf16.msra.mxu0 0
      %2770 = vmatprep.subr.bf16.mxu0 0
      %2771 = vmatpush1.bf16.msra.mxu0 0
      %2772 = vmatprep.subr.bf16.mxu0 0
      %2773 = vmatpush1.bf16.msra.mxu0 0
      %2774 = vmatprep.subr.bf16.mxu0 0
      %2775 = vmatpush1.bf16.msra.mxu0 0
      %2776 = vmatprep.subr.bf16.mxu0 0
      %2777 = vmatpush1.bf16.msra.mxu0 0
      %2778 = vmatprep.subr.bf16.mxu0 0
      %2779 = vmatpush1.bf16.msra.mxu0 0
      %2780 = vmatprep.subr.bf16.mxu0 0
      %2781 = vmatpush1.bf16.msra.mxu0 0
      %2782 = vmatprep.subr.bf16.mxu0 0
      %2783 = vmatpush1.bf16.msra.mxu0 0
      %2784 = vmatprep.subr.bf16.mxu0 0
      %2785 = vmatpush1.bf16.msra.mxu0 0
      %2786 = vmatprep.subr.bf16.mxu0 0
      %2787 = vmatpush1.bf16.msra.mxu0 0
      %2788 = vmatprep.subr.bf16.mxu0 0
      %2789 = vmatpush1.bf16.msra.mxu0 0
      %2790 = vmatprep.subr.bf16.mxu0 0
      %2791 = vmatpush1.bf16.msra.mxu0 0
      %2792 = vmatprep.subr.bf16.mxu0 0
      %2793 = vmatpush1.bf16.msra.mxu0 0
      %2794 = vmatprep.subr.bf16.mxu0 0
      %2795 = vmatpush1.bf16.msra.mxu0 0
      %2796 = vmatprep.subr.bf16.mxu0 0
      %2797 = vmatpush1.bf16.msra.mxu0 0
      %2798 = vmatprep.mubr.bf16.mxu0 0
      %2799 = vmatmul.mubr.bf16.gmra.mrb[0].mxu0 %v379
      %v2800 = vpop.f32.mrb[0].mxu0
      %v2801 = vadd.f32 0.0, %v2800
      %v2802 = vpop.f32.mrb[0].mxu0
      %v2803 = vpop.f32.mrb[0].mxu0
      %v2804 = vadd.f32 0.0, %v2803
      %v2805 = vpop.f32.mrb[0].mxu0
      %2806 = vmatprep.mubr.bf16.mxu0 0
      %2807 = vmatmul.mubr.bf16.gmra.mrb[0].mxu0 %v382
      %v2808 = vpop.f32.mrb[0].mxu0
      %v2809 = vadd.f32 0.0, %v2808
      %v2810 = vpop.f32.mrb[0].mxu0
      %v2811 = vpop.f32.mrb[0].mxu0
      %v2812 = vadd.f32 0.0, %v2811
      %v2813 = vpop.f32.mrb[0].mxu0
      %2814 = vmatprep.mubr.bf16.mxu0 0
      %2815 = vmatmul.mubr.bf16.gmra.mrb[0].mxu0 %v385
      %v2816 = vpop.f32.mrb[0].mxu0
      %v2817 = vadd.f32 0.0, %v2816
      %v2818 = vpop.f32.mrb[0].mxu0
      %v2819 = vpop.f32.mrb[0].mxu0
      %v2820 = vadd.f32 0.0, %v2819
      %v2821 = vpop.f32.mrb[0].mxu0
      %2822 = vmatprep.mubr.bf16.mxu0 0
      %2823 = vmatmul.mubr.bf16.gmra.mrb[0].mxu0 %v388
      %v2824 = vpop.f32.mrb[0].mxu0
      %v2825 = vadd.f32 0.0, %v2824
      %v2826 = vpop.f32.mrb[0].mxu0
      %v2827 = vpop.f32.mrb[0].mxu0
      %v2828 = vadd.f32 0.0, %v2827
      %v2829 = vpop.f32.mrb[0].mxu0
      %2830 = vmatprep.mubr.bf16.mxu0 0
      %2831 = vmatmul.mubr.bf16.gmra.mrb[0].mxu0 %v391
      %v2832 = vpop.f32.mrb[0].mxu0
      %v2833 = vadd.f32 0.0, %v2832
      %v2834 = vpop.f32.mrb[0].mxu0
      %v2835 = vpop.f32.mrb[0].mxu0
      %v2836 = vadd.f32 0.0, %v2835
      %v2837 = vpop.f32.mrb[0].mxu0
      %2838 = vmatprep.mubr.bf16.mxu0 0
      %2839 = vmatmul.mubr.bf16.gmra.mrb[0].mxu0 %v394
      %v2840 = vpop.f32.mrb[0].mxu0
      %v2841 = vadd.f32 0.0, %v2840
      %v2842 = vpop.f32.mrb[0].mxu0
      %v2843 = vpop.f32.mrb[0].mxu0
      %v2844 = vadd.f32 0.0, %v2843
      %v2845 = vpop.f32.mrb[0].mxu0
      %2846 = vmatprep.mubr.bf16.mxu0 0
      %2847 = vmatmul.mubr.bf16.gmra.mrb[0].mxu0 %v397
      %v2848 = vpop.f32.mrb[0].mxu0
      %v2849 = vadd.f32 0.0, %v2848
      %v2850 = vpop.f32.mrb[0].mxu0
      %v2851 = vpop.f32.mrb[0].mxu0
      %v2852 = vadd.f32 0.0, %v2851
      %v2853 = vpop.f32.mrb[0].mxu0
      %2854 = vmatprep.mubr.bf16.mxu0 0
      %2855 = vmatmul.mubr.bf16.gmra.mrb[0].mxu0 %v400
      %v2856 = vpop.f32.mrb[0].mxu0
      %v2857 = vadd.f32 0.0, %v2856
      %v2858 = vpop.f32.mrb[0].mxu0
      %v2859 = vpop.f32.mrb[0].mxu0
      %v2860 = vadd.f32 0.0, %v2859
      %v2861 = vpop.f32.mrb[0].mxu0
      %2862 = vmatprep.mubr.bf16.mxu0 0
      %2863 = vmatmul.mubr.bf16.gmra.mrb[0].mxu0 %v403
      %v2864 = vpop.f32.mrb[0].mxu0
      %v2865 = vadd.f32 0.0, %v2864
      %v2866 = vpop.f32.mrb[0].mxu0
      %v2867 = vpop.f32.mrb[0].mxu0
      %v2868 = vadd.f32 0.0, %v2867
      %v2869 = vpop.f32.mrb[0].mxu0
      %2870 = vmatprep.mubr.bf16.mxu0 0
      %2871 = vmatmul.mubr.bf16.gmra.mrb[0].mxu0 %v406
      %v2872 = vpop.f32.mrb[0].mxu0
      %v2873 = vadd.f32 0.0, %v2872
      %v2874 = vpop.f32.mrb[0].mxu0
      %v2875 = vpop.f32.mrb[0].mxu0
      %v2876 = vadd.f32 0.0, %v2875
      %v2877 = vpop.f32.mrb[0].mxu0
      %2878 = vmatprep.mubr.bf16.mxu0 0
      %2879 = vmatmul.mubr.bf16.gmra.mrb[0].mxu0 %v409
      %v2880 = vpop.f32.mrb[0].mxu0
      %v2881 = vadd.f32 0.0, %v2880
      %v2882 = vpop.f32.mrb[0].mxu0
      %v2883 = vpop.f32.mrb[0].mxu0
      %v2884 = vadd.f32 0.0, %v2883
      %v2885 = vpop.f32.mrb[0].mxu0
      %2886 = vmatprep.mubr.bf16.mxu0 0
      %2887 = vmatmul.mubr.bf16.gmra.mrb[0].mxu0 %v412
      %v2888 = vpop.f32.mrb[0].mxu0
      %v2889 = vadd.f32 0.0, %v2888
      %v2890 = vpop.f32.mrb[0].mxu0
      %v2891 = vpop.f32.mrb[0].mxu0
      %v2892 = vadd.f32 0.0, %v2891
      %v2893 = vpop.f32.mrb[0].mxu0
      %2894 = vmatprep.mubr.bf16.mxu0 0
      %2895 = vmatmul.mubr.bf16.gmra.mrb[0].mxu0 %v415
      %v2896 = vpop.f32.mrb[0].mxu0
      %v2897 = vadd.f32 0.0, %v2896
      %v2898 = vpop.f32.mrb[0].mxu0
      %v2899 = vpop.f32.mrb[0].mxu0
      %v2900 = vadd.f32 0.0, %v2899
      %v2901 = vpop.f32.mrb[0].mxu0
      %2902 = vmatprep.mubr.bf16.mxu0 0
      %2903 = vmatmul.mubr.bf16.gmra.mrb[0].mxu0 %v418
      %v2904 = vpop.f32.mrb[0].mxu0
      %v2905 = vadd.f32 0.0, %v2904
      %v2906 = vpop.f32.mrb[0].mxu0
      %v2907 = vpop.f32.mrb[0].mxu0
      %v2908 = vadd.f32 0.0, %v2907
      %v2909 = vpop.f32.mrb[0].mxu0
      %2910 = vmatprep.mubr.bf16.mxu0 0
      %2911 = vmatmul.mubr.bf16.gmra.mrb[0].mxu0 %v1923
      %v2912 = vpop.f32.mrb[0].mxu0
      %v2913 = vadd.f32 0.0, %v2912
      %v2914 = vpop.f32.mrb[0].mxu0
      %v2915 = vpop.f32.mrb[0].mxu0
      %v2916 = vadd.f32 0.0, %v2915
      %v2917 = vpop.f32.mrb[0].mxu0
      %2918 = vmatprep.mubr.bf16.mxu0 0
      %2919 = vmatmul.mubr.bf16.gmra.mrb[0].mxu0 %v2761
      %v2920 = vpop.f32.mrb[0].mxu0
      %v2921 = vadd.f32 0.0, %v2920
      %v2922 = vpop.f32.mrb[0].mxu0
      %v2923 = vpop.f32.mrb[0].mxu0
      %v2924 = vadd.f32 0.0, %v2923
      %v2925 = vpop.f32.mrb[0].mxu0
      %2926 = vdwg.mxu0
      %v2927 = vadd.f32 %v2721, %v2801
      %v2928 = vadd.f32 %v2722, %v2804
      %v2929 = vadd.f32 %v2723, %v2809
      %v2930 = vadd.f32 %v2724, %v2812
      %v2931 = vadd.f32 %v2725, %v2817
      %v2932 = vadd.f32 %v2726, %v2820
      %v2933 = vadd.f32 %v2727, %v2825
      %v2934 = vadd.f32 %v2728, %v2828
      %v2935 = vadd.f32 %v2729, %v2833
      %v2936 = vadd.f32 %v2730, %v2836
      %v2937 = vadd.f32 %v2731, %v2841
      %v2938 = vadd.f32 %v2732, %v2844
      %v2939 = vadd.f32 %v2733, %v2849
      %v2940 = vadd.f32 %v2734, %v2852
      %v2941 = vadd.f32 %v2735, %v2857
      %v2942 = vadd.f32 %v2736, %v2860
      %v2943 = vadd.f32 %v2737, %v2865
      %v2944 = vadd.f32 %v2738, %v2868
      %v2945 = vadd.f32 %v2739, %v2873
      %v2946 = vadd.f32 %v2740, %v2876
      %v2947 = vadd.f32 %v2741, %v2881
      %v2948 = vadd.f32 %v2742, %v2884
      %v2949 = vadd.f32 %v2743, %v2889
      %v2950 = vadd.f32 %v2744, %v2892
      %v2951 = vadd.f32 %v2745, %v2897
      %v2952 = vadd.f32 %v2746, %v2900
      %v2953 = vadd.f32 %v2747, %v2905
      %v2954 = vadd.f32 %v2748, %v2908
      %v2955 = vadd.f32 %v2749, %v2913
      %v2956 = vadd.f32 %v2750, %v2916
      %v2957 = vadd.f32 %v2751, %v2921
      %v2958 = vadd.f32 %v2752, %v2924
      %2959 = vst [vmem:[%s170] sm:$0xff] %v2927
      %2960 = vst [vmem:[%s170 + $0x8] sm:$0xff] %v2928
      %2961 = vst [vmem:[%s170 + $0x10] sm:$0xff] %v2929
      %2962 = vst [vmem:[%s170 + $0x18] sm:$0xff] %v2930
      %2963 = vst [vmem:[%s170 + $0x20] sm:$0xff] %v2931
      %2964 = vst [vmem:[%s170 + $0x28] sm:$0xff] %v2932
      %2965 = vst [vmem:[%s170 + $0x30] sm:$0xff] %v2933
      %2966 = vst [vmem:[%s170 + $0x38] sm:$0xff] %v2934
      %2967 = vst [vmem:[%s170 + $0x40] sm:$0xff] %v2935
      %2968 = vst [vmem:[%s170 + $0x48] sm:$0xff] %v2936
      %2969 = vst [vmem:[%s170 + $0x50] sm:$0xff] %v2937
      %2970 = vst [vmem:[%s170 + $0x58] sm:$0xff] %v2938
      %2971 = vst [vmem:[%s170 + $0x60] sm:$0xff] %v2939
      %2972 = vst [vmem:[%s170 + $0x68] sm:$0xff] %v2940
      %2973 = vst [vmem:[%s170 + $0x70] sm:$0xff] %v2941
      %2974 = vst [vmem:[%s170 + $0x78] sm:$0xff] %v2942
      %2975 = vst [vmem:[%s170 + $0x80] sm:$0xff] %v2943
      %2976 = vst [vmem:[%s170 + $0x88] sm:$0xff] %v2944
      %2977 = vst [vmem:[%s170 + $0x90] sm:$0xff] %v2945
      %2978 = vst [vmem:[%s170 + $0x98] sm:$0xff] %v2946
      %2979 = vst [vmem:[%s170 + $0xa0] sm:$0xff] %v2947
      %2980 = vst [vmem:[%s170 + $0xa8] sm:$0xff] %v2948
      %2981 = vst [vmem:[%s170 + $0xb0] sm:$0xff] %v2949
      %2982 = vst [vmem:[%s170 + $0xb8] sm:$0xff] %v2950
      %2983 = vst [vmem:[%s170 + $0xc0] sm:$0xff] %v2951
      %2984 = vst [vmem:[%s170 + $0xc8] sm:$0xff] %v2952
      %2985 = vst [vmem:[%s170 + $0xd0] sm:$0xff] %v2953
      %2986 = vst [vmem:[%s170 + $0xd8] sm:$0xff] %v2954
      %2987 = vst [vmem:[%s170 + $0xe0] sm:$0xff] %v2955
      %2988 = vst [vmem:[%s170 + $0xe8] sm:$0xff] %v2956
      %2989 = vst [vmem:[%s170 + $0xf0] sm:$0xff] %v2957
      %2990 = vst [vmem:[%s170 + $0xf8] sm:$0xff] %v2958
      %v2992 = vshrl.u32 %v223, 16
      %v2994 = vrot.slane %v2992, 4
      %v2995 = vshll.u32 %v223, 16
      %v2997 = vrot.slane %v2995, 5
      %v2998 = vor.u32 %v2994, %v2997
      %v2999 = vrot.slane %v2998, 4
      %v3001 = vshll.u32 %v224, 16
      %v3003 = vrot.slane %v3001, 5
      %v3004 = vsel %vm651, %v2999, %v3003
      %v3005 = vshrl.u32 %v224, 16
      %v3007 = vrot.slane %v3005, 4
      %v3008 = vor.u32 %v3007, %v3003
      %v3009 = vrot.slane %v3008, 4
      %v3011 = vshll.u32 %v225, 16
      %v3013 = vrot.slane %v3011, 5
      %v3014 = vsel %vm651, %v3009, %v3013
      %v3015 = vld [vmem:[%s170] sm:$0xff]
      %v3016 = vld [vmem:[%s170 + $0x8] sm:$0xff]
      %v3017 = vld [vmem:[%s170 + $0x10] sm:$0xff]
      %v3018 = vld [vmem:[%s170 + $0x18] sm:$0xff]
      %v3019 = vld [vmem:[%s170 + $0x20] sm:$0xff]
      %v3020 = vld [vmem:[%s170 + $0x28] sm:$0xff]
      %v3021 = vld [vmem:[%s170 + $0x30] sm:$0xff]
      %v3022 = vld [vmem:[%s170 + $0x38] sm:$0xff]
      %v3023 = vld [vmem:[%s170 + $0x40] sm:$0xff]
      %v3024 = vld [vmem:[%s170 + $0x48] sm:$0xff]
      %v3025 = vld [vmem:[%s170 + $0x50] sm:$0xff]
      %v3026 = vld [vmem:[%s170 + $0x58] sm:$0xff]
      %v3027 = vld [vmem:[%s170 + $0x60] sm:$0xff]
      %v3028 = vld [vmem:[%s170 + $0x68] sm:$0xff]
      %v3029 = vld [vmem:[%s170 + $0x70] sm:$0xff]
      %v3030 = vld [vmem:[%s170 + $0x78] sm:$0xff]
      %v3031 = vld [vmem:[%s170 + $0x80] sm:$0xff]
      %v3032 = vld [vmem:[%s170 + $0x88] sm:$0xff]
      %v3033 = vld [vmem:[%s170 + $0x90] sm:$0xff]
      %v3034 = vld [vmem:[%s170 + $0x98] sm:$0xff]
      %v3035 = vld [vmem:[%s170 + $0xa0] sm:$0xff]
      %v3036 = vld [vmem:[%s170 + $0xa8] sm:$0xff]
      %v3037 = vld [vmem:[%s170 + $0xb0] sm:$0xff]
      %v3038 = vld [vmem:[%s170 + $0xb8] sm:$0xff]
      %v3039 = vld [vmem:[%s170 + $0xc0] sm:$0xff]
      %v3040 = vld [vmem:[%s170 + $0xc8] sm:$0xff]
      %v3041 = vld [vmem:[%s170 + $0xd0] sm:$0xff]
      %v3042 = vld [vmem:[%s170 + $0xd8] sm:$0xff]
      %v3043 = vld [vmem:[%s170 + $0xe0] sm:$0xff]
      %v3044 = vld [vmem:[%s170 + $0xe8] sm:$0xff]
      %v3045 = vld [vmem:[%s170 + $0xf0] sm:$0xff]
      %v3046 = vld [vmem:[%s170 + $0xf8] sm:$0xff]
      %s3047 = scalar_lea.vmem %s1, 14
      %v3048 = vld [vmem:[%s3047] sm:$0x3]
      %v3049 = vunpack.c.l.b16 %v3004
      %v3050 = vunpack.c.l.b16 %v3014
      %v3051 = vpack.c.b16 %v3050, %v3049
      %v3053 = vsel %vm371, %v3051, 0
      %v3056 = vsel %vm420, %v3048, 0
      %3058 = vmatprep.subr.bf16.mxu0 0
      %3059 = vmatpush1.bf16.msra.mxu0 %v3056
      %3060 = vmatprep.subr.bf16.mxu0 0
      %3061 = vmatpush1.bf16.msra.mxu0 0
      %3062 = vmatprep.subr.bf16.mxu0 0
      %3063 = vmatpush1.bf16.msra.mxu0 0
      %3064 = vmatprep.subr.bf16.mxu0 0
      %3065 = vmatpush1.bf16.msra.mxu0 0
      %3066 = vmatprep.subr.bf16.mxu0 0
      %3067 = vmatpush1.bf16.msra.mxu0 0
      %3068 = vmatprep.subr.bf16.mxu0 0
      %3069 = vmatpush1.bf16.msra.mxu0 0
      %3070 = vmatprep.subr.bf16.mxu0 0
      %3071 = vmatpush1.bf16.msra.mxu0 0
      %3072 = vmatprep.subr.bf16.mxu0 0
      %3073 = vmatpush1.bf16.msra.mxu0 0
      %3074 = vmatprep.subr.bf16.mxu0 0
      %3075 = vmatpush1.bf16.msra.mxu0 0
      %3076 = vmatprep.subr.bf16.mxu0 0
      %3077 = vmatpush1.bf16.msra.mxu0 0
      %3078 = vmatprep.subr.bf16.mxu0 0
      %3079 = vmatpush1.bf16.msra.mxu0 0
      %3080 = vmatprep.subr.bf16.mxu0 0
      %3081 = vmatpush1.bf16.msra.mxu0 0
      %3082 = vmatprep.subr.bf16.mxu0 0
      %3083 = vmatpush1.bf16.msra.mxu0 0
      %3084 = vmatprep.subr.bf16.mxu0 0
      %3085 = vmatpush1.bf16.msra.mxu0 0
      %3086 = vmatprep.subr.bf16.mxu0 0
      %3087 = vmatpush1.bf16.msra.mxu0 0
      %3088 = vmatprep.subr.bf16.mxu0 0
      %3089 = vmatpush1.bf16.msra.mxu0 0
      %3090 = vmatprep.mubr.bf16.mxu0 0
      %3091 = vmatmul.mubr.bf16.gmra.mrb[0].mxu0 %v1125
      %v3092 = vpop.f32.mrb[0].mxu0
      %v3093 = vadd.f32 0.0, %v3092
      %v3094 = vpop.f32.mrb[0].mxu0
      %v3095 = vpop.f32.mrb[0].mxu0
      %v3096 = vadd.f32 0.0, %v3095
      %v3097 = vpop.f32.mrb[0].mxu0
      %3098 = vmatprep.mubr.bf16.mxu0 0
      %3099 = vmatmul.mubr.bf16.gmra.mrb[0].mxu0 %v1128
      %v3100 = vpop.f32.mrb[0].mxu0
      %v3101 = vadd.f32 0.0, %v3100
      %v3102 = vpop.f32.mrb[0].mxu0
      %v3103 = vpop.f32.mrb[0].mxu0
      %v3104 = vadd.f32 0.0, %v3103
      %v3105 = vpop.f32.mrb[0].mxu0
      %3106 = vmatprep.mubr.bf16.mxu0 0
      %3107 = vmatmul.mubr.bf16.gmra.mrb[0].mxu0 %v1131
      %v3108 = vpop.f32.mrb[0].mxu0
      %v3109 = vadd.f32 0.0, %v3108
      %v3110 = vpop.f32.mrb[0].mxu0
      %v3111 = vpop.f32.mrb[0].mxu0
      %v3112 = vadd.f32 0.0, %v3111
      %v3113 = vpop.f32.mrb[0].mxu0
      %3114 = vmatprep.mubr.bf16.mxu0 0
      %3115 = vmatmul.mubr.bf16.gmra.mrb[0].mxu0 %v1134
      %v3116 = vpop.f32.mrb[0].mxu0
      %v3117 = vadd.f32 0.0, %v3116
      %v3118 = vpop.f32.mrb[0].mxu0
      %v3119 = vpop.f32.mrb[0].mxu0
      %v3120 = vadd.f32 0.0, %v3119
      %v3121 = vpop.f32.mrb[0].mxu0
      %3122 = vmatprep.mubr.bf16.mxu0 0
      %3123 = vmatmul.mubr.bf16.gmra.mrb[0].mxu0 %v1137
      %v3124 = vpop.f32.mrb[0].mxu0
      %v3125 = vadd.f32 0.0, %v3124
      %v3126 = vpop.f32.mrb[0].mxu0
      %v3127 = vpop.f32.mrb[0].mxu0
      %v3128 = vadd.f32 0.0, %v3127
      %v3129 = vpop.f32.mrb[0].mxu0
      %3130 = vmatprep.mubr.bf16.mxu0 0
      %3131 = vmatmul.mubr.bf16.gmra.mrb[0].mxu0 %v1140
      %v3132 = vpop.f32.mrb[0].mxu0
      %v3133 = vadd.f32 0.0, %v3132
      %v3134 = vpop.f32.mrb[0].mxu0
      %v3135 = vpop.f32.mrb[0].mxu0
      %v3136 = vadd.f32 0.0, %v3135
      %v3137 = vpop.f32.mrb[0].mxu0
      %3138 = vmatprep.mubr.bf16.mxu0 0
      %3139 = vmatmul.mubr.bf16.gmra.mrb[0].mxu0 %v1143
      %v3140 = vpop.f32.mrb[0].mxu0
      %v3141 = vadd.f32 0.0, %v3140
      %v3142 = vpop.f32.mrb[0].mxu0
      %v3143 = vpop.f32.mrb[0].mxu0
      %v3144 = vadd.f32 0.0, %v3143
      %v3145 = vpop.f32.mrb[0].mxu0
      %3146 = vmatprep.mubr.bf16.mxu0 0
      %3147 = vmatmul.mubr.bf16.gmra.mrb[0].mxu0 %v1146
      %v3148 = vpop.f32.mrb[0].mxu0
      %v3149 = vadd.f32 0.0, %v3148
      %v3150 = vpop.f32.mrb[0].mxu0
      %v3151 = vpop.f32.mrb[0].mxu0
      %v3152 = vadd.f32 0.0, %v3151
      %v3153 = vpop.f32.mrb[0].mxu0
      %3154 = vmatprep.mubr.bf16.mxu0 0
      %3155 = vmatmul.mubr.bf16.gmra.mrb[0].mxu0 %v1149
      %v3156 = vpop.f32.mrb[0].mxu0
      %v3157 = vadd.f32 0.0, %v3156
      %v3158 = vpop.f32.mrb[0].mxu0
      %v3159 = vpop.f32.mrb[0].mxu0
      %v3160 = vadd.f32 0.0, %v3159
      %v3161 = vpop.f32.mrb[0].mxu0
      %3162 = vmatprep.mubr.bf16.mxu0 0
      %3163 = vmatmul.mubr.bf16.gmra.mrb[0].mxu0 %v1152
      %v3164 = vpop.f32.mrb[0].mxu0
      %v3165 = vadd.f32 0.0, %v3164
      %v3166 = vpop.f32.mrb[0].mxu0
      %v3167 = vpop.f32.mrb[0].mxu0
      %v3168 = vadd.f32 0.0, %v3167
      %v3169 = vpop.f32.mrb[0].mxu0
      %3170 = vmatprep.mubr.bf16.mxu0 0
      %3171 = vmatmul.mubr.bf16.gmra.mrb[0].mxu0 %v1155
      %v3172 = vpop.f32.mrb[0].mxu0
      %v3173 = vadd.f32 0.0, %v3172
      %v3174 = vpop.f32.mrb[0].mxu0
      %v3175 = vpop.f32.mrb[0].mxu0
      %v3176 = vadd.f32 0.0, %v3175
      %v3177 = vpop.f32.mrb[0].mxu0
      %3178 = vmatprep.mubr.bf16.mxu0 0
      %3179 = vmatmul.mubr.bf16.gmra.mrb[0].mxu0 %v1158
      %v3180 = vpop.f32.mrb[0].mxu0
      %v3181 = vadd.f32 0.0, %v3180
      %v3182 = vpop.f32.mrb[0].mxu0
      %v3183 = vpop.f32.mrb[0].mxu0
      %v3184 = vadd.f32 0.0, %v3183
      %v3185 = vpop.f32.mrb[0].mxu0
      %3186 = vmatprep.mubr.bf16.mxu0 0
      %3187 = vmatmul.mubr.bf16.gmra.mrb[0].mxu0 %v1161
      %v3188 = vpop.f32.mrb[0].mxu0
      %v3189 = vadd.f32 0.0, %v3188
      %v3190 = vpop.f32.mrb[0].mxu0
      %v3191 = vpop.f32.mrb[0].mxu0
      %v3192 = vadd.f32 0.0, %v3191
      %v3193 = vpop.f32.mrb[0].mxu0
      %3194 = vmatprep.mubr.bf16.mxu0 0
      %3195 = vmatmul.mubr.bf16.gmra.mrb[0].mxu0 %v1164
      %v3196 = vpop.f32.mrb[0].mxu0
      %v3197 = vadd.f32 0.0, %v3196
      %v3198 = vpop.f32.mrb[0].mxu0
      %v3199 = vpop.f32.mrb[0].mxu0
      %v3200 = vadd.f32 0.0, %v3199
      %v3201 = vpop.f32.mrb[0].mxu0
      %3202 = vmatprep.mubr.bf16.mxu0 0
      %3203 = vmatmul.mubr.bf16.gmra.mrb[0].mxu0 %v2215
      %v3204 = vpop.f32.mrb[0].mxu0
      %v3205 = vadd.f32 0.0, %v3204
      %v3206 = vpop.f32.mrb[0].mxu0
      %v3207 = vpop.f32.mrb[0].mxu0
      %v3208 = vadd.f32 0.0, %v3207
      %v3209 = vpop.f32.mrb[0].mxu0
      %3210 = vmatprep.mubr.bf16.mxu0 0
      %3211 = vmatmul.mubr.bf16.gmra.mrb[0].mxu0 %v3053
      %v3212 = vpop.f32.mrb[0].mxu0
      %v3213 = vadd.f32 0.0, %v3212
      %v3214 = vpop.f32.mrb[0].mxu0
      %v3215 = vpop.f32.mrb[0].mxu0
      %v3216 = vadd.f32 0.0, %v3215
      %v3217 = vpop.f32.mrb[0].mxu0
      %3218 = vdwg.mxu0
      %v3219 = vadd.f32 %v3015, %v3093
      %v3220 = vadd.f32 %v3016, %v3096
      %v3221 = vadd.f32 %v3017, %v3101
      %v3222 = vadd.f32 %v3018, %v3104
      %v3223 = vadd.f32 %v3019, %v3109
      %v3224 = vadd.f32 %v3020, %v3112
      %v3225 = vadd.f32 %v3021, %v3117
      %v3226 = vadd.f32 %v3022, %v3120
      %v3227 = vadd.f32 %v3023, %v3125
      %v3228 = vadd.f32 %v3024, %v3128
      %v3229 = vadd.f32 %v3025, %v3133
      %v3230 = vadd.f32 %v3026, %v3136
      %v3231 = vadd.f32 %v3027, %v3141
      %v3232 = vadd.f32 %v3028, %v3144
      %v3233 = vadd.f32 %v3029, %v3149
      %v3234 = vadd.f32 %v3030, %v3152
      %v3235 = vadd.f32 %v3031, %v3157
      %v3236 = vadd.f32 %v3032, %v3160
      %v3237 = vadd.f32 %v3033, %v3165
      %v3238 = vadd.f32 %v3034, %v3168
      %v3239 = vadd.f32 %v3035, %v3173
      %v3240 = vadd.f32 %v3036, %v3176
      %v3241 = vadd.f32 %v3037, %v3181
      %v3242 = vadd.f32 %v3038, %v3184
      %v3243 = vadd.f32 %v3039, %v3189
      %v3244 = vadd.f32 %v3040, %v3192
      %v3245 = vadd.f32 %v3041, %v3197
      %v3246 = vadd.f32 %v3042, %v3200
      %v3247 = vadd.f32 %v3043, %v3205
      %v3248 = vadd.f32 %v3044, %v3208
      %v3249 = vadd.f32 %v3045, %v3213
      %v3250 = vadd.f32 %v3046, %v3216
      %3251 = vst [vmem:[%s170] sm:$0xff] %v3219
      %3252 = vst [vmem:[%s170 + $0x8] sm:$0xff] %v3220
      %3253 = vst [vmem:[%s170 + $0x10] sm:$0xff] %v3221
      %3254 = vst [vmem:[%s170 + $0x18] sm:$0xff] %v3222
      %3255 = vst [vmem:[%s170 + $0x20] sm:$0xff] %v3223
      %3256 = vst [vmem:[%s170 + $0x28] sm:$0xff] %v3224
      %3257 = vst [vmem:[%s170 + $0x30] sm:$0xff] %v3225
      %3258 = vst [vmem:[%s170 + $0x38] sm:$0xff] %v3226
      %3259 = vst [vmem:[%s170 + $0x40] sm:$0xff] %v3227
      %3260 = vst [vmem:[%s170 + $0x48] sm:$0xff] %v3228
      %3261 = vst [vmem:[%s170 + $0x50] sm:$0xff] %v3229
      %3262 = vst [vmem:[%s170 + $0x58] sm:$0xff] %v3230
      %3263 = vst [vmem:[%s170 + $0x60] sm:$0xff] %v3231
      %3264 = vst [vmem:[%s170 + $0x68] sm:$0xff] %v3232
      %3265 = vst [vmem:[%s170 + $0x70] sm:$0xff] %v3233
      %3266 = vst [vmem:[%s170 + $0x78] sm:$0xff] %v3234
      %3267 = vst [vmem:[%s170 + $0x80] sm:$0xff] %v3235
      %3268 = vst [vmem:[%s170 + $0x88] sm:$0xff] %v3236
      %3269 = vst [vmem:[%s170 + $0x90] sm:$0xff] %v3237
      %3270 = vst [vmem:[%s170 + $0x98] sm:$0xff] %v3238
      %3271 = vst [vmem:[%s170 + $0xa0] sm:$0xff] %v3239
      %3272 = vst [vmem:[%s170 + $0xa8] sm:$0xff] %v3240
      %3273 = vst [vmem:[%s170 + $0xb0] sm:$0xff] %v3241
      %3274 = vst [vmem:[%s170 + $0xb8] sm:$0xff] %v3242
      %3275 = vst [vmem:[%s170 + $0xc0] sm:$0xff] %v3243
      %3276 = vst [vmem:[%s170 + $0xc8] sm:$0xff] %v3244
      %3277 = vst [vmem:[%s170 + $0xd0] sm:$0xff] %v3245
      %3278 = vst [vmem:[%s170 + $0xd8] sm:$0xff] %v3246
      %3279 = vst [vmem:[%s170 + $0xe0] sm:$0xff] %v3247
      %3280 = vst [vmem:[%s170 + $0xe8] sm:$0xff] %v3248
      %3281 = vst [vmem:[%s170 + $0xf0] sm:$0xff] %v3249
      %3282 = vst [vmem:[%s170 + $0xf8] sm:$0xff] %v3250
      %v3284 = vrot.slane %v223, 5
      %v3285 = vrot.slane %v3284, 4
      %v3286 = vrot.slane %v224, 5
      %v3287 = vsel %vm1412, %v3285, %v3286
      %v3288 = vrot.slane %v3286, 4
      %v3289 = vrot.slane %v225, 5
      %v3290 = vsel %vm1412, %v3288, %v3289
      %v3291 = vld [vmem:[%s170] sm:$0xff]
      %v3292 = vld [vmem:[%s170 + $0x8] sm:$0xff]
      %v3293 = vld [vmem:[%s170 + $0x10] sm:$0xff]
      %v3294 = vld [vmem:[%s170 + $0x18] sm:$0xff]
      %v3295 = vld [vmem:[%s170 + $0x20] sm:$0xff]
      %v3296 = vld [vmem:[%s170 + $0x28] sm:$0xff]
      %v3297 = vld [vmem:[%s170 + $0x30] sm:$0xff]
      %v3298 = vld [vmem:[%s170 + $0x38] sm:$0xff]
      %v3299 = vld [vmem:[%s170 + $0x40] sm:$0xff]
      %v3300 = vld [vmem:[%s170 + $0x48] sm:$0xff]
      %v3301 = vld [vmem:[%s170 + $0x50] sm:$0xff]
      %v3302 = vld [vmem:[%s170 + $0x58] sm:$0xff]
      %v3303 = vld [vmem:[%s170 + $0x60] sm:$0xff]
      %v3304 = vld [vmem:[%s170 + $0x68] sm:$0xff]
      %v3305 = vld [vmem:[%s170 + $0x70] sm:$0xff]
      %v3306 = vld [vmem:[%s170 + $0x78] sm:$0xff]
      %v3307 = vld [vmem:[%s170 + $0x80] sm:$0xff]
      %v3308 = vld [vmem:[%s170 + $0x88] sm:$0xff]
      %v3309 = vld [vmem:[%s170 + $0x90] sm:$0xff]
      %v3310 = vld [vmem:[%s170 + $0x98] sm:$0xff]
      %v3311 = vld [vmem:[%s170 + $0xa0] sm:$0xff]
      %v3312 = vld [vmem:[%s170 + $0xa8] sm:$0xff]
      %v3313 = vld [vmem:[%s170 + $0xb0] sm:$0xff]
      %v3314 = vld [vmem:[%s170 + $0xb8] sm:$0xff]
      %v3315 = vld [vmem:[%s170 + $0xc0] sm:$0xff]
      %v3316 = vld [vmem:[%s170 + $0xc8] sm:$0xff]
      %v3317 = vld [vmem:[%s170 + $0xd0] sm:$0xff]
      %v3318 = vld [vmem:[%s170 + $0xd8] sm:$0xff]
      %v3319 = vld [vmem:[%s170 + $0xe0] sm:$0xff]
      %v3320 = vld [vmem:[%s170 + $0xe8] sm:$0xff]
      %v3321 = vld [vmem:[%s170 + $0xf0] sm:$0xff]
      %v3322 = vld [vmem:[%s170 + $0xf8] sm:$0xff]
      %s3323 = scalar_lea.vmem %s1, 16
      %v3324 = vld [vmem:[%s3323] sm:$0x3]
      %v3325 = vunpack.c.l.b16 %v3287
      %v3326 = vunpack.c.l.b16 %v3290
      %v3327 = vpack.c.b16 %v3326, %v3325
      %v3329 = vsel %vm371, %v3327, 0
      %v3332 = vsel %vm420, %v3324, 0
      %3334 = vmatprep.subr.bf16.mxu0 0
      %3335 = vmatpush1.bf16.msra.mxu0 %v3332
      %3336 = vmatprep.subr.bf16.mxu0 0
      %3337 = vmatpush1.bf16.msra.mxu0 0
      %3338 = vmatprep.subr.bf16.mxu0 0
      %3339 = vmatpush1.bf16.msra.mxu0 0
      %3340 = vmatprep.subr.bf16.mxu0 0
      %3341 = vmatpush1.bf16.msra.mxu0 0
      %3342 = vmatprep.subr.bf16.mxu0 0
      %3343 = vmatpush1.bf16.msra.mxu0 0
      %3344 = vmatprep.subr.bf16.mxu0 0
      %3345 = vmatpush1.bf16.msra.mxu0 0
      %3346 = vmatprep.subr.bf16.mxu0 0
      %3347 = vmatpush1.bf16.msra.mxu0 0
      %3348 = vmatprep.subr.bf16.mxu0 0
      %3349 = vmatpush1.bf16.msra.mxu0 0
      %3350 = vmatprep.subr.bf16.mxu0 0
      %3351 = vmatpush1.bf16.msra.mxu0 0
      %3352 = vmatprep.subr.bf16.mxu0 0
      %3353 = vmatpush1.bf16.msra.mxu0 0
      %3354 = vmatprep.subr.bf16.mxu0 0
      %3355 = vmatpush1.bf16.msra.mxu0 0
      %3356 = vmatprep.subr.bf16.mxu0 0
      %3357 = vmatpush1.bf16.msra.mxu0 0
      %3358 = vmatprep.subr.bf16.mxu0 0
      %3359 = vmatpush1.bf16.msra.mxu0 0
      %3360 = vmatprep.subr.bf16.mxu0 0
      %3361 = vmatpush1.bf16.msra.mxu0 0
      %3362 = vmatprep.subr.bf16.mxu0 0
      %3363 = vmatpush1.bf16.msra.mxu0 0
      %3364 = vmatprep.subr.bf16.mxu0 0
      %3365 = vmatpush1.bf16.msra.mxu0 0
      %3366 = vmatprep.mubr.bf16.mxu0 0
      %3367 = vmatmul.mubr.bf16.gmra.mrb[0].mxu0 %v1614
      %v3368 = vpop.f32.mrb[0].mxu0
      %v3369 = vadd.f32 0.0, %v3368
      %v3370 = vpop.f32.mrb[0].mxu0
      %v3371 = vpop.f32.mrb[0].mxu0
      %v3372 = vadd.f32 0.0, %v3371
      %v3373 = vpop.f32.mrb[0].mxu0
      %3374 = vmatprep.mubr.bf16.mxu0 0
      %3375 = vmatmul.mubr.bf16.gmra.mrb[0].mxu0 %v1617
      %v3376 = vpop.f32.mrb[0].mxu0
      %v3377 = vadd.f32 0.0, %v3376
      %v3378 = vpop.f32.mrb[0].mxu0
      %v3379 = vpop.f32.mrb[0].mxu0
      %v3380 = vadd.f32 0.0, %v3379
      %v3381 = vpop.f32.mrb[0].mxu0
      %3382 = vmatprep.mubr.bf16.mxu0 0
      %3383 = vmatmul.mubr.bf16.gmra.mrb[0].mxu0 %v1620
      %v3384 = vpop.f32.mrb[0].mxu0
      %v3385 = vadd.f32 0.0, %v3384
      %v3386 = vpop.f32.mrb[0].mxu0
      %v3387 = vpop.f32.mrb[0].mxu0
      %v3388 = vadd.f32 0.0, %v3387
      %v3389 = vpop.f32.mrb[0].mxu0
      %3390 = vmatprep.mubr.bf16.mxu0 0
      %3391 = vmatmul.mubr.bf16.gmra.mrb[0].mxu0 %v1623
      %v3392 = vpop.f32.mrb[0].mxu0
      %v3393 = vadd.f32 0.0, %v3392
      %v3394 = vpop.f32.mrb[0].mxu0
      %v3395 = vpop.f32.mrb[0].mxu0
      %v3396 = vadd.f32 0.0, %v3395
      %v3397 = vpop.f32.mrb[0].mxu0
      %3398 = vmatprep.mubr.bf16.mxu0 0
      %3399 = vmatmul.mubr.bf16.gmra.mrb[0].mxu0 %v1626
      %v3400 = vpop.f32.mrb[0].mxu0
      %v3401 = vadd.f32 0.0, %v3400
      %v3402 = vpop.f32.mrb[0].mxu0
      %v3403 = vpop.f32.mrb[0].mxu0
      %v3404 = vadd.f32 0.0, %v3403
      %v3405 = vpop.f32.mrb[0].mxu0
      %3406 = vmatprep.mubr.bf16.mxu0 0
      %3407 = vmatmul.mubr.bf16.gmra.mrb[0].mxu0 %v1629
      %v3408 = vpop.f32.mrb[0].mxu0
      %v3409 = vadd.f32 0.0, %v3408
      %v3410 = vpop.f32.mrb[0].mxu0
      %v3411 = vpop.f32.mrb[0].mxu0
      %v3412 = vadd.f32 0.0, %v3411
      %v3413 = vpop.f32.mrb[0].mxu0
      %3414 = vmatprep.mubr.bf16.mxu0 0
      %3415 = vmatmul.mubr.bf16.gmra.mrb[0].mxu0 %v1632
      %v3416 = vpop.f32.mrb[0].mxu0
      %v3417 = vadd.f32 0.0, %v3416
      %v3418 = vpop.f32.mrb[0].mxu0
      %v3419 = vpop.f32.mrb[0].mxu0
      %v3420 = vadd.f32 0.0, %v3419
      %v3421 = vpop.f32.mrb[0].mxu0
      %3422 = vmatprep.mubr.bf16.mxu0 0
      %3423 = vmatmul.mubr.bf16.gmra.mrb[0].mxu0 %v1635
      %v3424 = vpop.f32.mrb[0].mxu0
      %v3425 = vadd.f32 0.0, %v3424
      %v3426 = vpop.f32.mrb[0].mxu0
      %v3427 = vpop.f32.mrb[0].mxu0
      %v3428 = vadd.f32 0.0, %v3427
      %v3429 = vpop.f32.mrb[0].mxu0
      %3430 = vmatprep.mubr.bf16.mxu0 0
      %3431 = vmatmul.mubr.bf16.gmra.mrb[0].mxu0 %v1638
      %v3432 = vpop.f32.mrb[0].mxu0
      %v3433 = vadd.f32 0.0, %v3432
      %v3434 = vpop.f32.mrb[0].mxu0
      %v3435 = vpop.f32.mrb[0].mxu0
      %v3436 = vadd.f32 0.0, %v3435
      %v3437 = vpop.f32.mrb[0].mxu0
      %3438 = vmatprep.mubr.bf16.mxu0 0
      %3439 = vmatmul.mubr.bf16.gmra.mrb[0].mxu0 %v1641
      %v3440 = vpop.f32.mrb[0].mxu0
      %v3441 = vadd.f32 0.0, %v3440
      %v3442 = vpop.f32.mrb[0].mxu0
      %v3443 = vpop.f32.mrb[0].mxu0
      %v3444 = vadd.f32 0.0, %v3443
      %v3445 = vpop.f32.mrb[0].mxu0
      %3446 = vmatprep.mubr.bf16.mxu0 0
      %3447 = vmatmul.mubr.bf16.gmra.mrb[0].mxu0 %v1644
      %v3448 = vpop.f32.mrb[0].mxu0
      %v3449 = vadd.f32 0.0, %v3448
      %v3450 = vpop.f32.mrb[0].mxu0
      %v3451 = vpop.f32.mrb[0].mxu0
      %v3452 = vadd.f32 0.0, %v3451
      %v3453 = vpop.f32.mrb[0].mxu0
      %3454 = vmatprep.mubr.bf16.mxu0 0
      %3455 = vmatmul.mubr.bf16.gmra.mrb[0].mxu0 %v1647
      %v3456 = vpop.f32.mrb[0].mxu0
      %v3457 = vadd.f32 0.0, %v3456
      %v3458 = vpop.f32.mrb[0].mxu0
      %v3459 = vpop.f32.mrb[0].mxu0
      %v3460 = vadd.f32 0.0, %v3459
      %v3461 = vpop.f32.mrb[0].mxu0
      %3462 = vmatprep.mubr.bf16.mxu0 0
      %3463 = vmatmul.mubr.bf16.gmra.mrb[0].mxu0 %v1650
      %v3464 = vpop.f32.mrb[0].mxu0
      %v3465 = vadd.f32 0.0, %v3464
      %v3466 = vpop.f32.mrb[0].mxu0
      %v3467 = vpop.f32.mrb[0].mxu0
      %v3468 = vadd.f32 0.0, %v3467
      %v3469 = vpop.f32.mrb[0].mxu0
      %3470 = vmatprep.mubr.bf16.mxu0 0
      %3471 = vmatmul.mubr.bf16.gmra.mrb[0].mxu0 %v1653
      %v3472 = vpop.f32.mrb[0].mxu0
      %v3473 = vadd.f32 0.0, %v3472
      %v3474 = vpop.f32.mrb[0].mxu0
      %v3475 = vpop.f32.mrb[0].mxu0
      %v3476 = vadd.f32 0.0, %v3475
      %v3477 = vpop.f32.mrb[0].mxu0
      %3478 = vmatprep.mubr.bf16.mxu0 0
      %3479 = vmatmul.mubr.bf16.gmra.mrb[0].mxu0 %v2491
      %v3480 = vpop.f32.mrb[0].mxu0
      %v3481 = vadd.f32 0.0, %v3480
      %v3482 = vpop.f32.mrb[0].mxu0
      %v3483 = vpop.f32.mrb[0].mxu0
      %v3484 = vadd.f32 0.0, %v3483
      %v3485 = vpop.f32.mrb[0].mxu0
      %3486 = vmatprep.mubr.bf16.mxu0 0
      %3487 = vmatmul.mubr.bf16.gmra.mrb[0].mxu0 %v3329
      %v3488 = vpop.f32.mrb[0].mxu0
      %v3489 = vadd.f32 0.0, %v3488
      %v3490 = vpop.f32.mrb[0].mxu0
      %v3491 = vpop.f32.mrb[0].mxu0
      %v3492 = vadd.f32 0.0, %v3491
      %v3493 = vpop.f32.mrb[0].mxu0
      %3494 = vdwg.mxu0
      %v3495 = vadd.f32 %v3291, %v3369
      %v3496 = vadd.f32 %v3292, %v3372
      %v3497 = vadd.f32 %v3293, %v3377
      %v3498 = vadd.f32 %v3294, %v3380
      %v3499 = vadd.f32 %v3295, %v3385
      %v3500 = vadd.f32 %v3296, %v3388
      %v3501 = vadd.f32 %v3297, %v3393
      %v3502 = vadd.f32 %v3298, %v3396
      %v3503 = vadd.f32 %v3299, %v3401
      %v3504 = vadd.f32 %v3300, %v3404
      %v3505 = vadd.f32 %v3301, %v3409
      %v3506 = vadd.f32 %v3302, %v3412
      %v3507 = vadd.f32 %v3303, %v3417
      %v3508 = vadd.f32 %v3304, %v3420
      %v3509 = vadd.f32 %v3305, %v3425
      %v3510 = vadd.f32 %v3306, %v3428
      %v3511 = vadd.f32 %v3307, %v3433
      %v3512 = vadd.f32 %v3308, %v3436
      %v3513 = vadd.f32 %v3309, %v3441
      %v3514 = vadd.f32 %v3310, %v3444
      %v3515 = vadd.f32 %v3311, %v3449
      %v3516 = vadd.f32 %v3312, %v3452
      %v3517 = vadd.f32 %v3313, %v3457
      %v3518 = vadd.f32 %v3314, %v3460
      %v3519 = vadd.f32 %v3315, %v3465
      %v3520 = vadd.f32 %v3316, %v3468
      %v3521 = vadd.f32 %v3317, %v3473
      %v3522 = vadd.f32 %v3318, %v3476
      %v3523 = vadd.f32 %v3319, %v3481
      %v3524 = vadd.f32 %v3320, %v3484
      %v3525 = vadd.f32 %v3321, %v3489
      %v3526 = vadd.f32 %v3322, %v3492
      %3527 = vst [vmem:[%s170] sm:$0xff] %v3495
      %3528 = vst [vmem:[%s170 + $0x8] sm:$0xff] %v3496
      %3529 = vst [vmem:[%s170 + $0x10] sm:$0xff] %v3497
      %3530 = vst [vmem:[%s170 + $0x18] sm:$0xff] %v3498
      %3531 = vst [vmem:[%s170 + $0x20] sm:$0xff] %v3499
      %3532 = vst [vmem:[%s170 + $0x28] sm:$0xff] %v3500
      %3533 = vst [vmem:[%s170 + $0x30] sm:$0xff] %v3501
      %3534 = vst [vmem:[%s170 + $0x38] sm:$0xff] %v3502
      %3535 = vst [vmem:[%s170 + $0x40] sm:$0xff] %v3503
      %3536 = vst [vmem:[%s170 + $0x48] sm:$0xff] %v3504
      %3537 = vst [vmem:[%s170 + $0x50] sm:$0xff] %v3505
      %3538 = vst [vmem:[%s170 + $0x58] sm:$0xff] %v3506
      %3539 = vst [vmem:[%s170 + $0x60] sm:$0xff] %v3507
      %3540 = vst [vmem:[%s170 + $0x68] sm:$0xff] %v3508
      %3541 = vst [vmem:[%s170 + $0x70] sm:$0xff] %v3509
      %3542 = vst [vmem:[%s170 + $0x78] sm:$0xff] %v3510
      %3543 = vst [vmem:[%s170 + $0x80] sm:$0xff] %v3511
      %3544 = vst [vmem:[%s170 + $0x88] sm:$0xff] %v3512
      %3545 = vst [vmem:[%s170 + $0x90] sm:$0xff] %v3513
      %3546 = vst [vmem:[%s170 + $0x98] sm:$0xff] %v3514
      %3547 = vst [vmem:[%s170 + $0xa0] sm:$0xff] %v3515
      %3548 = vst [vmem:[%s170 + $0xa8] sm:$0xff] %v3516
      %3549 = vst [vmem:[%s170 + $0xb0] sm:$0xff] %v3517
      %3550 = vst [vmem:[%s170 + $0xb8] sm:$0xff] %v3518
      %3551 = vst [vmem:[%s170 + $0xc0] sm:$0xff] %v3519
      %3552 = vst [vmem:[%s170 + $0xc8] sm:$0xff] %v3520
      %3553 = vst [vmem:[%s170 + $0xd0] sm:$0xff] %v3521
      %3554 = vst [vmem:[%s170 + $0xd8] sm:$0xff] %v3522
      %3555 = vst [vmem:[%s170 + $0xe0] sm:$0xff] %v3523
      %3556 = vst [vmem:[%s170 + $0xe8] sm:$0xff] %v3524
      %3557 = vst [vmem:[%s170 + $0xf0] sm:$0xff] %v3525
      %3558 = vst [vmem:[%s170 + $0xf8] sm:$0xff] %v3526
      %v3559 = vld [vmem:[%s170] sm:$0xff]
      %v3560 = vld [vmem:[%s170 + $0x8] sm:$0xff]
      %v3561 = vld [vmem:[%s170 + $0x10] sm:$0xff]
      %v3562 = vld [vmem:[%s170 + $0x18] sm:$0xff]
      %v3563 = vld [vmem:[%s170 + $0x20] sm:$0xff]
      %v3564 = vld [vmem:[%s170 + $0x28] sm:$0xff]
      %v3565 = vld [vmem:[%s170 + $0x30] sm:$0xff]
      %v3566 = vld [vmem:[%s170 + $0x38] sm:$0xff]
      %v3567 = vld [vmem:[%s170 + $0x40] sm:$0xff]
      %v3568 = vld [vmem:[%s170 + $0x48] sm:$0xff]
      %v3569 = vld [vmem:[%s170 + $0x50] sm:$0xff]
      %v3570 = vld [vmem:[%s170 + $0x58] sm:$0xff]
      %v3571 = vld [vmem:[%s170 + $0x60] sm:$0xff]
      %v3572 = vld [vmem:[%s170 + $0x68] sm:$0xff]
      %v3573 = vld [vmem:[%s170 + $0x70] sm:$0xff]
      %v3574 = vld [vmem:[%s170 + $0x78] sm:$0xff]
      %v3575 = vld [vmem:[%s170 + $0x80] sm:$0xff]
      %v3576 = vld [vmem:[%s170 + $0x88] sm:$0xff]
      %v3577 = vld [vmem:[%s170 + $0x90] sm:$0xff]
      %v3578 = vld [vmem:[%s170 + $0x98] sm:$0xff]
      %v3579 = vld [vmem:[%s170 + $0xa0] sm:$0xff]
      %v3580 = vld [vmem:[%s170 + $0xa8] sm:$0xff]
      %v3581 = vld [vmem:[%s170 + $0xb0] sm:$0xff]
      %v3582 = vld [vmem:[%s170 + $0xb8] sm:$0xff]
      %v3583 = vld [vmem:[%s170 + $0xc0] sm:$0xff]
      %v3584 = vld [vmem:[%s170 + $0xc8] sm:$0xff]
      %v3585 = vld [vmem:[%s170 + $0xd0] sm:$0xff]
      %v3586 = vld [vmem:[%s170 + $0xd8] sm:$0xff]
      %v3587 = vld [vmem:[%s170 + $0xe0] sm:$0xff]
      %v3588 = vld [vmem:[%s170 + $0xe8] sm:$0xff]
      %v3589 = vld [vmem:[%s170 + $0xf0] sm:$0xff]
      %v3590 = vld [vmem:[%s170 + $0xf8] sm:$0xff]
      %v3591 = vld [vmem:[%s2] sm:$0x1]
      %v3593 = vlaneseq
      %v3594 = vshrl.u32 %v3593, 7
      %v3595 = vsub.s32 0, %v3594
      %v3596 = vrot.slane %v3591, %v3595
      %v3598 = vadd.f32 %v3559, %v3596
      %v3599 = vadd.f32 %v3560, %v3596
      %v3600 = vadd.f32 %v3561, %v3596
      %v3601 = vadd.f32 %v3562, %v3596
      %v3602 = vadd.f32 %v3563, %v3596
      %v3603 = vadd.f32 %v3564, %v3596
      %v3604 = vadd.f32 %v3565, %v3596
      %v3605 = vadd.f32 %v3566, %v3596
      %v3606 = vadd.f32 %v3567, %v3596
      %v3607 = vadd.f32 %v3568, %v3596
      %v3608 = vadd.f32 %v3569, %v3596
      %v3609 = vadd.f32 %v3570, %v3596
      %v3610 = vadd.f32 %v3571, %v3596
      %v3611 = vadd.f32 %v3572, %v3596
      %v3612 = vadd.f32 %v3573, %v3596
      %v3613 = vadd.f32 %v3574, %v3596
      %v3614 = vadd.f32 %v3575, %v3596
      %v3615 = vadd.f32 %v3576, %v3596
      %v3616 = vadd.f32 %v3577, %v3596
      %v3617 = vadd.f32 %v3578, %v3596
      %v3618 = vadd.f32 %v3579, %v3596
      %v3619 = vadd.f32 %v3580, %v3596
      %v3620 = vadd.f32 %v3581, %v3596
      %v3621 = vadd.f32 %v3582, %v3596
      %v3622 = vadd.f32 %v3583, %v3596
      %v3623 = vadd.f32 %v3584, %v3596
      %v3624 = vadd.f32 %v3585, %v3596
      %v3625 = vadd.f32 %v3586, %v3596
      %v3626 = vadd.f32 %v3587, %v3596
      %v3627 = vadd.f32 %v3588, %v3596
      %v3628 = vadd.f32 %v3589, %v3596
      %v3629 = vadd.f32 %v3590, %v3596
      %v3630 = vmax.f32 %v3598, 0.0
      %v3631 = vmax.f32 %v3599, 0.0
      %v3632 = vmax.f32 %v3600, 0.0
      %v3633 = vmax.f32 %v3601, 0.0
      %v3634 = vmax.f32 %v3602, 0.0
      %v3635 = vmax.f32 %v3603, 0.0
      %v3636 = vmax.f32 %v3604, 0.0
      %v3637 = vmax.f32 %v3605, 0.0
      %v3638 = vmax.f32 %v3606, 0.0
      %v3639 = vmax.f32 %v3607, 0.0
      %v3640 = vmax.f32 %v3608, 0.0
      %v3641 = vmax.f32 %v3609, 0.0
      %v3642 = vmax.f32 %v3610, 0.0
      %v3643 = vmax.f32 %v3611, 0.0
      %v3644 = vmax.f32 %v3612, 0.0
      %v3645 = vmax.f32 %v3613, 0.0
      %v3646 = vmax.f32 %v3614, 0.0
      %v3647 = vmax.f32 %v3615, 0.0
      %v3648 = vmax.f32 %v3616, 0.0
      %v3649 = vmax.f32 %v3617, 0.0
      %v3650 = vmax.f32 %v3618, 0.0
      %v3651 = vmax.f32 %v3619, 0.0
      %v3652 = vmax.f32 %v3620, 0.0
      %v3653 = vmax.f32 %v3621, 0.0
      %v3654 = vmax.f32 %v3622, 0.0
      %v3655 = vmax.f32 %v3623, 0.0
      %v3656 = vmax.f32 %v3624, 0.0
      %v3657 = vmax.f32 %v3625, 0.0
      %v3658 = vmax.f32 %v3626, 0.0
      %v3659 = vmax.f32 %v3627, 0.0
      %v3660 = vmax.f32 %v3628, 0.0
      %v3661 = vmax.f32 %v3629, 0.0
      %3662 = vst [vmem:[%s170] sm:$0xff] %v3630
      %3663 = vst [vmem:[%s170 + $0x8] sm:$0xff] %v3631
      %3664 = vst [vmem:[%s170 + $0x10] sm:$0xff] %v3632
      %3665 = vst [vmem:[%s170 + $0x18] sm:$0xff] %v3633
      %3666 = vst [vmem:[%s170 + $0x20] sm:$0xff] %v3634
      %3667 = vst [vmem:[%s170 + $0x28] sm:$0xff] %v3635
      %3668 = vst [vmem:[%s170 + $0x30] sm:$0xff] %v3636
      %3669 = vst [vmem:[%s170 + $0x38] sm:$0xff] %v3637
      %3670 = vst [vmem:[%s170 + $0x40] sm:$0xff] %v3638
      %3671 = vst [vmem:[%s170 + $0x48] sm:$0xff] %v3639
      %3672 = vst [vmem:[%s170 + $0x50] sm:$0xff] %v3640
      %3673 = vst [vmem:[%s170 + $0x58] sm:$0xff] %v3641
      %3674 = vst [vmem:[%s170 + $0x60] sm:$0xff] %v3642
      %3675 = vst [vmem:[%s170 + $0x68] sm:$0xff] %v3643
      %3676 = vst [vmem:[%s170 + $0x70] sm:$0xff] %v3644
      %3677 = vst [vmem:[%s170 + $0x78] sm:$0xff] %v3645
      %3678 = vst [vmem:[%s170 + $0x80] sm:$0xff] %v3646
      %3679 = vst [vmem:[%s170 + $0x88] sm:$0xff] %v3647
      %3680 = vst [vmem:[%s170 + $0x90] sm:$0xff] %v3648
      %3681 = vst [vmem:[%s170 + $0x98] sm:$0xff] %v3649
      %3682 = vst [vmem:[%s170 + $0xa0] sm:$0xff] %v3650
      %3683 = vst [vmem:[%s170 + $0xa8] sm:$0xff] %v3651
      %3684 = vst [vmem:[%s170 + $0xb0] sm:$0xff] %v3652
      %3685 = vst [vmem:[%s170 + $0xb8] sm:$0xff] %v3653
      %3686 = vst [vmem:[%s170 + $0xc0] sm:$0xff] %v3654
      %3687 = vst [vmem:[%s170 + $0xc8] sm:$0xff] %v3655
      %3688 = vst [vmem:[%s170 + $0xd0] sm:$0xff] %v3656
      %3689 = vst [vmem:[%s170 + $0xd8] sm:$0xff] %v3657
      %3690 = vst [vmem:[%s170 + $0xe0] sm:$0xff] %v3658
      %3691 = vst [vmem:[%s170 + $0xe8] sm:$0xff] %v3659
      %3692 = vst [vmem:[%s170 + $0xf0] sm:$0xff] %v3660
      %3693 = vst [vmem:[%s170 + $0xf8] sm:$0xff] %v3661
      %p3694 = scmp.lt.s32.totalorder %s14, 1
      %s3695 = scalar_select %p3694, %s14, 1
      %s3696 = smul.addr %s3695, 32
      %s3697 = smul.addr %s3696, 8
      %s3698 = scalar_lea.vmem %s3, %s3697
      // Predicated region
      $region33: #{checkpoint.1} parent=31 // pred_check
        %p3699 = pneg %p100
      $region34: #{checkpoint.1} parent=31 // pred_check_branch
        %3701 = sbr.rel (%p3699) target = $region36
      $region35: #{checkpoint.1} parent=31 // pred_region
        _
      $region36: #{checkpoint.1} parent=31 // pred_fallthru
        _
    $region32: #{checkpoint.1} parent=5 // pred_fallthru
      _
    %p3702 = scmp.le.s32.totalorder 2, %s9
    // Predicated region
    $region37: #{checkpoint.1} parent=5 // pred_check
      %p3703 = pneg %p3702
    $region38: #{checkpoint.1} parent=5 // pred_check_branch
      %3705 = sbr.rel (%p3703) target = $region40
    $region39: #{checkpoint.1} parent=5 // pred_region
      %s3706 = ssub.s32 %s9, 2
      // Predicated region
      $region41: #{checkpoint.1} parent=39 // pred_check
        %p3707 = pneg %p106
      $region42: #{checkpoint.1} parent=39 // pred_check_branch
        %3709 = sbr.rel (%p3707) target = $region44
      $region43: #{checkpoint.1} parent=39 // pred_region
        %p3710 = scmp.lt.s32.totalorder %s15, 1
        %s3711 = scalar_select %p3710, %s15, 1
        %s3712 = smul.addr %s3711, 32
        %s3713 = smul.addr %s3712, 8
        %s3714 = scalar_lea.vmem %s3, %s3713
      $region44: #{checkpoint.1} parent=39 // pred_fallthru
        _
    $region40: #{checkpoint.1} parent=5 // pred_fallthru
      _
  $region6: #{checkpoint.1} parent=0 // loop_footer
    %s13 = sadd.s32 1, %s9
  $region7: #{checkpoint.1} parent=0 // loop_footer_branch
    %8 = sbr.rel target = $region3
  $region8: #{checkpoint.1} parent=0 // loop_exit
    _

</llo_original>
